<compile_context>
chip_gen: v5e
topology: v5e:2x2
jax: 0.10.0
libtpu: 0.0.40
codegen_flags: <defaults>
</compile_context>

<pallas_src>
import jax
import jax.numpy as jnp
from jax.experimental import pallas as pl
from jax.experimental.pallas import tpu as pltpu

# ----- constants from the PyTorch module -----
LLM_HIDDEN = 1536                  # llm_hidden_size
DESC_LEN = 7                       # description length (l3.npy token rows)
FEAT_DIM = 47 * 128                # linear1 input  (6016)
HID1 = 128                         # linear1 output
NUM_CLASSES = 10                   # linear2 output
L3_OUT = DESC_LEN * LLM_HIDDEN     # linear3 output after load_default() (10752)
OUT_CHUNK = 2688                   # lane tile of L3_OUT (4 chunks, 21 vregs each)


def _alignment_kernel(x_ref, w1_ref, b1_ref, w2_ref, b2_ref, w3_ref, b3_ref,
                      o_ref, p_ref):
    # Stage 1: run linear1 -> relu -> linear2 -> softmax once per row tile
    # (only at the first output chunk); cache probabilities in VMEM scratch.
    @pl.when(pl.program_id(1) == 0)
    def _():
        h = jnp.dot(x_ref[...], w1_ref[...], preferred_element_type=jnp.float32)
        h = jnp.maximum(h + b1_ref[...], 0.0)                       # ReLU
        logits = jnp.dot(h.astype(jnp.bfloat16), w2_ref[...],
                         preferred_element_type=jnp.float32) + b2_ref[...]
        m = jnp.max(logits, axis=1, keepdims=True)                  # softmax(dim=1)
        e = jnp.exp(logits - m)
        inv = pl.reciprocal(jnp.sum(e, axis=1, keepdims=True), approx=True)
        p_ref[...] = e * inv

    # Stage 2: every grid step emits one lane-dense bf16 chunk of p @ W3 + b3.
    p = p_ref[...].astype(jnp.bfloat16)
    out = jnp.dot(p, w3_ref[...], preferred_element_type=jnp.float32) + b3_ref[...]
    o_ref[...] = out.astype(jnp.bfloat16)


def alignment_layer(x, params, *, row_tile=128, out_chunk=OUT_CHUNK):
    """AlignmentLayer.forward: x (any shape viewable as (-1, 47*128))
    -> (N, DESC_LEN, LLM_HIDDEN) bf16."""
    x2 = x.reshape(-1, FEAT_DIM)
    n = x2.shape[0]
    l3_out = params["w3"].shape[1]
    assert l3_out % out_chunk == 0 and l3_out % LLM_HIDDEN == 0

    # bf16 sublane packing is 16; small N -> one 16-aligned tile,
    # large N -> 128-row tiles that fill the MXU M dimension.
    tn = row_tile if n >= row_tile else max(16, ((n + 15) // 16) * 16)
    n_pad = ((n + tn - 1) // tn) * tn
    x_p = jnp.pad(x2, ((0, n_pad - n), (0, 0))).astype(jnp.bfloat16)

    # bf16 weights (MXU-native), f32 biases for the f32 accumulators.
    w1 = params["w1"].astype(jnp.bfloat16)
    w2 = params["w2"].astype(jnp.bfloat16)
    w3 = params["w3"].astype(jnp.bfloat16)
    b1 = params["b1"].reshape(1, HID1).astype(jnp.float32)
    b2 = params["b2"].reshape(1, NUM_CLASSES).astype(jnp.float32)
    b3 = params["b3"].reshape(1, l3_out).astype(jnp.float32)

    grid = (n_pad // tn, l3_out // out_chunk)
    out = pl.pallas_call(
        _alignment_kernel,
        out_shape=jax.ShapeDtypeStruct((n_pad, l3_out), jnp.bfloat16),
        grid_spec=pltpu.PrefetchScalarGridSpec(
            num_scalar_prefetch=0,
            grid=grid,
            in_specs=[
                pl.BlockSpec((tn, FEAT_DIM), lambda i, j: (i, 0)),            # x tile
                pl.BlockSpec((FEAT_DIM, HID1), lambda i, j: (0, 0)),          # W1 (resident)
                pl.BlockSpec((1, HID1), lambda i, j: (0, 0)),                 # b1 (resident)
                pl.BlockSpec((HID1, NUM_CLASSES), lambda i, j: (0, 0)),       # W2 (resident)
                pl.BlockSpec((1, NUM_CLASSES), lambda i, j: (0, 0)),          # b2 (resident)
                pl.BlockSpec((NUM_CLASSES, out_chunk), lambda i, j: (0, j)),  # W3 chunk
                pl.BlockSpec((1, out_chunk), lambda i, j: (0, j)),            # b3 chunk
            ],
            out_specs=pl.BlockSpec((tn, out_chunk), lambda i, j: (i, j)),
            scratch_shapes=[pltpu.VMEM((tn, NUM_CLASSES), jnp.float32)],      # softmax probs
        ),
        compiler_params=pltpu.CompilerParams(
            dimension_semantics=("parallel", "arbitrary"),
            vmem_limit_bytes=32 * 1024 * 1024,
        ),
    )(x_p, w1, b1, w2, b2, w3, b3)

    return out[:n].reshape(n, -1, LLM_HIDDEN)


def alignment_layer_ref(x, params):
    """Pure-JAX reference mirroring the kernel's bf16-operand / f32-accumulate math."""
    x2 = x.reshape(-1, FEAT_DIM).astype(jnp.bfloat16).astype(jnp.float32)
    w1 = params["w1"].astype(jnp.bfloat16).astype(jnp.float32)
    w2 = params["w2"].astype(jnp.bfloat16).astype(jnp.float32)
    w3 = params["w3"].astype(jnp.bfloat16).astype(jnp.float32)
    h = jnp.maximum(x2 @ w1 + params["b1"].reshape(1, -1), 0.0)
    logits = h.astype(jnp.bfloat16).astype(jnp.float32) @ w2 + params["b2"].reshape(1, -1)
    p = jax.nn.softmax(logits, axis=1)
    out = p.astype(jnp.bfloat16).astype(jnp.float32) @ w3 + params["b3"].reshape(1, -1)
    return out.astype(jnp.bfloat16).reshape(x2.shape[0], -1, LLM_HIDDEN)


if __name__ == "__main__":
    key = jax.random.PRNGKey(0)
    k_x, k_w1, k_b1, k_w2, k_b2, k_w3 = jax.random.split(key, 6)

    # Small deterministic example: N=2 signal windows of shape (47, 128)
    # (the view(-1, 47*128) in forward flattens the trailing dims).
    N = 2
    x = jax.random.normal(k_x, (N, 47, 128), jnp.float32)

    params = {
        "w1": 0.02 * jax.random.normal(k_w1, (FEAT_DIM, HID1), jnp.float32),
        "b1": 0.01 * jax.random.normal(k_b1, (HID1,), jnp.float32),
        "w2": 0.02 * jax.random.normal(k_w2, (HID1, NUM_CLASSES), jnp.float32),
        "b2": 0.01 * jax.random.normal(k_b2, (NUM_CLASSES,), jnp.float32),
        # linear3 after load_default(): weight (10, 7*1536), zero bias.
        "w3": 0.02 * jax.random.normal(k_w3, (NUM_CLASSES, L3_OUT), jnp.float32),
        "b3": jnp.zeros((L3_OUT,), jnp.float32),
    }

    fwd = jax.jit(alignment_layer)
    out = jax.block_until_ready(fwd(x, params))
    assert out.shape == (N, DESC_LEN, LLM_HIDDEN) and out.dtype == jnp.bfloat16

    ref = alignment_layer_ref(x, params)
    err = float(jnp.max(jnp.abs(out.astype(jnp.float32) - ref.astype(jnp.float32))))
    assert err < 1e-2, f"max|kernel - ref| = {err}"

    print("KERNEL_OK")
</pallas_src>

<mosaic_0001>
module attributes {stable_mosaic.version = 11 : i64} {
  func.func @_alignment_kernel(%arg0: i32, %arg1: i32, %arg2: memref<16x6016xbf16, #tpu.memory_space<vmem>>, %arg3: memref<6016x128xbf16, #tpu.memory_space<vmem>>, %arg4: memref<1x128xf32, #tpu.memory_space<vmem>>, %arg5: memref<128x10xbf16, #tpu.memory_space<vmem>>, %arg6: memref<1x10xf32, #tpu.memory_space<vmem>>, %arg7: memref<10x2688xbf16, #tpu.memory_space<vmem>>, %arg8: memref<1x2688xf32, #tpu.memory_space<vmem>>, %arg9: memref<16x2688xbf16, #tpu.memory_space<vmem>>, %arg10: memref<16x10xf32, #tpu.memory_space<vmem>>) attributes {dimension_semantics = [#tpu.dimension_semantics<parallel>, #tpu.dimension_semantics<arbitrary>], iteration_bounds = array<i64: 1, 4>, scalar_prefetch = 0 : i64, scratch_operands = 1 : i64, tpu.core_type = #tpu.core_type<tc>, window_params = [{transform_indices = @transform_0, window_bounds = array<i64: 16, 6016>}, {pipeline_mode = #tpu.pipeline_mode<synchronous>, transform_indices = @transform_1, window_bounds = array<i64: 6016, 128>}, {pipeline_mode = #tpu.pipeline_mode<synchronous>, transform_indices = @transform_2, window_bounds = array<i64: 1, 128>}, {pipeline_mode = #tpu.pipeline_mode<synchronous>, transform_indices = @transform_3, window_bounds = array<i64: 128, 10>}, {pipeline_mode = #tpu.pipeline_mode<synchronous>, transform_indices = @transform_4, window_bounds = array<i64: 1, 10>}, {transform_indices = @transform_5, window_bounds = array<i64: 10, 2688>}, {transform_indices = @transform_6, window_bounds = array<i64: 1, 2688>}, {transform_indices = @transform_7, window_bounds = array<i64: 16, 2688>}]} {
    %c0_i32 = arith.constant 0 : i32
    %0 = arith.cmpi eq, %arg1, %c0_i32 : i32
    %1 = arith.extui %0 : i1 to i32
    %c0_i32_0 = arith.constant 0 : i32
    %2 = arith.cmpi ne, %1, %c0_i32_0 : i32
    scf.if %2 {
      %c0_8 = arith.constant 0 : index
      %c0_9 = arith.constant 0 : index
      %12 = vector.load %arg2[%c0_8, %c0_9] : memref<16x6016xbf16, #tpu.memory_space<vmem>>, vector<16x6016xbf16>
      %c0_10 = arith.constant 0 : index
      %c0_11 = arith.constant 0 : index
      %13 = vector.load %arg3[%c0_10, %c0_11] : memref<6016x128xbf16, #tpu.memory_space<vmem>>, vector<6016x128xbf16>
      %cst_12 = arith.constant dense<0.000000e+00> : vector<16x128xf32>
      %14 = tpu.matmul %12, %13, %cst_12 {dimension_numbers = #tpu.dot_dimension_numbers<[1], [0], [0], [1], [0, 0, 1, 1], [], []>} : vector<16x6016xbf16>, vector<6016x128xbf16>, vector<16x128xf32> -> vector<16x128xf32>
      %c0_13 = arith.constant 0 : index
      %c0_14 = arith.constant 0 : index
      %15 = vector.load %arg4[%c0_13, %c0_14] : memref<1x128xf32, #tpu.memory_space<vmem>>, vector<1x128xf32>
      %16 = vector.broadcast %15 : vector<1x128xf32> to vector<16x128xf32>
      %17 = arith.addf %14, %16 : vector<16x128xf32>
      %cst_15 = arith.constant 0.000000e+00 : f32
      %18 = vector.broadcast %cst_15 : f32 to vector<16x128xf32>
      %19 = arith.maximumf %17, %18 : vector<16x128xf32>
      %20 = arith.truncf %19 : vector<16x128xf32> to vector<16x128xbf16>
      %c0_16 = arith.constant 0 : index
      %c0_17 = arith.constant 0 : index
      %21 = vector.load %arg5[%c0_16, %c0_17] : memref<128x10xbf16, #tpu.memory_space<vmem>>, vector<128x10xbf16>
      %cst_18 = arith.constant dense<0.000000e+00> : vector<16x10xf32>
      %22 = tpu.matmul %20, %21, %cst_18 {dimension_numbers = #tpu.dot_dimension_numbers<[1], [0], [0], [1], [0, 0, 1, 1], [], []>} : vector<16x128xbf16>, vector<128x10xbf16>, vector<16x10xf32> -> vector<16x10xf32>
      %c0_19 = arith.constant 0 : index
      %c0_20 = arith.constant 0 : index
      %23 = vector.load %arg6[%c0_19, %c0_20] : memref<1x10xf32, #tpu.memory_space<vmem>>, vector<1x10xf32>
      %24 = vector.broadcast %23 : vector<1x10xf32> to vector<16x10xf32>
      %25 = arith.addf %22, %24 : vector<16x10xf32>
      %cst_21 = arith.constant dense<0xFF800000> : vector<16xf32>
      %26 = vector.multi_reduction <maximumf>, %25, %cst_21 [1] : vector<16x10xf32> to vector<16xf32>
      %27 = vector.shape_cast %26 : vector<16xf32> to vector<16x1xf32>
      %28 = vector.broadcast %27 : vector<16x1xf32> to vector<16x10xf32>
      %29 = arith.subf %25, %28 : vector<16x10xf32>
      %30 = math.exp %29 : vector<16x10xf32>
      %cst_22 = arith.constant dense<0.000000e+00> : vector<16xf32>
      %31 = vector.multi_reduction <add>, %30, %cst_22 [1] : vector<16x10xf32> to vector<16xf32>
      %32 = vector.shape_cast %31 : vector<16xf32> to vector<16x1xf32>
      %33 = tpu.reciprocal %32 {approx = true} : vector<16x1xf32> -> vector<16x1xf32>
      %34 = vector.broadcast %33 : vector<16x1xf32> to vector<16x10xf32>
      %35 = arith.mulf %30, %34 : vector<16x10xf32>
      %c0_23 = arith.constant 0 : index
      %c0_24 = arith.constant 0 : index
      %36 = vector.load %arg10[%c0_23, %c0_24] : memref<16x10xf32, #tpu.memory_space<vmem>>, vector<16x10xf32>
      tpu.vector_store %arg10[%c0_23, %c0_24], %35 {strides = array<i32>} : memref<16x10xf32, #tpu.memory_space<vmem>>, vector<16x10xf32>,
    } else {
    }
    %c0 = arith.constant 0 : index
    %c0_1 = arith.constant 0 : index
    %3 = vector.load %arg10[%c0, %c0_1] : memref<16x10xf32, #tpu.memory_space<vmem>>, vector<16x10xf32>
    %4 = arith.truncf %3 : vector<16x10xf32> to vector<16x10xbf16>
    %c0_2 = arith.constant 0 : index
    %c0_3 = arith.constant 0 : index
    %5 = vector.load %arg7[%c0_2, %c0_3] : memref<10x2688xbf16, #tpu.memory_space<vmem>>, vector<10x2688xbf16>
    %cst = arith.constant dense<0.000000e+00> : vector<16x2688xf32>
    %6 = tpu.matmul %4, %5, %cst {dimension_numbers = #tpu.dot_dimension_numbers<[1], [0], [0], [1], [0, 0, 1, 1], [], []>} : vector<16x10xbf16>, vector<10x2688xbf16>, vector<16x2688xf32> -> vector<16x2688xf32>
    %c0_4 = arith.constant 0 : index
    %c0_5 = arith.constant 0 : index
    %7 = vector.load %arg8[%c0_4, %c0_5] : memref<1x2688xf32, #tpu.memory_space<vmem>>, vector<1x2688xf32>
    %8 = vector.broadcast %7 : vector<1x2688xf32> to vector<16x2688xf32>
    %9 = arith.addf %6, %8 : vector<16x2688xf32>
    %10 = arith.truncf %9 : vector<16x2688xf32> to vector<16x2688xbf16>
    %c0_6 = arith.constant 0 : index
    %c0_7 = arith.constant 0 : index
    %11 = vector.load %arg9[%c0_6, %c0_7] : memref<16x2688xbf16, #tpu.memory_space<vmem>>, vector<16x2688xbf16>
    tpu.vector_store %arg9[%c0_6, %c0_7], %10 {strides = array<i32>} : memref<16x2688xbf16, #tpu.memory_space<vmem>>, vector<16x2688xbf16>,
    return
  }
  func.func @transform_0(%arg0: i32, %arg1: i32) -> (i32, i32) {
    %c0_i32 = arith.constant 0 : i32
    %c0_i32_0 = arith.constant 0 : i32
    return %arg0, %c0_i32 : i32, i32
  }
  func.func @transform_1(%arg0: i32, %arg1: i32) -> (i32, i32) {
    %c0_i32 = arith.constant 0 : i32
    %c0_i32_0 = arith.constant 0 : i32
    %c0_i32_1 = arith.constant 0 : i32
    return %c0_i32, %c0_i32_0 : i32, i32
  }
  func.func @transform_2(%arg0: i32, %arg1: i32) -> (i32, i32) {
    %c0_i32 = arith.constant 0 : i32
    %c0_i32_0 = arith.constant 0 : i32
    %c0_i32_1 = arith.constant 0 : i32
    return %c0_i32, %c0_i32_0 : i32, i32
  }
  func.func @transform_3(%arg0: i32, %arg1: i32) -> (i32, i32) {
    %c0_i32 = arith.constant 0 : i32
    %c0_i32_0 = arith.constant 0 : i32
    %c0_i32_1 = arith.constant 0 : i32
    return %c0_i32, %c0_i32_0 : i32, i32
  }
  func.func @transform_4(%arg0: i32, %arg1: i32) -> (i32, i32) {
    %c0_i32 = arith.constant 0 : i32
    %c0_i32_0 = arith.constant 0 : i32
    %c0_i32_1 = arith.constant 0 : i32
    return %c0_i32, %c0_i32_0 : i32, i32
  }
  func.func @transform_5(%arg0: i32, %arg1: i32) -> (i32, i32) {
    %c0_i32 = arith.constant 0 : i32
    %c0_i32_0 = arith.constant 0 : i32
    return %c0_i32, %arg1 : i32, i32
  }
  func.func @transform_6(%arg0: i32, %arg1: i32) -> (i32, i32) {
    %c0_i32 = arith.constant 0 : i32
    %c0_i32_0 = arith.constant 0 : i32
    return %c0_i32, %arg1 : i32, i32
  }
  func.func @transform_7(%arg0: i32, %arg1: i32) -> (i32, i32) {
    %c0_i32 = arith.constant 0 : i32
    return %arg0, %arg1 : i32, i32
  }
}

</mosaic_0001>

<llo_original>
// kernel: alignment_layer.1
$region0: #{alignment_layer.1}
  #allocation0 [shape = 'u32[]', space=smem, size = 0x4, offset = 0x4, fixed_abs, tag = 'smem constant byte address 0x4 - core index']
  #allocation1 [shape = 'u32[72,128]{1,0:T(1,128)}', space=vmem, size = 0x9000, scoped, tag = 'internal scratch']
  #allocation2 [shape = 'f32[16,10]{1,0:T(8,128)}', space=vmem, size = 0x2000, scoped, tag = 'scratch operand']
  %s0 = inlined_call_operand.vmem [shape: bf16[16,6016], index: 0, kind: input, shape index: {}]
  %s1 = inlined_call_operand.vmem [shape: bf16[6016,128], index: 1, kind: input, shape index: {}]
  %s2 = inlined_call_operand.vmem [shape: f32[1,128], index: 2, kind: input, shape index: {}]
  %s3 = inlined_call_operand.vmem [shape: bf16[128,10], index: 3, kind: input, shape index: {}]
  %s4 = inlined_call_operand.vmem [shape: f32[1,10], index: 4, kind: input, shape index: {}]
  %s5 = inlined_call_operand.vmem [shape: bf16[10,10752], index: 5, kind: input, shape index: {}]
  %s6 = inlined_call_operand.vmem [shape: f32[1,10752], index: 6, kind: input, shape index: {}]
  %s7 = inlined_call_operand.vmem [shape: bf16[16,10752], index: 7, kind: output, shape index: {}]
  %s8 = sld [smem:[#allocation0]]
  $region113: #{alignment_layer.1} parent=0
    _
  %s10 = ssub.s32 1, %s8
  %s11 = scalar_select 0, %s10, %s8
  $region1: #{alignment_layer.1} parent=0
    #allocation3 [shape = 'u8[172032]{0}', space=vmem, size = 0x2a000, scoped, tag = 'input window, operand 5']
    #allocation4 [shape = 'u8[172032]{0}', space=vmem, size = 0x2a000, scoped, tag = 'output window, operand 0']
    loop: start=0, step=1, limit=6
    $region2: #{alignment_layer.1} parent=1 // loop_pre_header
      _
    $region3: #{alignment_layer.1} parent=1 // loop_header
      %s13 = sphi 0, %s17
      %p14 = scmp.ge.s32.totalorder %s13, 6
      %s20 = sphi 0, %s32
      %s21 = sphi 0, %s28
      %s22 = sphi 0, %s20
      %s23 = sphi 0, %s21
      %s24 = sphi 0, %s22
      %s25 = sphi 0, %s23
      %s35 = sphi 0, %s37
      %s38 = sphi 0, %s35
      %s39 = sphi 0, %s38
      %s55 = sphi 0, %s39
      %s59 = sphi 0, %s59
      %s61 = sphi 0, %s59
      %s62 = sphi 0, %s61
      %s76 = sphi 0, %s62
      %s80 = sphi 0, %s80
      %s82 = sphi 0, %s80
      %s83 = sphi 0, %s82
      %s97 = sphi 0, %s83
      %s101 = sphi 0, %s101
      %s103 = sphi 0, %s101
      %s104 = sphi 0, %s103
      %s118 = sphi 0, %s104
      %s122 = sphi 0, %s122
      %s124 = sphi 0, %s122
      %s125 = sphi 0, %s124
      %s139 = sphi 0, %s125
      %s145 = sphi 0, %s147
      %s148 = sphi 0, %s145
      %s149 = sphi 0, %s148
      %s165 = sphi 0, %s149
      %s171 = sphi 0, %s173
      %s174 = sphi 0, %s171
      %s175 = sphi 0, %s174
      %s191 = sphi 0, %s175
      %s199 = sphi 0, %s201
      %s202 = sphi 0, %s199
      %s203 = sphi 0, %s202
      %s219 = sphi 0, %s203
    $region4: #{alignment_layer.1} parent=1 // loop_header_branch
      %16 = sbr.rel (%p14) target = $region8
    $region5: #{alignment_layer.1} parent=1 // loop_body
      %s18 = ssub.s32 %s13, 1
      %s19 = ssub.s32 %s13, 2
      %s26 = sadd.s32 1, %s21
      %p27 = scmp.ge.s32.totalorder %s26, 4
      %s28 = scalar_select %p27, 0, %s26
      %s29 = sadd.s32 1, %s20
      %s30 = scalar_select %p27, %s29, %s20
      %p31 = scmp.ge.s32.totalorder %s30, 1
      %s32 = scalar_select %p31, 0, %s30
      %s33 = ssub.s32 %s20, %s32
      %p34 = scmp.eq.s32.totalorder %s33, 0
      %s36 = sadd.s32 %s35, 1
      %s37 = scalar_select %p34, %s35, %s36
      %p40 = pneg %p34
      %p41 = scmp.eq.s32.totalorder %s13, 3
      %p42 = por %p40, %p41
      %p43 = scmp.ne.s32.totalorder %s35, %s38
      %p44 = scmp.eq.s32.totalorder %s13, 0
      %p45 = por %p43, %p44
      %p46 = scmp.ne.s32.totalorder %s35, %s38
      %p47 = scmp.eq.s32.totalorder %s18, 3
      %p48 = por %p46, %p47
      %p49 = scmp.ne.s32.totalorder %s38, %s39
      %p50 = scmp.eq.s32.totalorder %s18, 0
      %p51 = por %p49, %p50
      %p52 = scmp.ne.s32.totalorder %s38, %s39
      %p53 = scmp.eq.s32.totalorder %s19, 3
      %p54 = por %p52, %p53
      %p56 = scmp.ne.s32.totalorder %s39, %s55
      %p57 = scmp.eq.s32.totalorder %s19, 0
      %p58 = por %p56, %p57
      %s60 = sadd.s32 %s59, 1
      %p63 = scmp.eq.s32.totalorder %s13, 3
      %p64 = scmp.ne.s32.totalorder %s59, %s61
      %p65 = scmp.eq.s32.totalorder %s13, 0
      %p66 = por %p64, %p65
      %p67 = scmp.ne.s32.totalorder %s59, %s61
      %p68 = scmp.eq.s32.totalorder %s18, 3
      %p69 = por %p67, %p68
      %p70 = scmp.ne.s32.totalorder %s61, %s62
      %p71 = scmp.eq.s32.totalorder %s18, 0
      %p72 = por %p70, %p71
      %p73 = scmp.ne.s32.totalorder %s61, %s62
      %p74 = scmp.eq.s32.totalorder %s19, 3
      %p75 = por %p73, %p74
      %p77 = scmp.ne.s32.totalorder %s62, %s76
      %p78 = scmp.eq.s32.totalorder %s19, 0
      %p79 = por %p77, %p78
      %s81 = sadd.s32 %s80, 1
      %p84 = scmp.eq.s32.totalorder %s13, 3
      %p85 = scmp.ne.s32.totalorder %s80, %s82
      %p86 = scmp.eq.s32.totalorder %s13, 0
      %p87 = por %p85, %p86
      %p88 = scmp.ne.s32.totalorder %s80, %s82
      %p89 = scmp.eq.s32.totalorder %s18, 3
      %p90 = por %p88, %p89
      %p91 = scmp.ne.s32.totalorder %s82, %s83
      %p92 = scmp.eq.s32.totalorder %s18, 0
      %p93 = por %p91, %p92
      %p94 = scmp.ne.s32.totalorder %s82, %s83
      %p95 = scmp.eq.s32.totalorder %s19, 3
      %p96 = por %p94, %p95
      %p98 = scmp.ne.s32.totalorder %s83, %s97
      %p99 = scmp.eq.s32.totalorder %s19, 0
      %p100 = por %p98, %p99
      %s102 = sadd.s32 %s101, 1
      %p105 = scmp.eq.s32.totalorder %s13, 3
      %p106 = scmp.ne.s32.totalorder %s101, %s103
      %p107 = scmp.eq.s32.totalorder %s13, 0
      %p108 = por %p106, %p107
      %p109 = scmp.ne.s32.totalorder %s101, %s103
      %p110 = scmp.eq.s32.totalorder %s18, 3
      %p111 = por %p109, %p110
      %p112 = scmp.ne.s32.totalorder %s103, %s104
      %p113 = scmp.eq.s32.totalorder %s18, 0
      %p114 = por %p112, %p113
      %p115 = scmp.ne.s32.totalorder %s103, %s104
      %p116 = scmp.eq.s32.totalorder %s19, 3
      %p117 = por %p115, %p116
      %p119 = scmp.ne.s32.totalorder %s104, %s118
      %p120 = scmp.eq.s32.totalorder %s19, 0
      %p121 = por %p119, %p120
      %s123 = sadd.s32 %s122, 1
      %p126 = scmp.eq.s32.totalorder %s13, 3
      %p127 = scmp.ne.s32.totalorder %s122, %s124
      %p128 = scmp.eq.s32.totalorder %s13, 0
      %p129 = por %p127, %p128
      %p130 = scmp.ne.s32.totalorder %s122, %s124
      %p131 = scmp.eq.s32.totalorder %s18, 3
      %p132 = por %p130, %p131
      %p133 = scmp.ne.s32.totalorder %s124, %s125
      %p134 = scmp.eq.s32.totalorder %s18, 0
      %p135 = por %p133, %p134
      %p136 = scmp.ne.s32.totalorder %s124, %s125
      %p137 = scmp.eq.s32.totalorder %s19, 3
      %p138 = por %p136, %p137
      %p140 = scmp.ne.s32.totalorder %s125, %s139
      %p141 = scmp.eq.s32.totalorder %s19, 0
      %p142 = por %p140, %p141
      %s143 = ssub.s32 %s21, %s28
      %p144 = scmp.eq.s32.totalorder %s143, 0
      %s146 = sadd.s32 %s145, 1
      %s147 = scalar_select %p144, %s145, %s146
      %p150 = pneg %p144
      %p151 = scmp.eq.s32.totalorder %s13, 3
      %p152 = por %p150, %p151
      %p153 = scmp.ne.s32.totalorder %s145, %s148
      %p154 = scmp.eq.s32.totalorder %s13, 0
      %p155 = por %p153, %p154
      %p156 = scmp.ne.s32.totalorder %s145, %s148
      %p157 = scmp.eq.s32.totalorder %s18, 3
      %p158 = por %p156, %p157
      %p159 = scmp.ne.s32.totalorder %s148, %s149
      %p160 = scmp.eq.s32.totalorder %s18, 0
      %p161 = por %p159, %p160
      %p162 = scmp.ne.s32.totalorder %s148, %s149
      %p163 = scmp.eq.s32.totalorder %s19, 3
      %p164 = por %p162, %p163
      %p166 = scmp.ne.s32.totalorder %s149, %s165
      %p167 = scmp.eq.s32.totalorder %s19, 0
      %p168 = por %p166, %p167
      %s169 = ssub.s32 %s21, %s28
      %p170 = scmp.eq.s32.totalorder %s169, 0
      %s172 = sadd.s32 %s171, 1
      %s173 = scalar_select %p170, %s171, %s172
      %p176 = pneg %p170
      %p177 = scmp.eq.s32.totalorder %s13, 3
      %p178 = por %p176, %p177
      %p179 = scmp.ne.s32.totalorder %s171, %s174
      %p180 = scmp.eq.s32.totalorder %s13, 0
      %p181 = por %p179, %p180
      %p182 = scmp.ne.s32.totalorder %s171, %s174
      %p183 = scmp.eq.s32.totalorder %s18, 3
      %p184 = por %p182, %p183
      %p185 = scmp.ne.s32.totalorder %s174, %s175
      %p186 = scmp.eq.s32.totalorder %s18, 0
      %p187 = por %p185, %p186
      %p188 = scmp.ne.s32.totalorder %s174, %s175
      %p189 = scmp.eq.s32.totalorder %s19, 3
      %p190 = por %p188, %p189
      %p192 = scmp.ne.s32.totalorder %s175, %s191
      %p193 = scmp.eq.s32.totalorder %s19, 0
      %p194 = por %p192, %p193
      %s195 = ssub.s32 %s20, %s32
      %s196 = ssub.s32 %s21, %s28
      %s197 = sor.u32 %s195, %s196
      %p198 = scmp.eq.s32.totalorder %s197, 0
      %s200 = sadd.s32 %s199, 1
      %s201 = scalar_select %p198, %s199, %s200
      %p204 = pneg %p198
      %p205 = scmp.eq.s32.totalorder %s13, 3
      %p206 = por %p204, %p205
      %p207 = scmp.ne.s32.totalorder %s199, %s202
      %p208 = scmp.eq.s32.totalorder %s13, 0
      %p209 = por %p207, %p208
      %p210 = scmp.ne.s32.totalorder %s199, %s202
      %p211 = scmp.eq.s32.totalorder %s18, 3
      %p212 = por %p210, %p211
      %p213 = scmp.ne.s32.totalorder %s202, %s203
      %p214 = scmp.eq.s32.totalorder %s18, 0
      %p215 = por %p213, %p214
      %p216 = scmp.ne.s32.totalorder %s202, %s203
      %p217 = scmp.eq.s32.totalorder %s19, 3
      %p218 = por %p216, %p217
      %p220 = scmp.ne.s32.totalorder %s203, %s219
      %p221 = scmp.eq.s32.totalorder %s19, 0
      %p222 = por %p220, %p221
      %p223 = scmp.le.s32.totalorder 1, %s13
      %p224 = scmp.lt.s32.totalorder %s13, 5
      %p225 = pnand %p223, %p224
      %p226 = pneg %p225
      // Predicated region
      $region9: #{alignment_layer.1} parent=5 // pred_check
        _
      $region10: #{alignment_layer.1} parent=5 // pred_check_branch
        %228 = sbr.rel (%p225) target = $region12
      $region11: #{alignment_layer.1} parent=5 // pred_region
        %s229 = ssub.s32 %s13, 1
        // Predicated region
        $region13: #{alignment_layer.1} parent=11 // pred_check
          %p230 = pneg %p51
        $region14: #{alignment_layer.1} parent=11 // pred_check_branch
          %232 = sbr.rel (%p230) target = $region16
        $region15: #{alignment_layer.1} parent=11 // pred_region
          %s233 = smul.u32 2, %s22
          %p234 = scmp.lt.s32.totalorder %s233, 1
          %s235 = scalar_select %p234, %s233, 1
          %s236 = smul.addr %s235, 47
          %s237 = smul.addr %s236, 4
          %s238 = scalar_lea.vmem %s0, %s237
          %s239 = smul.u32 2, %s22
        $region16: #{alignment_layer.1} parent=11 // pred_fallthru
          _
        // Predicated region
        $region17: #{alignment_layer.1} parent=11 // pred_check
          %p240 = pneg %p72
        $region18: #{alignment_layer.1} parent=11 // pred_check_branch
          %242 = sbr.rel (%p240) target = $region20
        $region19: #{alignment_layer.1} parent=11 // pred_region
          _
        $region20: #{alignment_layer.1} parent=11 // pred_fallthru
          _
        // Predicated region
        $region21: #{alignment_layer.1} parent=11 // pred_check
          %p243 = pneg %p93
        $region22: #{alignment_layer.1} parent=11 // pred_check_branch
          %245 = sbr.rel (%p243) target = $region24
        $region23: #{alignment_layer.1} parent=11 // pred_region
          _
        $region24: #{alignment_layer.1} parent=11 // pred_fallthru
          _
        // Predicated region
        $region25: #{alignment_layer.1} parent=11 // pred_check
          %p246 = pneg %p114
        $region26: #{alignment_layer.1} parent=11 // pred_check_branch
          %248 = sbr.rel (%p246) target = $region28
        $region27: #{alignment_layer.1} parent=11 // pred_region
          _
        $region28: #{alignment_layer.1} parent=11 // pred_fallthru
          _
        // Predicated region
        $region29: #{alignment_layer.1} parent=11 // pred_check
          %p249 = pneg %p135
        $region30: #{alignment_layer.1} parent=11 // pred_check_branch
          %251 = sbr.rel (%p249) target = $region32
        $region31: #{alignment_layer.1} parent=11 // pred_region
          _
        $region32: #{alignment_layer.1} parent=11 // pred_fallthru
          _
      $region12: #{alignment_layer.1} parent=5 // pred_fallthru
        _
      %p252 = scmp.lt.s32.totalorder %s13, 4
      // Predicated region
      $region33: #{alignment_layer.1} parent=5 // pred_check
        %p253 = pneg %p252
      $region34: #{alignment_layer.1} parent=5 // pred_check_branch
        %255 = sbr.rel (%p253) target = $region36
      $region35: #{alignment_layer.1} parent=5 // pred_region
        // Predicated region
        $region37: #{alignment_layer.1} parent=35 // pred_check
          %p256 = pneg %p155
        $region38: #{alignment_layer.1} parent=35 // pred_check_branch
          %258 = sbr.rel (%p256) target = $region40
        $region39: #{alignment_layer.1} parent=35 // pred_region
          %s259 = sand.u32 %s145, 1
          %s260 = sand.u32 %s145, 1
          %s261 = smul.addr %s260, 168
          %s262 = scalar_lea.vmem [#allocation3], %s261
          %s263 = smul.u32 21, %s21
          %s264 = smul.addr %s263, 4
          %s265 = scalar_lea.vmem %s5, %s264
          // Predicated region
          $region41: #{alignment_layer.1} parent=39 // pred_check
            _
          $region42: #{alignment_layer.1} parent=39 // pred_check_branch
            %267 = sbr.rel (0) target = $region44
          $region43: #{alignment_layer.1} parent=39 // pred_region
            // Predicated region
            $region45: #{alignment_layer.1} parent=43 // pred_check
              _
            $region46: #{alignment_layer.1} parent=43 // pred_check_branch
              %269 = sbr.rel (0) target = $region48
            $region47: #{alignment_layer.1} parent=43 // pred_region
              %s270 = scalar_lea.vmem %s265, 80
              %s271 = scalar_lea.vmem %s262, 80 [#allocation3]
              loop: start=0, step=1, limit=1
              $region49: #{alignment_layer.1} parent=47 // loop_pre_header
                _
              $region50: #{alignment_layer.1} parent=47 // loop_header
                %s273 = sphi 0, %s277
                %p274 = scmp.ge.s32.totalorder %s273, 1
                %s278 = sphi %s265, %s265
                %s279 = sphi %s262, %s262
              $region51: #{alignment_layer.1} parent=47 // loop_header_branch
                %276 = sbr.rel (%p274) target = $region55
              $region52: #{alignment_layer.1} parent=47 // loop_body
                %v280 = vld [vmem:[%s278] sm:$0xff]
                %281 = vst [vmem:[%s279] sm:$0xff] %v280
                %v282 = vld [vmem:[%s278 + $0x8] sm:$0xff]
                %283 = vst [vmem:[%s279 + $0x8] sm:$0xff] %v282
                %v284 = vld [vmem:[%s278 + $0x10] sm:$0xff]
                %285 = vst [vmem:[%s279 + $0x10] sm:$0xff] %v284
                %v286 = vld [vmem:[%s278 + $0x18] sm:$0xff]
                %287 = vst [vmem:[%s279 + $0x18] sm:$0xff] %v286
                %v288 = vld [vmem:[%s278 + $0x20] sm:$0xff]
                %289 = vst [vmem:[%s279 + $0x20] sm:$0xff] %v288
                %v290 = vld [vmem:[%s278 + $0x28] sm:$0xff]
                %291 = vst [vmem:[%s279 + $0x28] sm:$0xff] %v290
                %v292 = vld [vmem:[%s278 + $0x30] sm:$0xff]
                %293 = vst [vmem:[%s279 + $0x30] sm:$0xff] %v292
                %v294 = vld [vmem:[%s278 + $0x38] sm:$0xff]
                %295 = vst [vmem:[%s279 + $0x38] sm:$0xff] %v294
                %v296 = vld [vmem:[%s278 + $0x40] sm:$0xff]
                %297 = vst [vmem:[%s279 + $0x40] sm:$0xff] %v296
                %v298 = vld [vmem:[%s278 + $0x48] sm:$0xff]
                %299 = vst [vmem:[%s279 + $0x48] sm:$0xff] %v298
                %v300 = vld [vmem:[%s278 + $0x150] sm:$0xff]
                %301 = vst [vmem:[%s279 + $0x54] sm:$0xff] %v300
                %v302 = vld [vmem:[%s278 + $0x158] sm:$0xff]
                %303 = vst [vmem:[%s279 + $0x5c] sm:$0xff] %v302
                %v304 = vld [vmem:[%s278 + $0x160] sm:$0xff]
                %305 = vst [vmem:[%s279 + $0x64] sm:$0xff] %v304
                %v306 = vld [vmem:[%s278 + $0x168] sm:$0xff]
                %307 = vst [vmem:[%s279 + $0x6c] sm:$0xff] %v306
                %v308 = vld [vmem:[%s278 + $0x170] sm:$0xff]
                %309 = vst [vmem:[%s279 + $0x74] sm:$0xff] %v308
                %v310 = vld [vmem:[%s278 + $0x178] sm:$0xff]
                %311 = vst [vmem:[%s279 + $0x7c] sm:$0xff] %v310
                %v312 = vld [vmem:[%s278 + $0x180] sm:$0xff]
                %313 = vst [vmem:[%s279 + $0x84] sm:$0xff] %v312
                %v314 = vld [vmem:[%s278 + $0x188] sm:$0xff]
                %315 = vst [vmem:[%s279 + $0x8c] sm:$0xff] %v314
                %v316 = vld [vmem:[%s278 + $0x190] sm:$0xff]
                %317 = vst [vmem:[%s279 + $0x94] sm:$0xff] %v316
                %v318 = vld [vmem:[%s278 + $0x198] sm:$0xff]
                %319 = vst [vmem:[%s279 + $0x9c] sm:$0xff] %v318
              $region53: #{alignment_layer.1} parent=47 // loop_footer
                %s277 = sadd.s32 1, %s273
              $region54: #{alignment_layer.1} parent=47 // loop_footer_branch
                %272 = sbr.rel target = $region50
              $region55: #{alignment_layer.1} parent=47 // loop_exit
                _
              %s321 = ssub.s32 16, 1
              loop: start=0, step=1, limit=1
              $region56: #{alignment_layer.1} parent=47 // loop_pre_header
                _
              $region57: #{alignment_layer.1} parent=47 // loop_header
                %s323 = sphi 0, %s327
                %p324 = scmp.ge.s32.totalorder %s323, 1
                %s328 = sphi %s270, %s270
                %s329 = sphi %s271, %s271
              $region58: #{alignment_layer.1} parent=47 // loop_header_branch
                %326 = sbr.rel (%p324) target = $region62
              $region59: #{alignment_layer.1} parent=47 // loop_body
                %v330 = vld [vmem:[%s328] sm:%s321]
                %331 = vst [vmem:[%s329] sm:%s321] %v330
                %v332 = vld [vmem:[%s328 + $0x150] sm:%s321]
                %333 = vst [vmem:[%s329 + $0x54] sm:%s321] %v332
              $region60: #{alignment_layer.1} parent=47 // loop_footer
                %s327 = sadd.s32 1, %s323
              $region61: #{alignment_layer.1} parent=47 // loop_footer_branch
                %322 = sbr.rel target = $region57
              $region62: #{alignment_layer.1} parent=47 // loop_exit
                _
            $region48: #{alignment_layer.1} parent=43 // pred_fallthru
              _
          $region44: #{alignment_layer.1} parent=39 // pred_fallthru
            _
          %334 = vnop
        $region40: #{alignment_layer.1} parent=35 // pred_fallthru
          _
        // Predicated region
        $region63: #{alignment_layer.1} parent=35 // pred_check
          %p335 = pneg %p181
        $region64: #{alignment_layer.1} parent=35 // pred_check_branch
          %337 = sbr.rel (%p335) target = $region66
        $region65: #{alignment_layer.1} parent=35 // pred_region
          %s338 = smul.u32 21, %s21
          %p339 = scmp.lt.s32.totalorder %s338, 83
          %s340 = scalar_select %p339, %s338, 83
          %s341 = scalar_lea.vmem %s6, %s340
          %s342 = smul.u32 21, %s21
        $region66: #{alignment_layer.1} parent=35 // pred_fallthru
          _
      $region36: #{alignment_layer.1} parent=5 // pred_fallthru
        _
      %p343 = scmp.le.s32.totalorder 1, %s13
      %p344 = scmp.lt.s32.totalorder %s13, 5
      %p345 = pnand %p343, %p344
      %p346 = pneg %p345
      // Predicated region
      $region67: #{alignment_layer.1} parent=5 // pred_check
        _
      $region68: #{alignment_layer.1} parent=5 // pred_check_branch
        %348 = sbr.rel (%p345) target = $region70
      $region69: #{alignment_layer.1} parent=5 // pred_region
        %s349 = ssub.s32 %s13, 1
        %s350 = sand.u32 %s148, 1
        %s351 = sand.u32 %s148, 1
        %s352 = smul.addr %s351, 168
        %s353 = scalar_lea.vmem [#allocation3], %s352
        // Predicated region
        $region71: #{alignment_layer.1} parent=69 // pred_check
          %p354 = pneg %p161
        $region72: #{alignment_layer.1} parent=69 // pred_check_branch
          %356 = sbr.rel (%p354) target = $region74
        $region73: #{alignment_layer.1} parent=69 // pred_region
          _
        $region74: #{alignment_layer.1} parent=69 // pred_fallthru
          _
        %s357 = smul.u32 2, %s22
        %p358 = scmp.lt.s32.totalorder %s357, 1
        %s359 = scalar_select %p358, %s357, 1
        %s360 = smul.addr %s359, 47
        %s361 = smul.addr %s360, 4
        %s362 = scalar_lea.vmem %s0, %s361
        %p363 = pneg %p51
        %p364 = pneg %p48
        %p365 = pneg %p72
        %p366 = pneg %p69
        %p367 = pneg %p93
        %p368 = pneg %p90
        %p369 = pneg %p114
        %p370 = pneg %p111
        %p371 = pneg %p135
        %p372 = pneg %p132
        %s373 = sand.u32 %s148, 1
        %s374 = sand.u32 %s148, 1
        %s375 = smul.addr %s374, 168
        %s376 = scalar_lea.vmem [#allocation3], %s375
        %p377 = pneg %p161
        %p378 = pneg %p158
        %s379 = smul.u32 21, %s23
        %p380 = scmp.lt.s32.totalorder %s379, 83
        %s381 = scalar_select %p380, %s379, 83
        %s382 = scalar_lea.vmem %s6, %s381
        %p383 = pneg %p187
        %p384 = pneg %p184
        %p385 = pneg %p215
        %p386 = pneg %p212
        %s387 = sand.u32 %s202, 1
        %s388 = sand.u32 %s202, 1
        %s389 = smul.addr %s388, 168
        %s390 = scalar_lea.vmem [#allocation4], %s389
        %s391 = smul.u32 2, %s22
        %p392 = scmp.lt.s32.totalorder %s391, 1
        %s393 = scalar_select %p392, %s391, 1
        %s394 = smul.addr %s393, 47
        %s395 = smul.addr %s394, 4
        %s396 = scalar_lea.vmem %s0, %s395
        %s397 = smul.u32 2, %s22
        %s398 = smul.u32 21, %s23
        %s399 = smul.u32 21, %s23
        %p400 = scmp.lt.s32.totalorder %s399, 83
        %s401 = scalar_select %p400, %s399, 83
        %s402 = scalar_lea.vmem %s6, %s401
        %s403 = smul.u32 21, %s23
        %s404 = smul.u32 2, %s22
        %s405 = smul.u32 21, %s23
        %p407 = scmp.eq.s32.totalorder %s23, 0
        // Predicated region
        $region75: #{alignment_layer.1} parent=69 // pred_check
          %p408 = pneg %p407
        $region76: #{alignment_layer.1} parent=69 // pred_check_branch
          %410 = sbr.rel (%p408) target = $region78
        $region77: #{alignment_layer.1} parent=69 // pred_region
          %v411 = vld [vmem:[%s396] sm:$0xff]
          %v412 = vld [vmem:[%s396 + $0x8] sm:$0xff]
          %v413 = vld [vmem:[%s396 + $0x10] sm:$0xff]
          %v414 = vld [vmem:[%s396 + $0x18] sm:$0xff]
          %v415 = vld [vmem:[%s396 + $0x20] sm:$0xff]
          %v416 = vld [vmem:[%s396 + $0x28] sm:$0xff]
          %v417 = vld [vmem:[%s396 + $0x30] sm:$0xff]
          %v418 = vld [vmem:[%s396 + $0x38] sm:$0xff]
          %v419 = vld [vmem:[%s396 + $0x40] sm:$0xff]
          %v420 = vld [vmem:[%s396 + $0x48] sm:$0xff]
          %v421 = vld [vmem:[%s396 + $0x50] sm:$0xff]
          %v422 = vld [vmem:[%s396 + $0x58] sm:$0xff]
          %v423 = vld [vmem:[%s396 + $0x60] sm:$0xff]
          %v424 = vld [vmem:[%s396 + $0x68] sm:$0xff]
          %v425 = vld [vmem:[%s396 + $0x70] sm:$0xff]
          %v426 = vld [vmem:[%s396 + $0x78] sm:$0xff]
          %v427 = vld [vmem:[%s396 + $0x80] sm:$0xff]
          %v428 = vld [vmem:[%s396 + $0x88] sm:$0xff]
          %v429 = vld [vmem:[%s396 + $0x90] sm:$0xff]
          %v430 = vld [vmem:[%s396 + $0x98] sm:$0xff]
          %v431 = vld [vmem:[%s396 + $0xa0] sm:$0xff]
          %v432 = vld [vmem:[%s396 + $0xa8] sm:$0xff]
          %v433 = vld [vmem:[%s396 + $0xb0] sm:$0xff]
          %v434 = vld [vmem:[%s396 + $0xb8] sm:$0xf]
          %v435 = vld [vmem:[%s396 + $0xbc] sm:$0xff]
          %v436 = vld [vmem:[%s396 + $0xc4] sm:$0xff]
          %v437 = vld [vmem:[%s396 + $0xcc] sm:$0xff]
          %v438 = vld [vmem:[%s396 + $0xd4] sm:$0xff]
          %v439 = vld [vmem:[%s396 + $0xdc] sm:$0xff]
          %v440 = vld [vmem:[%s396 + $0xe4] sm:$0xff]
          %v441 = vld [vmem:[%s396 + $0xec] sm:$0xff]
          %v442 = vld [vmem:[%s396 + $0xf4] sm:$0xff]
          %v443 = vld [vmem:[%s396 + $0xfc] sm:$0xff]
          %v444 = vld [vmem:[%s396 + $0x104] sm:$0xff]
          %v445 = vld [vmem:[%s396 + $0x10c] sm:$0xff]
          %v446 = vld [vmem:[%s396 + $0x114] sm:$0xff]
          %v447 = vld [vmem:[%s396 + $0x11c] sm:$0xff]
          %v448 = vld [vmem:[%s396 + $0x124] sm:$0xff]
          %v449 = vld [vmem:[%s396 + $0x12c] sm:$0xff]
          %v450 = vld [vmem:[%s396 + $0x134] sm:$0xff]
          %v451 = vld [vmem:[%s396 + $0x13c] sm:$0xff]
          %v452 = vld [vmem:[%s396 + $0x144] sm:$0xff]
          %v453 = vld [vmem:[%s396 + $0x14c] sm:$0xff]
          %v454 = vld [vmem:[%s396 + $0x154] sm:$0xff]
          %v455 = vld [vmem:[%s396 + $0x15c] sm:$0xff]
          %v456 = vld [vmem:[%s396 + $0x164] sm:$0xff]
          %v457 = vld [vmem:[%s396 + $0x16c] sm:$0xff]
          %v458 = vld [vmem:[%s396 + $0x174] sm:$0xf]
          %v459 = vld [vmem:[%s1] sm:$0xf]
          %v460 = vld [vmem:[%s1 + $0x4] sm:$0xf]
          %v461 = vld [vmem:[%s1 + $0x8] sm:$0xf]
          %v462 = vld [vmem:[%s1 + $0xc] sm:$0xf]
          %v463 = vld [vmem:[%s1 + $0x10] sm:$0xf]
          %v464 = vld [vmem:[%s1 + $0x14] sm:$0xf]
          %v465 = vld [vmem:[%s1 + $0x18] sm:$0xf]
          %v466 = vld [vmem:[%s1 + $0x1c] sm:$0xf]
          %v467 = vld [vmem:[%s1 + $0x20] sm:$0xf]
          %v468 = vld [vmem:[%s1 + $0x24] sm:$0xf]
          %v469 = vld [vmem:[%s1 + $0x28] sm:$0xf]
          %v470 = vld [vmem:[%s1 + $0x2c] sm:$0xf]
          %v471 = vld [vmem:[%s1 + $0x30] sm:$0xf]
          %v472 = vld [vmem:[%s1 + $0x34] sm:$0xf]
          %v473 = vld [vmem:[%s1 + $0x38] sm:$0xf]
          %v474 = vld [vmem:[%s1 + $0x3c] sm:$0xf]
          %v475 = vld [vmem:[%s1 + $0x40] sm:$0xf]
          %v476 = vld [vmem:[%s1 + $0x44] sm:$0xf]
          %v477 = vld [vmem:[%s1 + $0x48] sm:$0xf]
          %v478 = vld [vmem:[%s1 + $0x4c] sm:$0xf]
          %v479 = vld [vmem:[%s1 + $0x50] sm:$0xf]
          %v480 = vld [vmem:[%s1 + $0x54] sm:$0xf]
          %v481 = vld [vmem:[%s1 + $0x58] sm:$0xf]
          %v482 = vld [vmem:[%s1 + $0x5c] sm:$0xf]
          %v483 = vld [vmem:[%s1 + $0x60] sm:$0xf]
          %v484 = vld [vmem:[%s1 + $0x64] sm:$0xf]
          %v485 = vld [vmem:[%s1 + $0x68] sm:$0xf]
          %v486 = vld [vmem:[%s1 + $0x6c] sm:$0xf]
          %v487 = vld [vmem:[%s1 + $0x70] sm:$0xf]
          %v488 = vld [vmem:[%s1 + $0x74] sm:$0xf]
          %v489 = vld [vmem:[%s1 + $0x78] sm:$0xf]
          %v490 = vld [vmem:[%s1 + $0x7c] sm:$0xf]
          %v491 = vld [vmem:[%s1 + $0x80] sm:$0xf]
          %v492 = vld [vmem:[%s1 + $0x84] sm:$0xf]
          %v493 = vld [vmem:[%s1 + $0x88] sm:$0xf]
          %v494 = vld [vmem:[%s1 + $0x8c] sm:$0xf]
          %v495 = vld [vmem:[%s1 + $0x90] sm:$0xf]
          %v496 = vld [vmem:[%s1 + $0x94] sm:$0xf]
          %v497 = vld [vmem:[%s1 + $0x98] sm:$0xf]
          %v498 = vld [vmem:[%s1 + $0x9c] sm:$0xf]
          %v499 = vld [vmem:[%s1 + $0xa0] sm:$0xf]
          %v500 = vld [vmem:[%s1 + $0xa4] sm:$0xf]
          %v501 = vld [vmem:[%s1 + $0xa8] sm:$0xf]
          %v502 = vld [vmem:[%s1 + $0xac] sm:$0xf]
          %v503 = vld [vmem:[%s1 + $0xb0] sm:$0xf]
          %v504 = vld [vmem:[%s1 + $0xb4] sm:$0xf]
          %v505 = vld [vmem:[%s1 + $0xb8] sm:$0xf]
          %v506 = vld [vmem:[%s1 + $0xbc] sm:$0xf]
          %v507 = vld [vmem:[%s1 + $0xc0] sm:$0xf]
          %v508 = vld [vmem:[%s1 + $0xc4] sm:$0xf]
          %v509 = vld [vmem:[%s1 + $0xc8] sm:$0xf]
          %v510 = vld [vmem:[%s1 + $0xcc] sm:$0xf]
          %v511 = vld [vmem:[%s1 + $0xd0] sm:$0xf]
          %v512 = vld [vmem:[%s1 + $0xd4] sm:$0xf]
          %v513 = vld [vmem:[%s1 + $0xd8] sm:$0xf]
          %v514 = vld [vmem:[%s1 + $0xdc] sm:$0xf]
          %v515 = vld [vmem:[%s1 + $0xe0] sm:$0xf]
          %v516 = vld [vmem:[%s1 + $0xe4] sm:$0xf]
          %v517 = vld [vmem:[%s1 + $0xe8] sm:$0xf]
          %v518 = vld [vmem:[%s1 + $0xec] sm:$0xf]
          %v519 = vld [vmem:[%s1 + $0xf0] sm:$0xf]
          %v520 = vld [vmem:[%s1 + $0xf4] sm:$0xf]
          %v521 = vld [vmem:[%s1 + $0xf8] sm:$0xf]
          %v522 = vld [vmem:[%s1 + $0xfc] sm:$0xf]
          %v523 = vld [vmem:[%s1 + $0x100] sm:$0xf]
          %v524 = vld [vmem:[%s1 + $0x104] sm:$0xf]
          %v525 = vld [vmem:[%s1 + $0x108] sm:$0xf]
          %v526 = vld [vmem:[%s1 + $0x10c] sm:$0xf]
          %v527 = vld [vmem:[%s1 + $0x110] sm:$0xf]
          %v528 = vld [vmem:[%s1 + $0x114] sm:$0xf]
          %v529 = vld [vmem:[%s1 + $0x118] sm:$0xf]
          %v530 = vld [vmem:[%s1 + $0x11c] sm:$0xf]
          %v531 = vld [vmem:[%s1 + $0x120] sm:$0xf]
          %v532 = vld [vmem:[%s1 + $0x124] sm:$0xf]
          %v533 = vld [vmem:[%s1 + $0x128] sm:$0xf]
          %v534 = vld [vmem:[%s1 + $0x12c] sm:$0xf]
          %v535 = vld [vmem:[%s1 + $0x130] sm:$0xf]
          %v536 = vld [vmem:[%s1 + $0x134] sm:$0xf]
          %v537 = vld [vmem:[%s1 + $0x138] sm:$0xf]
          %v538 = vld [vmem:[%s1 + $0x13c] sm:$0xf]
          %v539 = vld [vmem:[%s1 + $0x140] sm:$0xf]
          %v540 = vld [vmem:[%s1 + $0x144] sm:$0xf]
          %v541 = vld [vmem:[%s1 + $0x148] sm:$0xf]
          %v542 = vld [vmem:[%s1 + $0x14c] sm:$0xf]
          %v543 = vld [vmem:[%s1 + $0x150] sm:$0xf]
          %v544 = vld [vmem:[%s1 + $0x154] sm:$0xf]
          %v545 = vld [vmem:[%s1 + $0x158] sm:$0xf]
          %v546 = vld [vmem:[%s1 + $0x15c] sm:$0xf]
          %v547 = vld [vmem:[%s1 + $0x160] sm:$0xf]
          %v548 = vld [vmem:[%s1 + $0x164] sm:$0xf]
          %v549 = vld [vmem:[%s1 + $0x168] sm:$0xf]
          %v550 = vld [vmem:[%s1 + $0x16c] sm:$0xf]
          %v551 = vld [vmem:[%s1 + $0x170] sm:$0xf]
          %v552 = vld [vmem:[%s1 + $0x174] sm:$0xf]
          %v553 = vld [vmem:[%s1 + $0x178] sm:$0xf]
          %v554 = vld [vmem:[%s1 + $0x17c] sm:$0xf]
          %v555 = vld [vmem:[%s1 + $0x180] sm:$0xf]
          %v556 = vld [vmem:[%s1 + $0x184] sm:$0xf]
          %v557 = vld [vmem:[%s1 + $0x188] sm:$0xf]
          %v558 = vld [vmem:[%s1 + $0x18c] sm:$0xf]
          %v559 = vld [vmem:[%s1 + $0x190] sm:$0xf]
          %v560 = vld [vmem:[%s1 + $0x194] sm:$0xf]
          %v561 = vld [vmem:[%s1 + $0x198] sm:$0xf]
          %v562 = vld [vmem:[%s1 + $0x19c] sm:$0xf]
          %v563 = vld [vmem:[%s1 + $0x1a0] sm:$0xf]
          %v564 = vld [vmem:[%s1 + $0x1a4] sm:$0xf]
          %v565 = vld [vmem:[%s1 + $0x1a8] sm:$0xf]
          %v566 = vld [vmem:[%s1 + $0x1ac] sm:$0xf]
          %v567 = vld [vmem:[%s1 + $0x1b0] sm:$0xf]
          %v568 = vld [vmem:[%s1 + $0x1b4] sm:$0xf]
          %v569 = vld [vmem:[%s1 + $0x1b8] sm:$0xf]
          %v570 = vld [vmem:[%s1 + $0x1bc] sm:$0xf]
          %v571 = vld [vmem:[%s1 + $0x1c0] sm:$0xf]
          %v572 = vld [vmem:[%s1 + $0x1c4] sm:$0xf]
          %v573 = vld [vmem:[%s1 + $0x1c8] sm:$0xf]
          %v574 = vld [vmem:[%s1 + $0x1cc] sm:$0xf]
          %v575 = vld [vmem:[%s1 + $0x1d0] sm:$0xf]
          %v576 = vld [vmem:[%s1 + $0x1d4] sm:$0xf]
          %v577 = vld [vmem:[%s1 + $0x1d8] sm:$0xf]
          %v578 = vld [vmem:[%s1 + $0x1dc] sm:$0xf]
          %v579 = vld [vmem:[%s1 + $0x1e0] sm:$0xf]
          %v580 = vld [vmem:[%s1 + $0x1e4] sm:$0xf]
          %v581 = vld [vmem:[%s1 + $0x1e8] sm:$0xf]
          %v582 = vld [vmem:[%s1 + $0x1ec] sm:$0xf]
          %v583 = vld [vmem:[%s1 + $0x1f0] sm:$0xf]
          %v584 = vld [vmem:[%s1 + $0x1f4] sm:$0xf]
          %v585 = vld [vmem:[%s1 + $0x1f8] sm:$0xf]
          %v586 = vld [vmem:[%s1 + $0x1fc] sm:$0xf]
          %v587 = vld [vmem:[%s1 + $0x200] sm:$0xf]
          %v588 = vld [vmem:[%s1 + $0x204] sm:$0xf]
          %v589 = vld [vmem:[%s1 + $0x208] sm:$0xf]
          %v590 = vld [vmem:[%s1 + $0x20c] sm:$0xf]
          %v591 = vld [vmem:[%s1 + $0x210] sm:$0xf]
          %v592 = vld [vmem:[%s1 + $0x214] sm:$0xf]
          %v593 = vld [vmem:[%s1 + $0x218] sm:$0xf]
          %v594 = vld [vmem:[%s1 + $0x21c] sm:$0xf]
          %v595 = vld [vmem:[%s1 + $0x220] sm:$0xf]
          %v596 = vld [vmem:[%s1 + $0x224] sm:$0xf]
          %v597 = vld [vmem:[%s1 + $0x228] sm:$0xf]
          %v598 = vld [vmem:[%s1 + $0x22c] sm:$0xf]
          %v599 = vld [vmem:[%s1 + $0x230] sm:$0xf]
          %v600 = vld [vmem:[%s1 + $0x234] sm:$0xf]
          %v601 = vld [vmem:[%s1 + $0x238] sm:$0xf]
          %v602 = vld [vmem:[%s1 + $0x23c] sm:$0xf]
          %v603 = vld [vmem:[%s1 + $0x240] sm:$0xf]
          %v604 = vld [vmem:[%s1 + $0x244] sm:$0xf]
          %v605 = vld [vmem:[%s1 + $0x248] sm:$0xf]
          %v606 = vld [vmem:[%s1 + $0x24c] sm:$0xf]
          %v607 = vld [vmem:[%s1 + $0x250] sm:$0xf]
          %v608 = vld [vmem:[%s1 + $0x254] sm:$0xf]
          %v609 = vld [vmem:[%s1 + $0x258] sm:$0xf]
          %v610 = vld [vmem:[%s1 + $0x25c] sm:$0xf]
          %v611 = vld [vmem:[%s1 + $0x260] sm:$0xf]
          %v612 = vld [vmem:[%s1 + $0x264] sm:$0xf]
          %v613 = vld [vmem:[%s1 + $0x268] sm:$0xf]
          %v614 = vld [vmem:[%s1 + $0x26c] sm:$0xf]
          %v615 = vld [vmem:[%s1 + $0x270] sm:$0xf]
          %v616 = vld [vmem:[%s1 + $0x274] sm:$0xf]
          %v617 = vld [vmem:[%s1 + $0x278] sm:$0xf]
          %v618 = vld [vmem:[%s1 + $0x27c] sm:$0xf]
          %v619 = vld [vmem:[%s1 + $0x280] sm:$0xf]
          %v620 = vld [vmem:[%s1 + $0x284] sm:$0xf]
          %v621 = vld [vmem:[%s1 + $0x288] sm:$0xf]
          %v622 = vld [vmem:[%s1 + $0x28c] sm:$0xf]
          %v623 = vld [vmem:[%s1 + $0x290] sm:$0xf]
          %v624 = vld [vmem:[%s1 + $0x294] sm:$0xf]
          %v625 = vld [vmem:[%s1 + $0x298] sm:$0xf]
          %v626 = vld [vmem:[%s1 + $0x29c] sm:$0xf]
          %v627 = vld [vmem:[%s1 + $0x2a0] sm:$0xf]
          %v628 = vld [vmem:[%s1 + $0x2a4] sm:$0xf]
          %v629 = vld [vmem:[%s1 + $0x2a8] sm:$0xf]
          %v630 = vld [vmem:[%s1 + $0x2ac] sm:$0xf]
          %v631 = vld [vmem:[%s1 + $0x2b0] sm:$0xf]
          %v632 = vld [vmem:[%s1 + $0x2b4] sm:$0xf]
          %v633 = vld [vmem:[%s1 + $0x2b8] sm:$0xf]
          %v634 = vld [vmem:[%s1 + $0x2bc] sm:$0xf]
          %v635 = vld [vmem:[%s1 + $0x2c0] sm:$0xf]
          %v636 = vld [vmem:[%s1 + $0x2c4] sm:$0xf]
          %v637 = vld [vmem:[%s1 + $0x2c8] sm:$0xf]
          %v638 = vld [vmem:[%s1 + $0x2cc] sm:$0xf]
          %v639 = vld [vmem:[%s1 + $0x2d0] sm:$0xf]
          %v640 = vld [vmem:[%s1 + $0x2d4] sm:$0xf]
          %v641 = vld [vmem:[%s1 + $0x2d8] sm:$0xf]
          %v642 = vld [vmem:[%s1 + $0x2dc] sm:$0xf]
          %v643 = vld [vmem:[%s1 + $0x2e0] sm:$0xf]
          %v644 = vld [vmem:[%s1 + $0x2e4] sm:$0xf]
          %v645 = vld [vmem:[%s1 + $0x2e8] sm:$0xf]
          %v646 = vld [vmem:[%s1 + $0x2ec] sm:$0xf]
          %v647 = vld [vmem:[%s1 + $0x2f0] sm:$0xf]
          %v648 = vld [vmem:[%s1 + $0x2f4] sm:$0xf]
          %v649 = vld [vmem:[%s1 + $0x2f8] sm:$0xf]
          %v650 = vld [vmem:[%s1 + $0x2fc] sm:$0xf]
          %v651 = vld [vmem:[%s1 + $0x300] sm:$0xf]
          %v652 = vld [vmem:[%s1 + $0x304] sm:$0xf]
          %v653 = vld [vmem:[%s1 + $0x308] sm:$0xf]
          %v654 = vld [vmem:[%s1 + $0x30c] sm:$0xf]
          %v655 = vld [vmem:[%s1 + $0x310] sm:$0xf]
          %v656 = vld [vmem:[%s1 + $0x314] sm:$0xf]
          %v657 = vld [vmem:[%s1 + $0x318] sm:$0xf]
          %v658 = vld [vmem:[%s1 + $0x31c] sm:$0xf]
          %v659 = vld [vmem:[%s1 + $0x320] sm:$0xf]
          %v660 = vld [vmem:[%s1 + $0x324] sm:$0xf]
          %v661 = vld [vmem:[%s1 + $0x328] sm:$0xf]
          %v662 = vld [vmem:[%s1 + $0x32c] sm:$0xf]
          %v663 = vld [vmem:[%s1 + $0x330] sm:$0xf]
          %v664 = vld [vmem:[%s1 + $0x334] sm:$0xf]
          %v665 = vld [vmem:[%s1 + $0x338] sm:$0xf]
          %v666 = vld [vmem:[%s1 + $0x33c] sm:$0xf]
          %v667 = vld [vmem:[%s1 + $0x340] sm:$0xf]
          %v668 = vld [vmem:[%s1 + $0x344] sm:$0xf]
          %v669 = vld [vmem:[%s1 + $0x348] sm:$0xf]
          %v670 = vld [vmem:[%s1 + $0x34c] sm:$0xf]
          %v671 = vld [vmem:[%s1 + $0x350] sm:$0xf]
          %v672 = vld [vmem:[%s1 + $0x354] sm:$0xf]
          %v673 = vld [vmem:[%s1 + $0x358] sm:$0xf]
          %v674 = vld [vmem:[%s1 + $0x35c] sm:$0xf]
          %v675 = vld [vmem:[%s1 + $0x360] sm:$0xf]
          %v676 = vld [vmem:[%s1 + $0x364] sm:$0xf]
          %v677 = vld [vmem:[%s1 + $0x368] sm:$0xf]
          %v678 = vld [vmem:[%s1 + $0x36c] sm:$0xf]
          %v679 = vld [vmem:[%s1 + $0x370] sm:$0xf]
          %v680 = vld [vmem:[%s1 + $0x374] sm:$0xf]
          %v681 = vld [vmem:[%s1 + $0x378] sm:$0xf]
          %v682 = vld [vmem:[%s1 + $0x37c] sm:$0xf]
          %v683 = vld [vmem:[%s1 + $0x380] sm:$0xf]
          %v684 = vld [vmem:[%s1 + $0x384] sm:$0xf]
          %v685 = vld [vmem:[%s1 + $0x388] sm:$0xf]
          %v686 = vld [vmem:[%s1 + $0x38c] sm:$0xf]
          %v687 = vld [vmem:[%s1 + $0x390] sm:$0xf]
          %v688 = vld [vmem:[%s1 + $0x394] sm:$0xf]
          %v689 = vld [vmem:[%s1 + $0x398] sm:$0xf]
          %v690 = vld [vmem:[%s1 + $0x39c] sm:$0xf]
          %v691 = vld [vmem:[%s1 + $0x3a0] sm:$0xf]
          %v692 = vld [vmem:[%s1 + $0x3a4] sm:$0xf]
          %v693 = vld [vmem:[%s1 + $0x3a8] sm:$0xf]
          %v694 = vld [vmem:[%s1 + $0x3ac] sm:$0xf]
          %v695 = vld [vmem:[%s1 + $0x3b0] sm:$0xf]
          %v696 = vld [vmem:[%s1 + $0x3b4] sm:$0xf]
          %v697 = vld [vmem:[%s1 + $0x3b8] sm:$0xf]
          %v698 = vld [vmem:[%s1 + $0x3bc] sm:$0xf]
          %v699 = vld [vmem:[%s1 + $0x3c0] sm:$0xf]
          %v700 = vld [vmem:[%s1 + $0x3c4] sm:$0xf]
          %v701 = vld [vmem:[%s1 + $0x3c8] sm:$0xf]
          %v702 = vld [vmem:[%s1 + $0x3cc] sm:$0xf]
          %v703 = vld [vmem:[%s1 + $0x3d0] sm:$0xf]
          %v704 = vld [vmem:[%s1 + $0x3d4] sm:$0xf]
          %v705 = vld [vmem:[%s1 + $0x3d8] sm:$0xf]
          %v706 = vld [vmem:[%s1 + $0x3dc] sm:$0xf]
          %v707 = vld [vmem:[%s1 + $0x3e0] sm:$0xf]
          %v708 = vld [vmem:[%s1 + $0x3e4] sm:$0xf]
          %v709 = vld [vmem:[%s1 + $0x3e8] sm:$0xf]
          %v710 = vld [vmem:[%s1 + $0x3ec] sm:$0xf]
          %v711 = vld [vmem:[%s1 + $0x3f0] sm:$0xf]
          %v712 = vld [vmem:[%s1 + $0x3f4] sm:$0xf]
          %v713 = vld [vmem:[%s1 + $0x3f8] sm:$0xf]
          %v714 = vld [vmem:[%s1 + $0x3fc] sm:$0xf]
          %v715 = vld [vmem:[%s1 + $0x400] sm:$0xf]
          %v716 = vld [vmem:[%s1 + $0x404] sm:$0xf]
          %v717 = vld [vmem:[%s1 + $0x408] sm:$0xf]
          %v718 = vld [vmem:[%s1 + $0x40c] sm:$0xf]
          %v719 = vld [vmem:[%s1 + $0x410] sm:$0xf]
          %v720 = vld [vmem:[%s1 + $0x414] sm:$0xf]
          %v721 = vld [vmem:[%s1 + $0x418] sm:$0xf]
          %v722 = vld [vmem:[%s1 + $0x41c] sm:$0xf]
          %v723 = vld [vmem:[%s1 + $0x420] sm:$0xf]
          %v724 = vld [vmem:[%s1 + $0x424] sm:$0xf]
          %v725 = vld [vmem:[%s1 + $0x428] sm:$0xf]
          %v726 = vld [vmem:[%s1 + $0x42c] sm:$0xf]
          %v727 = vld [vmem:[%s1 + $0x430] sm:$0xf]
          %v728 = vld [vmem:[%s1 + $0x434] sm:$0xf]
          %v729 = vld [vmem:[%s1 + $0x438] sm:$0xf]
          %v730 = vld [vmem:[%s1 + $0x43c] sm:$0xf]
          %v731 = vld [vmem:[%s1 + $0x440] sm:$0xf]
          %v732 = vld [vmem:[%s1 + $0x444] sm:$0xf]
          %v733 = vld [vmem:[%s1 + $0x448] sm:$0xf]
          %v734 = vld [vmem:[%s1 + $0x44c] sm:$0xf]
          %v735 = vld [vmem:[%s1 + $0x450] sm:$0xf]
          %v736 = vld [vmem:[%s1 + $0x454] sm:$0xf]
          %v737 = vld [vmem:[%s1 + $0x458] sm:$0xf]
          %v738 = vld [vmem:[%s1 + $0x45c] sm:$0xf]
          %v739 = vld [vmem:[%s1 + $0x460] sm:$0xf]
          %v740 = vld [vmem:[%s1 + $0x464] sm:$0xf]
          %v741 = vld [vmem:[%s1 + $0x468] sm:$0xf]
          %v742 = vld [vmem:[%s1 + $0x46c] sm:$0xf]
          %v743 = vld [vmem:[%s1 + $0x470] sm:$0xf]
          %v744 = vld [vmem:[%s1 + $0x474] sm:$0xf]
          %v745 = vld [vmem:[%s1 + $0x478] sm:$0xf]
          %v746 = vld [vmem:[%s1 + $0x47c] sm:$0xf]
          %v747 = vld [vmem:[%s1 + $0x480] sm:$0xf]
          %v748 = vld [vmem:[%s1 + $0x484] sm:$0xf]
          %v749 = vld [vmem:[%s1 + $0x488] sm:$0xf]
          %v750 = vld [vmem:[%s1 + $0x48c] sm:$0xf]
          %v751 = vld [vmem:[%s1 + $0x490] sm:$0xf]
          %v752 = vld [vmem:[%s1 + $0x494] sm:$0xf]
          %v753 = vld [vmem:[%s1 + $0x498] sm:$0xf]
          %v754 = vld [vmem:[%s1 + $0x49c] sm:$0xf]
          %v755 = vld [vmem:[%s1 + $0x4a0] sm:$0xf]
          %v756 = vld [vmem:[%s1 + $0x4a4] sm:$0xf]
          %v757 = vld [vmem:[%s1 + $0x4a8] sm:$0xf]
          %v758 = vld [vmem:[%s1 + $0x4ac] sm:$0xf]
          %v759 = vld [vmem:[%s1 + $0x4b0] sm:$0xf]
          %v760 = vld [vmem:[%s1 + $0x4b4] sm:$0xf]
          %v761 = vld [vmem:[%s1 + $0x4b8] sm:$0xf]
          %v762 = vld [vmem:[%s1 + $0x4bc] sm:$0xf]
          %v763 = vld [vmem:[%s1 + $0x4c0] sm:$0xf]
          %v764 = vld [vmem:[%s1 + $0x4c4] sm:$0xf]
          %v765 = vld [vmem:[%s1 + $0x4c8] sm:$0xf]
          %v766 = vld [vmem:[%s1 + $0x4cc] sm:$0xf]
          %v767 = vld [vmem:[%s1 + $0x4d0] sm:$0xf]
          %v768 = vld [vmem:[%s1 + $0x4d4] sm:$0xf]
          %v769 = vld [vmem:[%s1 + $0x4d8] sm:$0xf]
          %v770 = vld [vmem:[%s1 + $0x4dc] sm:$0xf]
          %v771 = vld [vmem:[%s1 + $0x4e0] sm:$0xf]
          %v772 = vld [vmem:[%s1 + $0x4e4] sm:$0xf]
          %v773 = vld [vmem:[%s1 + $0x4e8] sm:$0xf]
          %v774 = vld [vmem:[%s1 + $0x4ec] sm:$0xf]
          %v775 = vld [vmem:[%s1 + $0x4f0] sm:$0xf]
          %v776 = vld [vmem:[%s1 + $0x4f4] sm:$0xf]
          %v777 = vld [vmem:[%s1 + $0x4f8] sm:$0xf]
          %v778 = vld [vmem:[%s1 + $0x4fc] sm:$0xf]
          %v779 = vld [vmem:[%s1 + $0x500] sm:$0xf]
          %v780 = vld [vmem:[%s1 + $0x504] sm:$0xf]
          %v781 = vld [vmem:[%s1 + $0x508] sm:$0xf]
          %v782 = vld [vmem:[%s1 + $0x50c] sm:$0xf]
          %v783 = vld [vmem:[%s1 + $0x510] sm:$0xf]
          %v784 = vld [vmem:[%s1 + $0x514] sm:$0xf]
          %v785 = vld [vmem:[%s1 + $0x518] sm:$0xf]
          %v786 = vld [vmem:[%s1 + $0x51c] sm:$0xf]
          %v787 = vld [vmem:[%s1 + $0x520] sm:$0xf]
          %v788 = vld [vmem:[%s1 + $0x524] sm:$0xf]
          %v789 = vld [vmem:[%s1 + $0x528] sm:$0xf]
          %v790 = vld [vmem:[%s1 + $0x52c] sm:$0xf]
          %v791 = vld [vmem:[%s1 + $0x530] sm:$0xf]
          %v792 = vld [vmem:[%s1 + $0x534] sm:$0xf]
          %v793 = vld [vmem:[%s1 + $0x538] sm:$0xf]
          %v794 = vld [vmem:[%s1 + $0x53c] sm:$0xf]
          %v795 = vld [vmem:[%s1 + $0x540] sm:$0xf]
          %v796 = vld [vmem:[%s1 + $0x544] sm:$0xf]
          %v797 = vld [vmem:[%s1 + $0x548] sm:$0xf]
          %v798 = vld [vmem:[%s1 + $0x54c] sm:$0xf]
          %v799 = vld [vmem:[%s1 + $0x550] sm:$0xf]
          %v800 = vld [vmem:[%s1 + $0x554] sm:$0xf]
          %v801 = vld [vmem:[%s1 + $0x558] sm:$0xf]
          %v802 = vld [vmem:[%s1 + $0x55c] sm:$0xf]
          %v803 = vld [vmem:[%s1 + $0x560] sm:$0xf]
          %v804 = vld [vmem:[%s1 + $0x564] sm:$0xf]
          %v805 = vld [vmem:[%s1 + $0x568] sm:$0xf]
          %v806 = vld [vmem:[%s1 + $0x56c] sm:$0xf]
          %v807 = vld [vmem:[%s1 + $0x570] sm:$0xf]
          %v808 = vld [vmem:[%s1 + $0x574] sm:$0xf]
          %v809 = vld [vmem:[%s1 + $0x578] sm:$0xf]
          %v810 = vld [vmem:[%s1 + $0x57c] sm:$0xf]
          %v811 = vld [vmem:[%s1 + $0x580] sm:$0xf]
          %v812 = vld [vmem:[%s1 + $0x584] sm:$0xf]
          %v813 = vld [vmem:[%s1 + $0x588] sm:$0xf]
          %v814 = vld [vmem:[%s1 + $0x58c] sm:$0xf]
          %v815 = vld [vmem:[%s1 + $0x590] sm:$0xf]
          %v816 = vld [vmem:[%s1 + $0x594] sm:$0xf]
          %v817 = vld [vmem:[%s1 + $0x598] sm:$0xf]
          %v818 = vld [vmem:[%s1 + $0x59c] sm:$0xf]
          %v819 = vld [vmem:[%s1 + $0x5a0] sm:$0xf]
          %v820 = vld [vmem:[%s1 + $0x5a4] sm:$0xf]
          %v821 = vld [vmem:[%s1 + $0x5a8] sm:$0xf]
          %v822 = vld [vmem:[%s1 + $0x5ac] sm:$0xf]
          %v823 = vld [vmem:[%s1 + $0x5b0] sm:$0xf]
          %v824 = vld [vmem:[%s1 + $0x5b4] sm:$0xf]
          %v825 = vld [vmem:[%s1 + $0x5b8] sm:$0xf]
          %v826 = vld [vmem:[%s1 + $0x5bc] sm:$0xf]
          %v827 = vld [vmem:[%s1 + $0x5c0] sm:$0xf]
          %v828 = vld [vmem:[%s1 + $0x5c4] sm:$0xf]
          %v829 = vld [vmem:[%s1 + $0x5c8] sm:$0xf]
          %v830 = vld [vmem:[%s1 + $0x5cc] sm:$0xf]
          %v831 = vld [vmem:[%s1 + $0x5d0] sm:$0xf]
          %v832 = vld [vmem:[%s1 + $0x5d4] sm:$0xf]
          %v833 = vld [vmem:[%s1 + $0x5d8] sm:$0xf]
          %v834 = vld [vmem:[%s1 + $0x5dc] sm:$0xf]
          %v835 = vld [vmem:[%s1 + $0x5e0] sm:$0xf]
          %v836 = vld [vmem:[%s1 + $0x5e4] sm:$0xf]
          %v837 = vld [vmem:[%s1 + $0x5e8] sm:$0xf]
          %v838 = vld [vmem:[%s1 + $0x5ec] sm:$0xf]
          %v839 = vld [vmem:[%s1 + $0x5f0] sm:$0xf]
          %v840 = vld [vmem:[%s1 + $0x5f4] sm:$0xf]
          %v841 = vld [vmem:[%s1 + $0x5f8] sm:$0xf]
          %v842 = vld [vmem:[%s1 + $0x5fc] sm:$0xf]
          %v843 = vld [vmem:[%s1 + $0x600] sm:$0xf]
          %v844 = vld [vmem:[%s1 + $0x604] sm:$0xf]
          %v845 = vld [vmem:[%s1 + $0x608] sm:$0xf]
          %v846 = vld [vmem:[%s1 + $0x60c] sm:$0xf]
          %v847 = vld [vmem:[%s1 + $0x610] sm:$0xf]
          %v848 = vld [vmem:[%s1 + $0x614] sm:$0xf]
          %v849 = vld [vmem:[%s1 + $0x618] sm:$0xf]
          %v850 = vld [vmem:[%s1 + $0x61c] sm:$0xf]
          %v851 = vld [vmem:[%s1 + $0x620] sm:$0xf]
          %v852 = vld [vmem:[%s1 + $0x624] sm:$0xf]
          %v853 = vld [vmem:[%s1 + $0x628] sm:$0xf]
          %v854 = vld [vmem:[%s1 + $0x62c] sm:$0xf]
          %v855 = vld [vmem:[%s1 + $0x630] sm:$0xf]
          %v856 = vld [vmem:[%s1 + $0x634] sm:$0xf]
          %v857 = vld [vmem:[%s1 + $0x638] sm:$0xf]
          %v858 = vld [vmem:[%s1 + $0x63c] sm:$0xf]
          %v859 = vld [vmem:[%s1 + $0x640] sm:$0xf]
          %v860 = vld [vmem:[%s1 + $0x644] sm:$0xf]
          %v861 = vld [vmem:[%s1 + $0x648] sm:$0xf]
          %v862 = vld [vmem:[%s1 + $0x64c] sm:$0xf]
          %v863 = vld [vmem:[%s1 + $0x650] sm:$0xf]
          %v864 = vld [vmem:[%s1 + $0x654] sm:$0xf]
          %v865 = vld [vmem:[%s1 + $0x658] sm:$0xf]
          %v866 = vld [vmem:[%s1 + $0x65c] sm:$0xf]
          %v867 = vld [vmem:[%s1 + $0x660] sm:$0xf]
          %v868 = vld [vmem:[%s1 + $0x664] sm:$0xf]
          %v869 = vld [vmem:[%s1 + $0x668] sm:$0xf]
          %v870 = vld [vmem:[%s1 + $0x66c] sm:$0xf]
          %v871 = vld [vmem:[%s1 + $0x670] sm:$0xf]
          %v872 = vld [vmem:[%s1 + $0x674] sm:$0xf]
          %v873 = vld [vmem:[%s1 + $0x678] sm:$0xf]
          %v874 = vld [vmem:[%s1 + $0x67c] sm:$0xf]
          %v875 = vld [vmem:[%s1 + $0x680] sm:$0xf]
          %v876 = vld [vmem:[%s1 + $0x684] sm:$0xf]
          %v877 = vld [vmem:[%s1 + $0x688] sm:$0xf]
          %v878 = vld [vmem:[%s1 + $0x68c] sm:$0xf]
          %v879 = vld [vmem:[%s1 + $0x690] sm:$0xf]
          %v880 = vld [vmem:[%s1 + $0x694] sm:$0xf]
          %v881 = vld [vmem:[%s1 + $0x698] sm:$0xf]
          %v882 = vld [vmem:[%s1 + $0x69c] sm:$0xf]
          %v883 = vld [vmem:[%s1 + $0x6a0] sm:$0xf]
          %v884 = vld [vmem:[%s1 + $0x6a4] sm:$0xf]
          %v885 = vld [vmem:[%s1 + $0x6a8] sm:$0xf]
          %v886 = vld [vmem:[%s1 + $0x6ac] sm:$0xf]
          %v887 = vld [vmem:[%s1 + $0x6b0] sm:$0xf]
          %v888 = vld [vmem:[%s1 + $0x6b4] sm:$0xf]
          %v889 = vld [vmem:[%s1 + $0x6b8] sm:$0xf]
          %v890 = vld [vmem:[%s1 + $0x6bc] sm:$0xf]
          %v891 = vld [vmem:[%s1 + $0x6c0] sm:$0xf]
          %v892 = vld [vmem:[%s1 + $0x6c4] sm:$0xf]
          %v893 = vld [vmem:[%s1 + $0x6c8] sm:$0xf]
          %v894 = vld [vmem:[%s1 + $0x6cc] sm:$0xf]
          %v895 = vld [vmem:[%s1 + $0x6d0] sm:$0xf]
          %v896 = vld [vmem:[%s1 + $0x6d4] sm:$0xf]
          %v897 = vld [vmem:[%s1 + $0x6d8] sm:$0xf]
          %v898 = vld [vmem:[%s1 + $0x6dc] sm:$0xf]
          %v899 = vld [vmem:[%s1 + $0x6e0] sm:$0xf]
          %v900 = vld [vmem:[%s1 + $0x6e4] sm:$0xf]
          %v901 = vld [vmem:[%s1 + $0x6e8] sm:$0xf]
          %v902 = vld [vmem:[%s1 + $0x6ec] sm:$0xf]
          %v903 = vld [vmem:[%s1 + $0x6f0] sm:$0xf]
          %v904 = vld [vmem:[%s1 + $0x6f4] sm:$0xf]
          %v905 = vld [vmem:[%s1 + $0x6f8] sm:$0xf]
          %v906 = vld [vmem:[%s1 + $0x6fc] sm:$0xf]
          %v907 = vld [vmem:[%s1 + $0x700] sm:$0xf]
          %v908 = vld [vmem:[%s1 + $0x704] sm:$0xf]
          %v909 = vld [vmem:[%s1 + $0x708] sm:$0xf]
          %v910 = vld [vmem:[%s1 + $0x70c] sm:$0xf]
          %v911 = vld [vmem:[%s1 + $0x710] sm:$0xf]
          %v912 = vld [vmem:[%s1 + $0x714] sm:$0xf]
          %v913 = vld [vmem:[%s1 + $0x718] sm:$0xf]
          %v914 = vld [vmem:[%s1 + $0x71c] sm:$0xf]
          %v915 = vld [vmem:[%s1 + $0x720] sm:$0xf]
          %v916 = vld [vmem:[%s1 + $0x724] sm:$0xf]
          %v917 = vld [vmem:[%s1 + $0x728] sm:$0xf]
          %v918 = vld [vmem:[%s1 + $0x72c] sm:$0xf]
          %v919 = vld [vmem:[%s1 + $0x730] sm:$0xf]
          %v920 = vld [vmem:[%s1 + $0x734] sm:$0xf]
          %v921 = vld [vmem:[%s1 + $0x738] sm:$0xf]
          %v922 = vld [vmem:[%s1 + $0x73c] sm:$0xf]
          %v923 = vld [vmem:[%s1 + $0x740] sm:$0xf]
          %v924 = vld [vmem:[%s1 + $0x744] sm:$0xf]
          %v925 = vld [vmem:[%s1 + $0x748] sm:$0xf]
          %v926 = vld [vmem:[%s1 + $0x74c] sm:$0xf]
          %v927 = vld [vmem:[%s1 + $0x750] sm:$0xf]
          %v928 = vld [vmem:[%s1 + $0x754] sm:$0xf]
          %v929 = vld [vmem:[%s1 + $0x758] sm:$0xf]
          %v930 = vld [vmem:[%s1 + $0x75c] sm:$0xf]
          %v931 = vld [vmem:[%s1 + $0x760] sm:$0xf]
          %v932 = vld [vmem:[%s1 + $0x764] sm:$0xf]
          %v933 = vld [vmem:[%s1 + $0x768] sm:$0xf]
          %v934 = vld [vmem:[%s1 + $0x76c] sm:$0xf]
          %v935 = vld [vmem:[%s1 + $0x770] sm:$0xf]
          %v936 = vld [vmem:[%s1 + $0x774] sm:$0xf]
          %v937 = vld [vmem:[%s1 + $0x778] sm:$0xf]
          %v938 = vld [vmem:[%s1 + $0x77c] sm:$0xf]
          %v939 = vld [vmem:[%s1 + $0x780] sm:$0xf]
          %v940 = vld [vmem:[%s1 + $0x784] sm:$0xf]
          %v941 = vld [vmem:[%s1 + $0x788] sm:$0xf]
          %v942 = vld [vmem:[%s1 + $0x78c] sm:$0xf]
          %v943 = vld [vmem:[%s1 + $0x790] sm:$0xf]
          %v944 = vld [vmem:[%s1 + $0x794] sm:$0xf]
          %v945 = vld [vmem:[%s1 + $0x798] sm:$0xf]
          %v946 = vld [vmem:[%s1 + $0x79c] sm:$0xf]
          %v947 = vld [vmem:[%s1 + $0x7a0] sm:$0xf]
          %v948 = vld [vmem:[%s1 + $0x7a4] sm:$0xf]
          %v949 = vld [vmem:[%s1 + $0x7a8] sm:$0xf]
          %v950 = vld [vmem:[%s1 + $0x7ac] sm:$0xf]
          %v951 = vld [vmem:[%s1 + $0x7b0] sm:$0xf]
          %v952 = vld [vmem:[%s1 + $0x7b4] sm:$0xf]
          %v953 = vld [vmem:[%s1 + $0x7b8] sm:$0xf]
          %v954 = vld [vmem:[%s1 + $0x7bc] sm:$0xf]
          %v955 = vld [vmem:[%s1 + $0x7c0] sm:$0xf]
          %v956 = vld [vmem:[%s1 + $0x7c4] sm:$0xf]
          %v957 = vld [vmem:[%s1 + $0x7c8] sm:$0xf]
          %v958 = vld [vmem:[%s1 + $0x7cc] sm:$0xf]
          %v959 = vld [vmem:[%s1 + $0x7d0] sm:$0xf]
          %v960 = vld [vmem:[%s1 + $0x7d4] sm:$0xf]
          %v961 = vld [vmem:[%s1 + $0x7d8] sm:$0xf]
          %v962 = vld [vmem:[%s1 + $0x7dc] sm:$0xf]
          %v963 = vld [vmem:[%s1 + $0x7e0] sm:$0xf]
          %v964 = vld [vmem:[%s1 + $0x7e4] sm:$0xf]
          %v965 = vld [vmem:[%s1 + $0x7e8] sm:$0xf]
          %v966 = vld [vmem:[%s1 + $0x7ec] sm:$0xf]
          %v967 = vld [vmem:[%s1 + $0x7f0] sm:$0xf]
          %v968 = vld [vmem:[%s1 + $0x7f4] sm:$0xf]
          %v969 = vld [vmem:[%s1 + $0x7f8] sm:$0xf]
          %v970 = vld [vmem:[%s1 + $0x7fc] sm:$0xf]
          %v971 = vld [vmem:[%s1 + $0x800] sm:$0xf]
          %v972 = vld [vmem:[%s1 + $0x804] sm:$0xf]
          %v973 = vld [vmem:[%s1 + $0x808] sm:$0xf]
          %v974 = vld [vmem:[%s1 + $0x80c] sm:$0xf]
          %v975 = vld [vmem:[%s1 + $0x810] sm:$0xf]
          %v976 = vld [vmem:[%s1 + $0x814] sm:$0xf]
          %v977 = vld [vmem:[%s1 + $0x818] sm:$0xf]
          %v978 = vld [vmem:[%s1 + $0x81c] sm:$0xf]
          %v979 = vld [vmem:[%s1 + $0x820] sm:$0xf]
          %v980 = vld [vmem:[%s1 + $0x824] sm:$0xf]
          %v981 = vld [vmem:[%s1 + $0x828] sm:$0xf]
          %v982 = vld [vmem:[%s1 + $0x82c] sm:$0xf]
          %v983 = vld [vmem:[%s1 + $0x830] sm:$0xf]
          %v984 = vld [vmem:[%s1 + $0x834] sm:$0xf]
          %v985 = vld [vmem:[%s1 + $0x838] sm:$0xf]
          %v986 = vld [vmem:[%s1 + $0x83c] sm:$0xf]
          %v987 = vld [vmem:[%s1 + $0x840] sm:$0xf]
          %v988 = vld [vmem:[%s1 + $0x844] sm:$0xf]
          %v989 = vld [vmem:[%s1 + $0x848] sm:$0xf]
          %v990 = vld [vmem:[%s1 + $0x84c] sm:$0xf]
          %v991 = vld [vmem:[%s1 + $0x850] sm:$0xf]
          %v992 = vld [vmem:[%s1 + $0x854] sm:$0xf]
          %v993 = vld [vmem:[%s1 + $0x858] sm:$0xf]
          %v994 = vld [vmem:[%s1 + $0x85c] sm:$0xf]
          %v995 = vld [vmem:[%s1 + $0x860] sm:$0xf]
          %v996 = vld [vmem:[%s1 + $0x864] sm:$0xf]
          %v997 = vld [vmem:[%s1 + $0x868] sm:$0xf]
          %v998 = vld [vmem:[%s1 + $0x86c] sm:$0xf]
          %v999 = vld [vmem:[%s1 + $0x870] sm:$0xf]
          %v1000 = vld [vmem:[%s1 + $0x874] sm:$0xf]
          %v1001 = vld [vmem:[%s1 + $0x878] sm:$0xf]
          %v1002 = vld [vmem:[%s1 + $0x87c] sm:$0xf]
          %v1003 = vld [vmem:[%s1 + $0x880] sm:$0xf]
          %v1004 = vld [vmem:[%s1 + $0x884] sm:$0xf]
          %v1005 = vld [vmem:[%s1 + $0x888] sm:$0xf]
          %v1006 = vld [vmem:[%s1 + $0x88c] sm:$0xf]
          %v1007 = vld [vmem:[%s1 + $0x890] sm:$0xf]
          %v1008 = vld [vmem:[%s1 + $0x894] sm:$0xf]
          %v1009 = vld [vmem:[%s1 + $0x898] sm:$0xf]
          %v1010 = vld [vmem:[%s1 + $0x89c] sm:$0xf]
          %v1011 = vld [vmem:[%s1 + $0x8a0] sm:$0xf]
          %v1012 = vld [vmem:[%s1 + $0x8a4] sm:$0xf]
          %v1013 = vld [vmem:[%s1 + $0x8a8] sm:$0xf]
          %v1014 = vld [vmem:[%s1 + $0x8ac] sm:$0xf]
          %v1015 = vld [vmem:[%s1 + $0x8b0] sm:$0xf]
          %v1016 = vld [vmem:[%s1 + $0x8b4] sm:$0xf]
          %v1017 = vld [vmem:[%s1 + $0x8b8] sm:$0xf]
          %v1018 = vld [vmem:[%s1 + $0x8bc] sm:$0xf]
          %v1019 = vld [vmem:[%s1 + $0x8c0] sm:$0xf]
          %v1020 = vld [vmem:[%s1 + $0x8c4] sm:$0xf]
          %v1021 = vld [vmem:[%s1 + $0x8c8] sm:$0xf]
          %v1022 = vld [vmem:[%s1 + $0x8cc] sm:$0xf]
          %v1023 = vld [vmem:[%s1 + $0x8d0] sm:$0xf]
          %v1024 = vld [vmem:[%s1 + $0x8d4] sm:$0xf]
          %v1025 = vld [vmem:[%s1 + $0x8d8] sm:$0xf]
          %v1026 = vld [vmem:[%s1 + $0x8dc] sm:$0xf]
          %v1027 = vld [vmem:[%s1 + $0x8e0] sm:$0xf]
          %v1028 = vld [vmem:[%s1 + $0x8e4] sm:$0xf]
          %v1029 = vld [vmem:[%s1 + $0x8e8] sm:$0xf]
          %v1030 = vld [vmem:[%s1 + $0x8ec] sm:$0xf]
          %v1031 = vld [vmem:[%s1 + $0x8f0] sm:$0xf]
          %v1032 = vld [vmem:[%s1 + $0x8f4] sm:$0xf]
          %v1033 = vld [vmem:[%s1 + $0x8f8] sm:$0xf]
          %v1034 = vld [vmem:[%s1 + $0x8fc] sm:$0xf]
          %v1035 = vld [vmem:[%s1 + $0x900] sm:$0xf]
          %v1036 = vld [vmem:[%s1 + $0x904] sm:$0xf]
          %v1037 = vld [vmem:[%s1 + $0x908] sm:$0xf]
          %v1038 = vld [vmem:[%s1 + $0x90c] sm:$0xf]
          %v1039 = vld [vmem:[%s1 + $0x910] sm:$0xf]
          %v1040 = vld [vmem:[%s1 + $0x914] sm:$0xf]
          %v1041 = vld [vmem:[%s1 + $0x918] sm:$0xf]
          %v1042 = vld [vmem:[%s1 + $0x91c] sm:$0xf]
          %v1043 = vld [vmem:[%s1 + $0x920] sm:$0xf]
          %v1044 = vld [vmem:[%s1 + $0x924] sm:$0xf]
          %v1045 = vld [vmem:[%s1 + $0x928] sm:$0xf]
          %v1046 = vld [vmem:[%s1 + $0x92c] sm:$0xf]
          %v1047 = vld [vmem:[%s1 + $0x930] sm:$0xf]
          %v1048 = vld [vmem:[%s1 + $0x934] sm:$0xf]
          %v1049 = vld [vmem:[%s1 + $0x938] sm:$0xf]
          %v1050 = vld [vmem:[%s1 + $0x93c] sm:$0xf]
          %v1051 = vld [vmem:[%s1 + $0x940] sm:$0xf]
          %v1052 = vld [vmem:[%s1 + $0x944] sm:$0xf]
          %v1053 = vld [vmem:[%s1 + $0x948] sm:$0xf]
          %v1054 = vld [vmem:[%s1 + $0x94c] sm:$0xf]
          %v1055 = vld [vmem:[%s1 + $0x950] sm:$0xf]
          %v1056 = vld [vmem:[%s1 + $0x954] sm:$0xf]
          %v1057 = vld [vmem:[%s1 + $0x958] sm:$0xf]
          %v1058 = vld [vmem:[%s1 + $0x95c] sm:$0xf]
          %v1059 = vld [vmem:[%s1 + $0x960] sm:$0xf]
          %v1060 = vld [vmem:[%s1 + $0x964] sm:$0xf]
          %v1061 = vld [vmem:[%s1 + $0x968] sm:$0xf]
          %v1062 = vld [vmem:[%s1 + $0x96c] sm:$0xf]
          %v1063 = vld [vmem:[%s1 + $0x970] sm:$0xf]
          %v1064 = vld [vmem:[%s1 + $0x974] sm:$0xf]
          %v1065 = vld [vmem:[%s1 + $0x978] sm:$0xf]
          %v1066 = vld [vmem:[%s1 + $0x97c] sm:$0xf]
          %v1067 = vld [vmem:[%s1 + $0x980] sm:$0xf]
          %v1068 = vld [vmem:[%s1 + $0x984] sm:$0xf]
          %v1069 = vld [vmem:[%s1 + $0x988] sm:$0xf]
          %v1070 = vld [vmem:[%s1 + $0x98c] sm:$0xf]
          %v1071 = vld [vmem:[%s1 + $0x990] sm:$0xf]
          %v1072 = vld [vmem:[%s1 + $0x994] sm:$0xf]
          %v1073 = vld [vmem:[%s1 + $0x998] sm:$0xf]
          %v1074 = vld [vmem:[%s1 + $0x99c] sm:$0xf]
          %v1075 = vld [vmem:[%s1 + $0x9a0] sm:$0xf]
          %v1076 = vld [vmem:[%s1 + $0x9a4] sm:$0xf]
          %v1077 = vld [vmem:[%s1 + $0x9a8] sm:$0xf]
          %v1078 = vld [vmem:[%s1 + $0x9ac] sm:$0xf]
          %v1079 = vld [vmem:[%s1 + $0x9b0] sm:$0xf]
          %v1080 = vld [vmem:[%s1 + $0x9b4] sm:$0xf]
          %v1081 = vld [vmem:[%s1 + $0x9b8] sm:$0xf]
          %v1082 = vld [vmem:[%s1 + $0x9bc] sm:$0xf]
          %v1083 = vld [vmem:[%s1 + $0x9c0] sm:$0xf]
          %v1084 = vld [vmem:[%s1 + $0x9c4] sm:$0xf]
          %v1085 = vld [vmem:[%s1 + $0x9c8] sm:$0xf]
          %v1086 = vld [vmem:[%s1 + $0x9cc] sm:$0xf]
          %v1087 = vld [vmem:[%s1 + $0x9d0] sm:$0xf]
          %v1088 = vld [vmem:[%s1 + $0x9d4] sm:$0xf]
          %v1089 = vld [vmem:[%s1 + $0x9d8] sm:$0xf]
          %v1090 = vld [vmem:[%s1 + $0x9dc] sm:$0xf]
          %v1091 = vld [vmem:[%s1 + $0x9e0] sm:$0xf]
          %v1092 = vld [vmem:[%s1 + $0x9e4] sm:$0xf]
          %v1093 = vld [vmem:[%s1 + $0x9e8] sm:$0xf]
          %v1094 = vld [vmem:[%s1 + $0x9ec] sm:$0xf]
          %v1095 = vld [vmem:[%s1 + $0x9f0] sm:$0xf]
          %v1096 = vld [vmem:[%s1 + $0x9f4] sm:$0xf]
          %v1097 = vld [vmem:[%s1 + $0x9f8] sm:$0xf]
          %v1098 = vld [vmem:[%s1 + $0x9fc] sm:$0xf]
          %v1099 = vld [vmem:[%s1 + $0xa00] sm:$0xf]
          %v1100 = vld [vmem:[%s1 + $0xa04] sm:$0xf]
          %v1101 = vld [vmem:[%s1 + $0xa08] sm:$0xf]
          %v1102 = vld [vmem:[%s1 + $0xa0c] sm:$0xf]
          %v1103 = vld [vmem:[%s1 + $0xa10] sm:$0xf]
          %v1104 = vld [vmem:[%s1 + $0xa14] sm:$0xf]
          %v1105 = vld [vmem:[%s1 + $0xa18] sm:$0xf]
          %v1106 = vld [vmem:[%s1 + $0xa1c] sm:$0xf]
          %v1107 = vld [vmem:[%s1 + $0xa20] sm:$0xf]
          %v1108 = vld [vmem:[%s1 + $0xa24] sm:$0xf]
          %v1109 = vld [vmem:[%s1 + $0xa28] sm:$0xf]
          %v1110 = vld [vmem:[%s1 + $0xa2c] sm:$0xf]
          %v1111 = vld [vmem:[%s1 + $0xa30] sm:$0xf]
          %v1112 = vld [vmem:[%s1 + $0xa34] sm:$0xf]
          %v1113 = vld [vmem:[%s1 + $0xa38] sm:$0xf]
          %v1114 = vld [vmem:[%s1 + $0xa3c] sm:$0xf]
          %v1115 = vld [vmem:[%s1 + $0xa40] sm:$0xf]
          %v1116 = vld [vmem:[%s1 + $0xa44] sm:$0xf]
          %v1117 = vld [vmem:[%s1 + $0xa48] sm:$0xf]
          %v1118 = vld [vmem:[%s1 + $0xa4c] sm:$0xf]
          %v1119 = vld [vmem:[%s1 + $0xa50] sm:$0xf]
          %v1120 = vld [vmem:[%s1 + $0xa54] sm:$0xf]
          %v1121 = vld [vmem:[%s1 + $0xa58] sm:$0xf]
          %v1122 = vld [vmem:[%s1 + $0xa5c] sm:$0xf]
          %v1123 = vld [vmem:[%s1 + $0xa60] sm:$0xf]
          %v1124 = vld [vmem:[%s1 + $0xa64] sm:$0xf]
          %v1125 = vld [vmem:[%s1 + $0xa68] sm:$0xf]
          %v1126 = vld [vmem:[%s1 + $0xa6c] sm:$0xf]
          %v1127 = vld [vmem:[%s1 + $0xa70] sm:$0xf]
          %v1128 = vld [vmem:[%s1 + $0xa74] sm:$0xf]
          %v1129 = vld [vmem:[%s1 + $0xa78] sm:$0xf]
          %v1130 = vld [vmem:[%s1 + $0xa7c] sm:$0xf]
          %v1131 = vld [vmem:[%s1 + $0xa80] sm:$0xf]
          %v1132 = vld [vmem:[%s1 + $0xa84] sm:$0xf]
          %v1133 = vld [vmem:[%s1 + $0xa88] sm:$0xf]
          %v1134 = vld [vmem:[%s1 + $0xa8c] sm:$0xf]
          %v1135 = vld [vmem:[%s1 + $0xa90] sm:$0xf]
          %v1136 = vld [vmem:[%s1 + $0xa94] sm:$0xf]
          %v1137 = vld [vmem:[%s1 + $0xa98] sm:$0xf]
          %v1138 = vld [vmem:[%s1 + $0xa9c] sm:$0xf]
          %v1139 = vld [vmem:[%s1 + $0xaa0] sm:$0xf]
          %v1140 = vld [vmem:[%s1 + $0xaa4] sm:$0xf]
          %v1141 = vld [vmem:[%s1 + $0xaa8] sm:$0xf]
          %v1142 = vld [vmem:[%s1 + $0xaac] sm:$0xf]
          %v1143 = vld [vmem:[%s1 + $0xab0] sm:$0xf]
          %v1144 = vld [vmem:[%s1 + $0xab4] sm:$0xf]
          %v1145 = vld [vmem:[%s1 + $0xab8] sm:$0xf]
          %v1146 = vld [vmem:[%s1 + $0xabc] sm:$0xf]
          %v1147 = vld [vmem:[%s1 + $0xac0] sm:$0xf]
          %v1148 = vld [vmem:[%s1 + $0xac4] sm:$0xf]
          %v1149 = vld [vmem:[%s1 + $0xac8] sm:$0xf]
          %v1150 = vld [vmem:[%s1 + $0xacc] sm:$0xf]
          %v1151 = vld [vmem:[%s1 + $0xad0] sm:$0xf]
          %v1152 = vld [vmem:[%s1 + $0xad4] sm:$0xf]
          %v1153 = vld [vmem:[%s1 + $0xad8] sm:$0xf]
          %v1154 = vld [vmem:[%s1 + $0xadc] sm:$0xf]
          %v1155 = vld [vmem:[%s1 + $0xae0] sm:$0xf]
          %v1156 = vld [vmem:[%s1 + $0xae4] sm:$0xf]
          %v1157 = vld [vmem:[%s1 + $0xae8] sm:$0xf]
          %v1158 = vld [vmem:[%s1 + $0xaec] sm:$0xf]
          %v1159 = vld [vmem:[%s1 + $0xaf0] sm:$0xf]
          %v1160 = vld [vmem:[%s1 + $0xaf4] sm:$0xf]
          %v1161 = vld [vmem:[%s1 + $0xaf8] sm:$0xf]
          %v1162 = vld [vmem:[%s1 + $0xafc] sm:$0xf]
          %v1163 = vld [vmem:[%s1 + $0xb00] sm:$0xf]
          %v1164 = vld [vmem:[%s1 + $0xb04] sm:$0xf]
          %v1165 = vld [vmem:[%s1 + $0xb08] sm:$0xf]
          %v1166 = vld [vmem:[%s1 + $0xb0c] sm:$0xf]
          %v1167 = vld [vmem:[%s1 + $0xb10] sm:$0xf]
          %v1168 = vld [vmem:[%s1 + $0xb14] sm:$0xf]
          %v1169 = vld [vmem:[%s1 + $0xb18] sm:$0xf]
          %v1170 = vld [vmem:[%s1 + $0xb1c] sm:$0xf]
          %v1171 = vld [vmem:[%s1 + $0xb20] sm:$0xf]
          %v1172 = vld [vmem:[%s1 + $0xb24] sm:$0xf]
          %v1173 = vld [vmem:[%s1 + $0xb28] sm:$0xf]
          %v1174 = vld [vmem:[%s1 + $0xb2c] sm:$0xf]
          %v1175 = vld [vmem:[%s1 + $0xb30] sm:$0xf]
          %v1176 = vld [vmem:[%s1 + $0xb34] sm:$0xf]
          %v1177 = vld [vmem:[%s1 + $0xb38] sm:$0xf]
          %v1178 = vld [vmem:[%s1 + $0xb3c] sm:$0xf]
          %v1179 = vld [vmem:[%s1 + $0xb40] sm:$0xf]
          %v1180 = vld [vmem:[%s1 + $0xb44] sm:$0xf]
          %v1181 = vld [vmem:[%s1 + $0xb48] sm:$0xf]
          %v1182 = vld [vmem:[%s1 + $0xb4c] sm:$0xf]
          %v1183 = vld [vmem:[%s1 + $0xb50] sm:$0xf]
          %v1184 = vld [vmem:[%s1 + $0xb54] sm:$0xf]
          %v1185 = vld [vmem:[%s1 + $0xb58] sm:$0xf]
          %v1186 = vld [vmem:[%s1 + $0xb5c] sm:$0xf]
          %v1187 = vld [vmem:[%s1 + $0xb60] sm:$0xf]
          %v1188 = vld [vmem:[%s1 + $0xb64] sm:$0xf]
          %v1189 = vld [vmem:[%s1 + $0xb68] sm:$0xf]
          %v1190 = vld [vmem:[%s1 + $0xb6c] sm:$0xf]
          %v1191 = vld [vmem:[%s1 + $0xb70] sm:$0xf]
          %v1192 = vld [vmem:[%s1 + $0xb74] sm:$0xf]
          %v1193 = vld [vmem:[%s1 + $0xb78] sm:$0xf]
          %v1194 = vld [vmem:[%s1 + $0xb7c] sm:$0xf]
          %v1195 = vld [vmem:[%s1 + $0xb80] sm:$0xf]
          %v1196 = vld [vmem:[%s1 + $0xb84] sm:$0xf]
          %v1197 = vld [vmem:[%s1 + $0xb88] sm:$0xf]
          %v1198 = vld [vmem:[%s1 + $0xb8c] sm:$0xf]
          %v1199 = vld [vmem:[%s1 + $0xb90] sm:$0xf]
          %v1200 = vld [vmem:[%s1 + $0xb94] sm:$0xf]
          %v1201 = vld [vmem:[%s1 + $0xb98] sm:$0xf]
          %v1202 = vld [vmem:[%s1 + $0xb9c] sm:$0xf]
          %v1203 = vld [vmem:[%s1 + $0xba0] sm:$0xf]
          %v1204 = vld [vmem:[%s1 + $0xba4] sm:$0xf]
          %v1205 = vld [vmem:[%s1 + $0xba8] sm:$0xf]
          %v1206 = vld [vmem:[%s1 + $0xbac] sm:$0xf]
          %v1207 = vld [vmem:[%s1 + $0xbb0] sm:$0xf]
          %v1208 = vld [vmem:[%s1 + $0xbb4] sm:$0xf]
          %v1209 = vld [vmem:[%s1 + $0xbb8] sm:$0xf]
          %v1210 = vld [vmem:[%s1 + $0xbbc] sm:$0xf]
          %v1211 = vld [vmem:[%s2] sm:$0x1]
          %v1213 = vperm.slane %v1211, 0
          %v1263 = vunpack.c.l.b16 %v411
          %v1264 = vunpack.c.h.b16 %v411
          %v1265 = vunpack.c.l.b16 %v412
          %v1266 = vunpack.c.h.b16 %v412
          %v1267 = vunpack.c.l.b16 %v413
          %v1268 = vunpack.c.h.b16 %v413
          %v1269 = vunpack.c.l.b16 %v414
          %v1270 = vunpack.c.h.b16 %v414
          %v1271 = vunpack.c.l.b16 %v415
          %v1272 = vunpack.c.h.b16 %v415
          %v1273 = vunpack.c.l.b16 %v416
          %v1274 = vunpack.c.h.b16 %v416
          %v1275 = vunpack.c.l.b16 %v417
          %v1276 = vunpack.c.h.b16 %v417
          %v1277 = vunpack.c.l.b16 %v418
          %v1278 = vunpack.c.h.b16 %v418
          %v1279 = vunpack.c.l.b16 %v419
          %v1280 = vunpack.c.h.b16 %v419
          %v1281 = vunpack.c.l.b16 %v420
          %v1282 = vunpack.c.h.b16 %v420
          %v1283 = vunpack.c.l.b16 %v421
          %v1284 = vunpack.c.h.b16 %v421
          %v1285 = vunpack.c.l.b16 %v422
          %v1286 = vunpack.c.h.b16 %v422
          %v1287 = vunpack.c.l.b16 %v423
          %v1288 = vunpack.c.h.b16 %v423
          %v1289 = vunpack.c.l.b16 %v424
          %v1290 = vunpack.c.h.b16 %v424
          %v1291 = vunpack.c.l.b16 %v425
          %v1292 = vunpack.c.h.b16 %v425
          %v1293 = vunpack.c.l.b16 %v426
          %v1294 = vunpack.c.h.b16 %v426
          %v1295 = vunpack.c.l.b16 %v427
          %v1296 = vunpack.c.h.b16 %v427
          %v1297 = vunpack.c.l.b16 %v428
          %v1298 = vunpack.c.h.b16 %v428
          %v1299 = vunpack.c.l.b16 %v429
          %v1300 = vunpack.c.h.b16 %v429
          %v1301 = vunpack.c.l.b16 %v430
          %v1302 = vunpack.c.h.b16 %v430
          %v1303 = vunpack.c.l.b16 %v431
          %v1304 = vunpack.c.h.b16 %v431
          %v1305 = vunpack.c.l.b16 %v432
          %v1306 = vunpack.c.h.b16 %v432
          %v1307 = vunpack.c.l.b16 %v433
          %v1308 = vunpack.c.h.b16 %v433
          %v1309 = vunpack.c.l.b16 %v434
          %v1310 = vunpack.c.l.b16 %v435
          %v1311 = vunpack.c.h.b16 %v435
          %v1312 = vunpack.c.l.b16 %v436
          %v1313 = vunpack.c.h.b16 %v436
          %v1314 = vunpack.c.l.b16 %v437
          %v1315 = vunpack.c.h.b16 %v437
          %v1316 = vunpack.c.l.b16 %v438
          %v1317 = vunpack.c.h.b16 %v438
          %v1318 = vunpack.c.l.b16 %v439
          %v1319 = vunpack.c.h.b16 %v439
          %v1320 = vunpack.c.l.b16 %v440
          %v1321 = vunpack.c.h.b16 %v440
          %v1322 = vunpack.c.l.b16 %v441
          %v1323 = vunpack.c.h.b16 %v441
          %v1324 = vunpack.c.l.b16 %v442
          %v1325 = vunpack.c.h.b16 %v442
          %v1326 = vunpack.c.l.b16 %v443
          %v1327 = vunpack.c.h.b16 %v443
          %v1328 = vunpack.c.l.b16 %v444
          %v1329 = vunpack.c.h.b16 %v444
          %v1330 = vunpack.c.l.b16 %v445
          %v1331 = vunpack.c.h.b16 %v445
          %v1332 = vunpack.c.l.b16 %v446
          %v1333 = vunpack.c.h.b16 %v446
          %v1334 = vunpack.c.l.b16 %v447
          %v1335 = vunpack.c.h.b16 %v447
          %v1336 = vunpack.c.l.b16 %v448
          %v1337 = vunpack.c.h.b16 %v448
          %v1338 = vunpack.c.l.b16 %v449
          %v1339 = vunpack.c.h.b16 %v449
          %v1340 = vunpack.c.l.b16 %v450
          %v1341 = vunpack.c.h.b16 %v450
          %v1342 = vunpack.c.l.b16 %v451
          %v1343 = vunpack.c.h.b16 %v451
          %v1344 = vunpack.c.l.b16 %v452
          %v1345 = vunpack.c.h.b16 %v452
          %v1346 = vunpack.c.l.b16 %v453
          %v1347 = vunpack.c.h.b16 %v453
          %v1348 = vunpack.c.l.b16 %v454
          %v1349 = vunpack.c.h.b16 %v454
          %v1350 = vunpack.c.l.b16 %v455
          %v1351 = vunpack.c.h.b16 %v455
          %v1352 = vunpack.c.l.b16 %v456
          %v1353 = vunpack.c.h.b16 %v456
          %v1354 = vunpack.c.l.b16 %v457
          %v1355 = vunpack.c.h.b16 %v457
          %v1356 = vunpack.c.l.b16 %v458
          %v1357 = vpack.c.b16 %v1310, %v1263
          %v1358 = vpack.c.b16 %v1311, %v1264
          %v1359 = vpack.c.b16 %v1312, %v1265
          %v1360 = vpack.c.b16 %v1313, %v1266
          %v1361 = vpack.c.b16 %v1314, %v1267
          %v1362 = vpack.c.b16 %v1315, %v1268
          %v1363 = vpack.c.b16 %v1316, %v1269
          %v1364 = vpack.c.b16 %v1317, %v1270
          %v1365 = vpack.c.b16 %v1318, %v1271
          %v1366 = vpack.c.b16 %v1319, %v1272
          %v1367 = vpack.c.b16 %v1320, %v1273
          %v1368 = vpack.c.b16 %v1321, %v1274
          %v1369 = vpack.c.b16 %v1322, %v1275
          %v1370 = vpack.c.b16 %v1323, %v1276
          %v1371 = vpack.c.b16 %v1324, %v1277
          %v1372 = vpack.c.b16 %v1325, %v1278
          %v1373 = vpack.c.b16 %v1326, %v1279
          %v1374 = vpack.c.b16 %v1327, %v1280
          %v1375 = vpack.c.b16 %v1328, %v1281
          %v1376 = vpack.c.b16 %v1329, %v1282
          %v1377 = vpack.c.b16 %v1330, %v1283
          %v1378 = vpack.c.b16 %v1331, %v1284
          %v1379 = vpack.c.b16 %v1332, %v1285
          %v1380 = vpack.c.b16 %v1333, %v1286
          %v1381 = vpack.c.b16 %v1334, %v1287
          %v1382 = vpack.c.b16 %v1335, %v1288
          %v1383 = vpack.c.b16 %v1336, %v1289
          %v1384 = vpack.c.b16 %v1337, %v1290
          %v1385 = vpack.c.b16 %v1338, %v1291
          %v1386 = vpack.c.b16 %v1339, %v1292
          %v1387 = vpack.c.b16 %v1340, %v1293
          %v1388 = vpack.c.b16 %v1341, %v1294
          %v1389 = vpack.c.b16 %v1342, %v1295
          %v1390 = vpack.c.b16 %v1343, %v1296
          %v1391 = vpack.c.b16 %v1344, %v1297
          %v1392 = vpack.c.b16 %v1345, %v1298
          %v1393 = vpack.c.b16 %v1346, %v1299
          %v1394 = vpack.c.b16 %v1347, %v1300
          %v1395 = vpack.c.b16 %v1348, %v1301
          %v1396 = vpack.c.b16 %v1349, %v1302
          %v1397 = vpack.c.b16 %v1350, %v1303
          %v1398 = vpack.c.b16 %v1351, %v1304
          %v1399 = vpack.c.b16 %v1352, %v1305
          %v1400 = vpack.c.b16 %v1353, %v1306
          %v1401 = vpack.c.b16 %v1354, %v1307
          %v1402 = vpack.c.b16 %v1355, %v1308
          %v1403 = vpack.c.b16 %v1356, %v1309
          %v2203 = vunpack.c.l.b16 %v459
          %v2204 = vunpack.c.l.b16 %v460
          %v2205 = vunpack.c.l.b16 %v461
          %v2206 = vunpack.c.l.b16 %v462
          %v2207 = vunpack.c.l.b16 %v463
          %v2208 = vunpack.c.l.b16 %v464
          %v2209 = vunpack.c.l.b16 %v465
          %v2210 = vunpack.c.l.b16 %v466
          %v2211 = vunpack.c.l.b16 %v467
          %v2212 = vunpack.c.l.b16 %v468
          %v2213 = vunpack.c.l.b16 %v469
          %v2214 = vunpack.c.l.b16 %v470
          %v2215 = vunpack.c.l.b16 %v471
          %v2216 = vunpack.c.l.b16 %v472
          %v2217 = vunpack.c.l.b16 %v473
          %v2218 = vunpack.c.l.b16 %v474
          %v2219 = vunpack.c.l.b16 %v475
          %v2220 = vunpack.c.l.b16 %v476
          %v2221 = vunpack.c.l.b16 %v477
          %v2222 = vunpack.c.l.b16 %v478
          %v2223 = vunpack.c.l.b16 %v479
          %v2224 = vunpack.c.l.b16 %v480
          %v2225 = vunpack.c.l.b16 %v481
          %v2226 = vunpack.c.l.b16 %v482
          %v2227 = vunpack.c.l.b16 %v483
          %v2228 = vunpack.c.l.b16 %v484
          %v2229 = vunpack.c.l.b16 %v485
          %v2230 = vunpack.c.l.b16 %v486
          %v2231 = vunpack.c.l.b16 %v487
          %v2232 = vunpack.c.l.b16 %v488
          %v2233 = vunpack.c.l.b16 %v489
          %v2234 = vunpack.c.l.b16 %v490
          %v2235 = vunpack.c.l.b16 %v491
          %v2236 = vunpack.c.l.b16 %v492
          %v2237 = vunpack.c.l.b16 %v493
          %v2238 = vunpack.c.l.b16 %v494
          %v2239 = vunpack.c.l.b16 %v495
          %v2240 = vunpack.c.l.b16 %v496
          %v2241 = vunpack.c.l.b16 %v497
          %v2242 = vunpack.c.l.b16 %v498
          %v2243 = vunpack.c.l.b16 %v499
          %v2244 = vunpack.c.l.b16 %v500
          %v2245 = vunpack.c.l.b16 %v501
          %v2246 = vunpack.c.l.b16 %v502
          %v2247 = vunpack.c.l.b16 %v503
          %v2248 = vunpack.c.l.b16 %v504
          %v2249 = vunpack.c.l.b16 %v505
          %v2250 = vunpack.c.l.b16 %v506
          %v2251 = vunpack.c.l.b16 %v507
          %v2252 = vunpack.c.l.b16 %v508
          %v2253 = vunpack.c.l.b16 %v509
          %v2254 = vunpack.c.l.b16 %v510
          %v2255 = vunpack.c.l.b16 %v511
          %v2256 = vunpack.c.l.b16 %v512
          %v2257 = vunpack.c.l.b16 %v513
          %v2258 = vunpack.c.l.b16 %v514
          %v2259 = vunpack.c.l.b16 %v515
          %v2260 = vunpack.c.l.b16 %v516
          %v2261 = vunpack.c.l.b16 %v517
          %v2262 = vunpack.c.l.b16 %v518
          %v2263 = vunpack.c.l.b16 %v519
          %v2264 = vunpack.c.l.b16 %v520
          %v2265 = vunpack.c.l.b16 %v521
          %v2266 = vunpack.c.l.b16 %v522
          %v2267 = vunpack.c.l.b16 %v523
          %v2268 = vunpack.c.l.b16 %v524
          %v2269 = vunpack.c.l.b16 %v525
          %v2270 = vunpack.c.l.b16 %v526
          %v2271 = vunpack.c.l.b16 %v527
          %v2272 = vunpack.c.l.b16 %v528
          %v2273 = vunpack.c.l.b16 %v529
          %v2274 = vunpack.c.l.b16 %v530
          %v2275 = vunpack.c.l.b16 %v531
          %v2276 = vunpack.c.l.b16 %v532
          %v2277 = vunpack.c.l.b16 %v533
          %v2278 = vunpack.c.l.b16 %v534
          %v2279 = vunpack.c.l.b16 %v535
          %v2280 = vunpack.c.l.b16 %v536
          %v2281 = vunpack.c.l.b16 %v537
          %v2282 = vunpack.c.l.b16 %v538
          %v2283 = vunpack.c.l.b16 %v539
          %v2284 = vunpack.c.l.b16 %v540
          %v2285 = vunpack.c.l.b16 %v541
          %v2286 = vunpack.c.l.b16 %v542
          %v2287 = vunpack.c.l.b16 %v543
          %v2288 = vunpack.c.l.b16 %v544
          %v2289 = vunpack.c.l.b16 %v545
          %v2290 = vunpack.c.l.b16 %v546
          %v2291 = vunpack.c.l.b16 %v547
          %v2292 = vunpack.c.l.b16 %v548
          %v2293 = vunpack.c.l.b16 %v549
          %v2294 = vunpack.c.l.b16 %v550
          %v2295 = vunpack.c.l.b16 %v551
          %v2296 = vunpack.c.l.b16 %v552
          %v2297 = vunpack.c.l.b16 %v553
          %v2298 = vunpack.c.l.b16 %v554
          %v2299 = vunpack.c.l.b16 %v555
          %v2300 = vunpack.c.l.b16 %v556
          %v2301 = vunpack.c.l.b16 %v557
          %v2302 = vunpack.c.l.b16 %v558
          %v2303 = vunpack.c.l.b16 %v559
          %v2304 = vunpack.c.l.b16 %v560
          %v2305 = vunpack.c.l.b16 %v561
          %v2306 = vunpack.c.l.b16 %v562
          %v2307 = vunpack.c.l.b16 %v563
          %v2308 = vunpack.c.l.b16 %v564
          %v2309 = vunpack.c.l.b16 %v565
          %v2310 = vunpack.c.l.b16 %v566
          %v2311 = vunpack.c.l.b16 %v567
          %v2312 = vunpack.c.l.b16 %v568
          %v2313 = vunpack.c.l.b16 %v569
          %v2314 = vunpack.c.l.b16 %v570
          %v2315 = vunpack.c.l.b16 %v571
          %v2316 = vunpack.c.l.b16 %v572
          %v2317 = vunpack.c.l.b16 %v573
          %v2318 = vunpack.c.l.b16 %v574
          %v2319 = vunpack.c.l.b16 %v575
          %v2320 = vunpack.c.l.b16 %v576
          %v2321 = vunpack.c.l.b16 %v577
          %v2322 = vunpack.c.l.b16 %v578
          %v2323 = vunpack.c.l.b16 %v579
          %v2324 = vunpack.c.l.b16 %v580
          %v2325 = vunpack.c.l.b16 %v581
          %v2326 = vunpack.c.l.b16 %v582
          %v2327 = vunpack.c.l.b16 %v583
          %v2328 = vunpack.c.l.b16 %v584
          %v2329 = vunpack.c.l.b16 %v585
          %v2330 = vunpack.c.l.b16 %v586
          %v2331 = vunpack.c.l.b16 %v587
          %v2332 = vunpack.c.l.b16 %v588
          %v2333 = vunpack.c.l.b16 %v589
          %v2334 = vunpack.c.l.b16 %v590
          %v2335 = vunpack.c.l.b16 %v591
          %v2336 = vunpack.c.l.b16 %v592
          %v2337 = vunpack.c.l.b16 %v593
          %v2338 = vunpack.c.l.b16 %v594
          %v2339 = vunpack.c.l.b16 %v595
          %v2340 = vunpack.c.l.b16 %v596
          %v2341 = vunpack.c.l.b16 %v597
          %v2342 = vunpack.c.l.b16 %v598
          %v2343 = vunpack.c.l.b16 %v599
          %v2344 = vunpack.c.l.b16 %v600
          %v2345 = vunpack.c.l.b16 %v601
          %v2346 = vunpack.c.l.b16 %v602
          %v2347 = vunpack.c.l.b16 %v603
          %v2348 = vunpack.c.l.b16 %v604
          %v2349 = vunpack.c.l.b16 %v605
          %v2350 = vunpack.c.l.b16 %v606
          %v2351 = vunpack.c.l.b16 %v607
          %v2352 = vunpack.c.l.b16 %v608
          %v2353 = vunpack.c.l.b16 %v609
          %v2354 = vunpack.c.l.b16 %v610
          %v2355 = vunpack.c.l.b16 %v611
          %v2356 = vunpack.c.l.b16 %v612
          %v2357 = vunpack.c.l.b16 %v613
          %v2358 = vunpack.c.l.b16 %v614
          %v2359 = vunpack.c.l.b16 %v615
          %v2360 = vunpack.c.l.b16 %v616
          %v2361 = vunpack.c.l.b16 %v617
          %v2362 = vunpack.c.l.b16 %v618
          %v2363 = vunpack.c.l.b16 %v619
          %v2364 = vunpack.c.l.b16 %v620
          %v2365 = vunpack.c.l.b16 %v621
          %v2366 = vunpack.c.l.b16 %v622
          %v2367 = vunpack.c.l.b16 %v623
          %v2368 = vunpack.c.l.b16 %v624
          %v2369 = vunpack.c.l.b16 %v625
          %v2370 = vunpack.c.l.b16 %v626
          %v2371 = vunpack.c.l.b16 %v627
          %v2372 = vunpack.c.l.b16 %v628
          %v2373 = vunpack.c.l.b16 %v629
          %v2374 = vunpack.c.l.b16 %v630
          %v2375 = vunpack.c.l.b16 %v631
          %v2376 = vunpack.c.l.b16 %v632
          %v2377 = vunpack.c.l.b16 %v633
          %v2378 = vunpack.c.l.b16 %v634
          %v2379 = vunpack.c.l.b16 %v635
          %v2380 = vunpack.c.l.b16 %v636
          %v2381 = vunpack.c.l.b16 %v637
          %v2382 = vunpack.c.l.b16 %v638
          %v2383 = vunpack.c.l.b16 %v639
          %v2384 = vunpack.c.l.b16 %v640
          %v2385 = vunpack.c.l.b16 %v641
          %v2386 = vunpack.c.l.b16 %v642
          %v2387 = vunpack.c.l.b16 %v643
          %v2388 = vunpack.c.l.b16 %v644
          %v2389 = vunpack.c.l.b16 %v645
          %v2390 = vunpack.c.l.b16 %v646
          %v2391 = vunpack.c.l.b16 %v647
          %v2392 = vunpack.c.l.b16 %v648
          %v2393 = vunpack.c.l.b16 %v649
          %v2394 = vunpack.c.l.b16 %v650
          %v2395 = vunpack.c.l.b16 %v651
          %v2396 = vunpack.c.l.b16 %v652
          %v2397 = vunpack.c.l.b16 %v653
          %v2398 = vunpack.c.l.b16 %v654
          %v2399 = vunpack.c.l.b16 %v655
          %v2400 = vunpack.c.l.b16 %v656
          %v2401 = vunpack.c.l.b16 %v657
          %v2402 = vunpack.c.l.b16 %v658
          %v2403 = vunpack.c.l.b16 %v659
          %v2404 = vunpack.c.l.b16 %v660
          %v2405 = vunpack.c.l.b16 %v661
          %v2406 = vunpack.c.l.b16 %v662
          %v2407 = vunpack.c.l.b16 %v663
          %v2408 = vunpack.c.l.b16 %v664
          %v2409 = vunpack.c.l.b16 %v665
          %v2410 = vunpack.c.l.b16 %v666
          %v2411 = vunpack.c.l.b16 %v667
          %v2412 = vunpack.c.l.b16 %v668
          %v2413 = vunpack.c.l.b16 %v669
          %v2414 = vunpack.c.l.b16 %v670
          %v2415 = vunpack.c.l.b16 %v671
          %v2416 = vunpack.c.l.b16 %v672
          %v2417 = vunpack.c.l.b16 %v673
          %v2418 = vunpack.c.l.b16 %v674
          %v2419 = vunpack.c.l.b16 %v675
          %v2420 = vunpack.c.l.b16 %v676
          %v2421 = vunpack.c.l.b16 %v677
          %v2422 = vunpack.c.l.b16 %v678
          %v2423 = vunpack.c.l.b16 %v679
          %v2424 = vunpack.c.l.b16 %v680
          %v2425 = vunpack.c.l.b16 %v681
          %v2426 = vunpack.c.l.b16 %v682
          %v2427 = vunpack.c.l.b16 %v683
          %v2428 = vunpack.c.l.b16 %v684
          %v2429 = vunpack.c.l.b16 %v685
          %v2430 = vunpack.c.l.b16 %v686
          %v2431 = vunpack.c.l.b16 %v687
          %v2432 = vunpack.c.l.b16 %v688
          %v2433 = vunpack.c.l.b16 %v689
          %v2434 = vunpack.c.l.b16 %v690
          %v2435 = vunpack.c.l.b16 %v691
          %v2436 = vunpack.c.l.b16 %v692
          %v2437 = vunpack.c.l.b16 %v693
          %v2438 = vunpack.c.l.b16 %v694
          %v2439 = vunpack.c.l.b16 %v695
          %v2440 = vunpack.c.l.b16 %v696
          %v2441 = vunpack.c.l.b16 %v697
          %v2442 = vunpack.c.l.b16 %v698
          %v2443 = vunpack.c.l.b16 %v699
          %v2444 = vunpack.c.l.b16 %v700
          %v2445 = vunpack.c.l.b16 %v701
          %v2446 = vunpack.c.l.b16 %v702
          %v2447 = vunpack.c.l.b16 %v703
          %v2448 = vunpack.c.l.b16 %v704
          %v2449 = vunpack.c.l.b16 %v705
          %v2450 = vunpack.c.l.b16 %v706
          %v2451 = vunpack.c.l.b16 %v707
          %v2452 = vunpack.c.l.b16 %v708
          %v2453 = vunpack.c.l.b16 %v709
          %v2454 = vunpack.c.l.b16 %v710
          %v2455 = vunpack.c.l.b16 %v711
          %v2456 = vunpack.c.l.b16 %v712
          %v2457 = vunpack.c.l.b16 %v713
          %v2458 = vunpack.c.l.b16 %v714
          %v2459 = vunpack.c.l.b16 %v715
          %v2460 = vunpack.c.l.b16 %v716
          %v2461 = vunpack.c.l.b16 %v717
          %v2462 = vunpack.c.l.b16 %v718
          %v2463 = vunpack.c.l.b16 %v719
          %v2464 = vunpack.c.l.b16 %v720
          %v2465 = vunpack.c.l.b16 %v721
          %v2466 = vunpack.c.l.b16 %v722
          %v2467 = vunpack.c.l.b16 %v723
          %v2468 = vunpack.c.l.b16 %v724
          %v2469 = vunpack.c.l.b16 %v725
          %v2470 = vunpack.c.l.b16 %v726
          %v2471 = vunpack.c.l.b16 %v727
          %v2472 = vunpack.c.l.b16 %v728
          %v2473 = vunpack.c.l.b16 %v729
          %v2474 = vunpack.c.l.b16 %v730
          %v2475 = vunpack.c.l.b16 %v731
          %v2476 = vunpack.c.l.b16 %v732
          %v2477 = vunpack.c.l.b16 %v733
          %v2478 = vunpack.c.l.b16 %v734
          %v2479 = vunpack.c.l.b16 %v735
          %v2480 = vunpack.c.l.b16 %v736
          %v2481 = vunpack.c.l.b16 %v737
          %v2482 = vunpack.c.l.b16 %v738
          %v2483 = vunpack.c.l.b16 %v739
          %v2484 = vunpack.c.l.b16 %v740
          %v2485 = vunpack.c.l.b16 %v741
          %v2486 = vunpack.c.l.b16 %v742
          %v2487 = vunpack.c.l.b16 %v743
          %v2488 = vunpack.c.l.b16 %v744
          %v2489 = vunpack.c.l.b16 %v745
          %v2490 = vunpack.c.l.b16 %v746
          %v2491 = vunpack.c.l.b16 %v747
          %v2492 = vunpack.c.l.b16 %v748
          %v2493 = vunpack.c.l.b16 %v749
          %v2494 = vunpack.c.l.b16 %v750
          %v2495 = vunpack.c.l.b16 %v751
          %v2496 = vunpack.c.l.b16 %v752
          %v2497 = vunpack.c.l.b16 %v753
          %v2498 = vunpack.c.l.b16 %v754
          %v2499 = vunpack.c.l.b16 %v755
          %v2500 = vunpack.c.l.b16 %v756
          %v2501 = vunpack.c.l.b16 %v757
          %v2502 = vunpack.c.l.b16 %v758
          %v2503 = vunpack.c.l.b16 %v759
          %v2504 = vunpack.c.l.b16 %v760
          %v2505 = vunpack.c.l.b16 %v761
          %v2506 = vunpack.c.l.b16 %v762
          %v2507 = vunpack.c.l.b16 %v763
          %v2508 = vunpack.c.l.b16 %v764
          %v2509 = vunpack.c.l.b16 %v765
          %v2510 = vunpack.c.l.b16 %v766
          %v2511 = vunpack.c.l.b16 %v767
          %v2512 = vunpack.c.l.b16 %v768
          %v2513 = vunpack.c.l.b16 %v769
          %v2514 = vunpack.c.l.b16 %v770
          %v2515 = vunpack.c.l.b16 %v771
          %v2516 = vunpack.c.l.b16 %v772
          %v2517 = vunpack.c.l.b16 %v773
          %v2518 = vunpack.c.l.b16 %v774
          %v2519 = vunpack.c.l.b16 %v775
          %v2520 = vunpack.c.l.b16 %v776
          %v2521 = vunpack.c.l.b16 %v777
          %v2522 = vunpack.c.l.b16 %v778
          %v2523 = vunpack.c.l.b16 %v779
          %v2524 = vunpack.c.l.b16 %v780
          %v2525 = vunpack.c.l.b16 %v781
          %v2526 = vunpack.c.l.b16 %v782
          %v2527 = vunpack.c.l.b16 %v783
          %v2528 = vunpack.c.l.b16 %v784
          %v2529 = vunpack.c.l.b16 %v785
          %v2530 = vunpack.c.l.b16 %v786
          %v2531 = vunpack.c.l.b16 %v787
          %v2532 = vunpack.c.l.b16 %v788
          %v2533 = vunpack.c.l.b16 %v789
          %v2534 = vunpack.c.l.b16 %v790
          %v2535 = vunpack.c.l.b16 %v791
          %v2536 = vunpack.c.l.b16 %v792
          %v2537 = vunpack.c.l.b16 %v793
          %v2538 = vunpack.c.l.b16 %v794
          %v2539 = vunpack.c.l.b16 %v795
          %v2540 = vunpack.c.l.b16 %v796
          %v2541 = vunpack.c.l.b16 %v797
          %v2542 = vunpack.c.l.b16 %v798
          %v2543 = vunpack.c.l.b16 %v799
          %v2544 = vunpack.c.l.b16 %v800
          %v2545 = vunpack.c.l.b16 %v801
          %v2546 = vunpack.c.l.b16 %v802
          %v2547 = vunpack.c.l.b16 %v803
          %v2548 = vunpack.c.l.b16 %v804
          %v2549 = vunpack.c.l.b16 %v805
          %v2550 = vunpack.c.l.b16 %v806
          %v2551 = vunpack.c.l.b16 %v807
          %v2552 = vunpack.c.l.b16 %v808
          %v2553 = vunpack.c.l.b16 %v809
          %v2554 = vunpack.c.l.b16 %v810
          %v2555 = vunpack.c.l.b16 %v811
          %v2556 = vunpack.c.l.b16 %v812
          %v2557 = vunpack.c.l.b16 %v813
          %v2558 = vunpack.c.l.b16 %v814
          %v2559 = vunpack.c.l.b16 %v815
          %v2560 = vunpack.c.l.b16 %v816
          %v2561 = vunpack.c.l.b16 %v817
          %v2562 = vunpack.c.l.b16 %v818
          %v2563 = vunpack.c.l.b16 %v819
          %v2564 = vunpack.c.l.b16 %v820
          %v2565 = vunpack.c.l.b16 %v821
          %v2566 = vunpack.c.l.b16 %v822
          %v2567 = vunpack.c.l.b16 %v823
          %v2568 = vunpack.c.l.b16 %v824
          %v2569 = vunpack.c.l.b16 %v825
          %v2570 = vunpack.c.l.b16 %v826
          %v2571 = vunpack.c.l.b16 %v827
          %v2572 = vunpack.c.l.b16 %v828
          %v2573 = vunpack.c.l.b16 %v829
          %v2574 = vunpack.c.l.b16 %v830
          %v2575 = vunpack.c.l.b16 %v831
          %v2576 = vunpack.c.l.b16 %v832
          %v2577 = vunpack.c.l.b16 %v833
          %v2578 = vunpack.c.l.b16 %v834
          %v2579 = vunpack.c.l.b16 %v835
          %v2580 = vunpack.c.l.b16 %v836
          %v2581 = vunpack.c.l.b16 %v837
          %v2582 = vunpack.c.l.b16 %v838
          %v2583 = vunpack.c.l.b16 %v839
          %v2584 = vunpack.c.l.b16 %v840
          %v2585 = vunpack.c.l.b16 %v841
          %v2586 = vunpack.c.l.b16 %v842
          %v2587 = vunpack.c.l.b16 %v843
          %v2588 = vunpack.c.l.b16 %v844
          %v2589 = vunpack.c.l.b16 %v845
          %v2590 = vunpack.c.l.b16 %v846
          %v2591 = vunpack.c.l.b16 %v847
          %v2592 = vunpack.c.l.b16 %v848
          %v2593 = vunpack.c.l.b16 %v849
          %v2594 = vunpack.c.l.b16 %v850
          %v2595 = vunpack.c.l.b16 %v851
          %v2596 = vunpack.c.l.b16 %v852
          %v2597 = vunpack.c.l.b16 %v853
          %v2598 = vunpack.c.l.b16 %v854
          %v2599 = vunpack.c.l.b16 %v855
          %v2600 = vunpack.c.l.b16 %v856
          %v2601 = vunpack.c.l.b16 %v857
          %v2602 = vunpack.c.l.b16 %v858
          %v2603 = vunpack.c.l.b16 %v859
          %v2604 = vunpack.c.l.b16 %v860
          %v2605 = vunpack.c.l.b16 %v861
          %v2606 = vunpack.c.l.b16 %v862
          %v2607 = vunpack.c.l.b16 %v863
          %v2608 = vunpack.c.l.b16 %v864
          %v2609 = vunpack.c.l.b16 %v865
          %v2610 = vunpack.c.l.b16 %v866
          %v2611 = vunpack.c.l.b16 %v867
          %v2612 = vunpack.c.l.b16 %v868
          %v2613 = vunpack.c.l.b16 %v869
          %v2614 = vunpack.c.l.b16 %v870
          %v2615 = vunpack.c.l.b16 %v871
          %v2616 = vunpack.c.l.b16 %v872
          %v2617 = vunpack.c.l.b16 %v873
          %v2618 = vunpack.c.l.b16 %v874
          %v2619 = vunpack.c.l.b16 %v875
          %v2620 = vunpack.c.l.b16 %v876
          %v2621 = vunpack.c.l.b16 %v877
          %v2622 = vunpack.c.l.b16 %v878
          %v2623 = vunpack.c.l.b16 %v879
          %v2624 = vunpack.c.l.b16 %v880
          %v2625 = vunpack.c.l.b16 %v881
          %v2626 = vunpack.c.l.b16 %v882
          %v2627 = vunpack.c.l.b16 %v883
          %v2628 = vunpack.c.l.b16 %v884
          %v2629 = vunpack.c.l.b16 %v885
          %v2630 = vunpack.c.l.b16 %v886
          %v2631 = vunpack.c.l.b16 %v887
          %v2632 = vunpack.c.l.b16 %v888
          %v2633 = vunpack.c.l.b16 %v889
          %v2634 = vunpack.c.l.b16 %v890
          %v2635 = vunpack.c.l.b16 %v891
          %v2636 = vunpack.c.l.b16 %v892
          %v2637 = vunpack.c.l.b16 %v893
          %v2638 = vunpack.c.l.b16 %v894
          %v2639 = vunpack.c.l.b16 %v895
          %v2640 = vunpack.c.l.b16 %v896
          %v2641 = vunpack.c.l.b16 %v897
          %v2642 = vunpack.c.l.b16 %v898
          %v2643 = vunpack.c.l.b16 %v899
          %v2644 = vunpack.c.l.b16 %v900
          %v2645 = vunpack.c.l.b16 %v901
          %v2646 = vunpack.c.l.b16 %v902
          %v2647 = vunpack.c.l.b16 %v903
          %v2648 = vunpack.c.l.b16 %v904
          %v2649 = vunpack.c.l.b16 %v905
          %v2650 = vunpack.c.l.b16 %v906
          %v2651 = vunpack.c.l.b16 %v907
          %v2652 = vunpack.c.l.b16 %v908
          %v2653 = vunpack.c.l.b16 %v909
          %v2654 = vunpack.c.l.b16 %v910
          %v2655 = vunpack.c.l.b16 %v911
          %v2656 = vunpack.c.l.b16 %v912
          %v2657 = vunpack.c.l.b16 %v913
          %v2658 = vunpack.c.l.b16 %v914
          %v2659 = vunpack.c.l.b16 %v915
          %v2660 = vunpack.c.l.b16 %v916
          %v2661 = vunpack.c.l.b16 %v917
          %v2662 = vunpack.c.l.b16 %v918
          %v2663 = vunpack.c.l.b16 %v919
          %v2664 = vunpack.c.l.b16 %v920
          %v2665 = vunpack.c.l.b16 %v921
          %v2666 = vunpack.c.l.b16 %v922
          %v2667 = vunpack.c.l.b16 %v923
          %v2668 = vunpack.c.l.b16 %v924
          %v2669 = vunpack.c.l.b16 %v925
          %v2670 = vunpack.c.l.b16 %v926
          %v2671 = vunpack.c.l.b16 %v927
          %v2672 = vunpack.c.l.b16 %v928
          %v2673 = vunpack.c.l.b16 %v929
          %v2674 = vunpack.c.l.b16 %v930
          %v2675 = vunpack.c.l.b16 %v931
          %v2676 = vunpack.c.l.b16 %v932
          %v2677 = vunpack.c.l.b16 %v933
          %v2678 = vunpack.c.l.b16 %v934
          %v2679 = vunpack.c.l.b16 %v935
          %v2680 = vunpack.c.l.b16 %v936
          %v2681 = vunpack.c.l.b16 %v937
          %v2682 = vunpack.c.l.b16 %v938
          %v2683 = vunpack.c.l.b16 %v939
          %v2684 = vunpack.c.l.b16 %v940
          %v2685 = vunpack.c.l.b16 %v941
          %v2686 = vunpack.c.l.b16 %v942
          %v2687 = vunpack.c.l.b16 %v943
          %v2688 = vunpack.c.l.b16 %v944
          %v2689 = vunpack.c.l.b16 %v945
          %v2690 = vunpack.c.l.b16 %v946
          %v2691 = vunpack.c.l.b16 %v947
          %v2692 = vunpack.c.l.b16 %v948
          %v2693 = vunpack.c.l.b16 %v949
          %v2694 = vunpack.c.l.b16 %v950
          %v2695 = vunpack.c.l.b16 %v951
          %v2696 = vunpack.c.l.b16 %v952
          %v2697 = vunpack.c.l.b16 %v953
          %v2698 = vunpack.c.l.b16 %v954
          %v2699 = vunpack.c.l.b16 %v955
          %v2700 = vunpack.c.l.b16 %v956
          %v2701 = vunpack.c.l.b16 %v957
          %v2702 = vunpack.c.l.b16 %v958
          %v2703 = vunpack.c.l.b16 %v959
          %v2704 = vunpack.c.l.b16 %v960
          %v2705 = vunpack.c.l.b16 %v961
          %v2706 = vunpack.c.l.b16 %v962
          %v2707 = vunpack.c.l.b16 %v963
          %v2708 = vunpack.c.l.b16 %v964
          %v2709 = vunpack.c.l.b16 %v965
          %v2710 = vunpack.c.l.b16 %v966
          %v2711 = vunpack.c.l.b16 %v967
          %v2712 = vunpack.c.l.b16 %v968
          %v2713 = vunpack.c.l.b16 %v969
          %v2714 = vunpack.c.l.b16 %v970
          %v2715 = vunpack.c.l.b16 %v971
          %v2716 = vunpack.c.l.b16 %v972
          %v2717 = vunpack.c.l.b16 %v973
          %v2718 = vunpack.c.l.b16 %v974
          %v2719 = vunpack.c.l.b16 %v975
          %v2720 = vunpack.c.l.b16 %v976
          %v2721 = vunpack.c.l.b16 %v977
          %v2722 = vunpack.c.l.b16 %v978
          %v2723 = vunpack.c.l.b16 %v979
          %v2724 = vunpack.c.l.b16 %v980
          %v2725 = vunpack.c.l.b16 %v981
          %v2726 = vunpack.c.l.b16 %v982
          %v2727 = vunpack.c.l.b16 %v983
          %v2728 = vunpack.c.l.b16 %v984
          %v2729 = vunpack.c.l.b16 %v985
          %v2730 = vunpack.c.l.b16 %v986
          %v2731 = vunpack.c.l.b16 %v987
          %v2732 = vunpack.c.l.b16 %v988
          %v2733 = vunpack.c.l.b16 %v989
          %v2734 = vunpack.c.l.b16 %v990
          %v2735 = vunpack.c.l.b16 %v991
          %v2736 = vunpack.c.l.b16 %v992
          %v2737 = vunpack.c.l.b16 %v993
          %v2738 = vunpack.c.l.b16 %v994
          %v2739 = vunpack.c.l.b16 %v995
          %v2740 = vunpack.c.l.b16 %v996
          %v2741 = vunpack.c.l.b16 %v997
          %v2742 = vunpack.c.l.b16 %v998
          %v2743 = vunpack.c.l.b16 %v999
          %v2744 = vunpack.c.l.b16 %v1000
          %v2745 = vunpack.c.l.b16 %v1001
          %v2746 = vunpack.c.l.b16 %v1002
          %v2747 = vunpack.c.l.b16 %v1003
          %v2748 = vunpack.c.l.b16 %v1004
          %v2749 = vunpack.c.l.b16 %v1005
          %v2750 = vunpack.c.l.b16 %v1006
          %v2751 = vunpack.c.l.b16 %v1007
          %v2752 = vunpack.c.l.b16 %v1008
          %v2753 = vunpack.c.l.b16 %v1009
          %v2754 = vunpack.c.l.b16 %v1010
          %v2755 = vunpack.c.l.b16 %v1011
          %v2756 = vunpack.c.l.b16 %v1012
          %v2757 = vunpack.c.l.b16 %v1013
          %v2758 = vunpack.c.l.b16 %v1014
          %v2759 = vunpack.c.l.b16 %v1015
          %v2760 = vunpack.c.l.b16 %v1016
          %v2761 = vunpack.c.l.b16 %v1017
          %v2762 = vunpack.c.l.b16 %v1018
          %v2763 = vunpack.c.l.b16 %v1019
          %v2764 = vunpack.c.l.b16 %v1020
          %v2765 = vunpack.c.l.b16 %v1021
          %v2766 = vunpack.c.l.b16 %v1022
          %v2767 = vunpack.c.l.b16 %v1023
          %v2768 = vunpack.c.l.b16 %v1024
          %v2769 = vunpack.c.l.b16 %v1025
          %v2770 = vunpack.c.l.b16 %v1026
          %v2771 = vunpack.c.l.b16 %v1027
          %v2772 = vunpack.c.l.b16 %v1028
          %v2773 = vunpack.c.l.b16 %v1029
          %v2774 = vunpack.c.l.b16 %v1030
          %v2775 = vunpack.c.l.b16 %v1031
          %v2776 = vunpack.c.l.b16 %v1032
          %v2777 = vunpack.c.l.b16 %v1033
          %v2778 = vunpack.c.l.b16 %v1034
          %v2779 = vunpack.c.l.b16 %v1035
          %v2780 = vunpack.c.l.b16 %v1036
          %v2781 = vunpack.c.l.b16 %v1037
          %v2782 = vunpack.c.l.b16 %v1038
          %v2783 = vunpack.c.l.b16 %v1039
          %v2784 = vunpack.c.l.b16 %v1040
          %v2785 = vunpack.c.l.b16 %v1041
          %v2786 = vunpack.c.l.b16 %v1042
          %v2787 = vunpack.c.l.b16 %v1043
          %v2788 = vunpack.c.l.b16 %v1044
          %v2789 = vunpack.c.l.b16 %v1045
          %v2790 = vunpack.c.l.b16 %v1046
          %v2791 = vunpack.c.l.b16 %v1047
          %v2792 = vunpack.c.l.b16 %v1048
          %v2793 = vunpack.c.l.b16 %v1049
          %v2794 = vunpack.c.l.b16 %v1050
          %v2795 = vunpack.c.l.b16 %v1051
          %v2796 = vunpack.c.l.b16 %v1052
          %v2797 = vunpack.c.l.b16 %v1053
          %v2798 = vunpack.c.l.b16 %v1054
          %v2799 = vunpack.c.l.b16 %v1055
          %v2800 = vunpack.c.l.b16 %v1056
          %v2801 = vunpack.c.l.b16 %v1057
          %v2802 = vunpack.c.l.b16 %v1058
          %v2803 = vunpack.c.l.b16 %v1059
          %v2804 = vunpack.c.l.b16 %v1060
          %v2805 = vunpack.c.l.b16 %v1061
          %v2806 = vunpack.c.l.b16 %v1062
          %v2807 = vunpack.c.l.b16 %v1063
          %v2808 = vunpack.c.l.b16 %v1064
          %v2809 = vunpack.c.l.b16 %v1065
          %v2810 = vunpack.c.l.b16 %v1066
          %v2811 = vunpack.c.l.b16 %v1067
          %v2812 = vunpack.c.l.b16 %v1068
          %v2813 = vunpack.c.l.b16 %v1069
          %v2814 = vunpack.c.l.b16 %v1070
          %v2815 = vunpack.c.l.b16 %v1071
          %v2816 = vunpack.c.l.b16 %v1072
          %v2817 = vunpack.c.l.b16 %v1073
          %v2818 = vunpack.c.l.b16 %v1074
          %v2819 = vunpack.c.l.b16 %v1075
          %v2820 = vunpack.c.l.b16 %v1076
          %v2821 = vunpack.c.l.b16 %v1077
          %v2822 = vunpack.c.l.b16 %v1078
          %v2823 = vunpack.c.l.b16 %v1079
          %v2824 = vunpack.c.l.b16 %v1080
          %v2825 = vunpack.c.l.b16 %v1081
          %v2826 = vunpack.c.l.b16 %v1082
          %v2827 = vunpack.c.l.b16 %v1083
          %v2828 = vunpack.c.l.b16 %v1084
          %v2829 = vunpack.c.l.b16 %v1085
          %v2830 = vunpack.c.l.b16 %v1086
          %v2831 = vunpack.c.l.b16 %v1087
          %v2832 = vunpack.c.l.b16 %v1088
          %v2833 = vunpack.c.l.b16 %v1089
          %v2834 = vunpack.c.l.b16 %v1090
          %v2835 = vunpack.c.l.b16 %v1091
          %v2836 = vunpack.c.l.b16 %v1092
          %v2837 = vunpack.c.l.b16 %v1093
          %v2838 = vunpack.c.l.b16 %v1094
          %v2839 = vunpack.c.l.b16 %v1095
          %v2840 = vunpack.c.l.b16 %v1096
          %v2841 = vunpack.c.l.b16 %v1097
          %v2842 = vunpack.c.l.b16 %v1098
          %v2843 = vunpack.c.l.b16 %v1099
          %v2844 = vunpack.c.l.b16 %v1100
          %v2845 = vunpack.c.l.b16 %v1101
          %v2846 = vunpack.c.l.b16 %v1102
          %v2847 = vunpack.c.l.b16 %v1103
          %v2848 = vunpack.c.l.b16 %v1104
          %v2849 = vunpack.c.l.b16 %v1105
          %v2850 = vunpack.c.l.b16 %v1106
          %v2851 = vunpack.c.l.b16 %v1107
          %v2852 = vunpack.c.l.b16 %v1108
          %v2853 = vunpack.c.l.b16 %v1109
          %v2854 = vunpack.c.l.b16 %v1110
          %v2855 = vunpack.c.l.b16 %v1111
          %v2856 = vunpack.c.l.b16 %v1112
          %v2857 = vunpack.c.l.b16 %v1113
          %v2858 = vunpack.c.l.b16 %v1114
          %v2859 = vunpack.c.l.b16 %v1115
          %v2860 = vunpack.c.l.b16 %v1116
          %v2861 = vunpack.c.l.b16 %v1117
          %v2862 = vunpack.c.l.b16 %v1118
          %v2863 = vunpack.c.l.b16 %v1119
          %v2864 = vunpack.c.l.b16 %v1120
          %v2865 = vunpack.c.l.b16 %v1121
          %v2866 = vunpack.c.l.b16 %v1122
          %v2867 = vunpack.c.l.b16 %v1123
          %v2868 = vunpack.c.l.b16 %v1124
          %v2869 = vunpack.c.l.b16 %v1125
          %v2870 = vunpack.c.l.b16 %v1126
          %v2871 = vunpack.c.l.b16 %v1127
          %v2872 = vunpack.c.l.b16 %v1128
          %v2873 = vunpack.c.l.b16 %v1129
          %v2874 = vunpack.c.l.b16 %v1130
          %v2875 = vunpack.c.l.b16 %v1131
          %v2876 = vunpack.c.l.b16 %v1132
          %v2877 = vunpack.c.l.b16 %v1133
          %v2878 = vunpack.c.l.b16 %v1134
          %v2879 = vunpack.c.l.b16 %v1135
          %v2880 = vunpack.c.l.b16 %v1136
          %v2881 = vunpack.c.l.b16 %v1137
          %v2882 = vunpack.c.l.b16 %v1138
          %v2883 = vunpack.c.l.b16 %v1139
          %v2884 = vunpack.c.l.b16 %v1140
          %v2885 = vunpack.c.l.b16 %v1141
          %v2886 = vunpack.c.l.b16 %v1142
          %v2887 = vunpack.c.l.b16 %v1143
          %v2888 = vunpack.c.l.b16 %v1144
          %v2889 = vunpack.c.l.b16 %v1145
          %v2890 = vunpack.c.l.b16 %v1146
          %v2891 = vunpack.c.l.b16 %v1147
          %v2892 = vunpack.c.l.b16 %v1148
          %v2893 = vunpack.c.l.b16 %v1149
          %v2894 = vunpack.c.l.b16 %v1150
          %v2895 = vunpack.c.l.b16 %v1151
          %v2896 = vunpack.c.l.b16 %v1152
          %v2897 = vunpack.c.l.b16 %v1153
          %v2898 = vunpack.c.l.b16 %v1154
          %v2899 = vunpack.c.l.b16 %v1155
          %v2900 = vunpack.c.l.b16 %v1156
          %v2901 = vunpack.c.l.b16 %v1157
          %v2902 = vunpack.c.l.b16 %v1158
          %v2903 = vunpack.c.l.b16 %v1159
          %v2904 = vunpack.c.l.b16 %v1160
          %v2905 = vunpack.c.l.b16 %v1161
          %v2906 = vunpack.c.l.b16 %v1162
          %v2907 = vunpack.c.l.b16 %v1163
          %v2908 = vunpack.c.l.b16 %v1164
          %v2909 = vunpack.c.l.b16 %v1165
          %v2910 = vunpack.c.l.b16 %v1166
          %v2911 = vunpack.c.l.b16 %v1167
          %v2912 = vunpack.c.l.b16 %v1168
          %v2913 = vunpack.c.l.b16 %v1169
          %v2914 = vunpack.c.l.b16 %v1170
          %v2915 = vunpack.c.l.b16 %v1171
          %v2916 = vunpack.c.l.b16 %v1172
          %v2917 = vunpack.c.l.b16 %v1173
          %v2918 = vunpack.c.l.b16 %v1174
          %v2919 = vunpack.c.l.b16 %v1175
          %v2920 = vunpack.c.l.b16 %v1176
          %v2921 = vunpack.c.l.b16 %v1177
          %v2922 = vunpack.c.l.b16 %v1178
          %v2923 = vunpack.c.l.b16 %v1179
          %v2924 = vunpack.c.l.b16 %v1180
          %v2925 = vunpack.c.l.b16 %v1181
          %v2926 = vunpack.c.l.b16 %v1182
          %v2927 = vunpack.c.l.b16 %v1183
          %v2928 = vunpack.c.l.b16 %v1184
          %v2929 = vunpack.c.l.b16 %v1185
          %v2930 = vunpack.c.l.b16 %v1186
          %v2931 = vunpack.c.l.b16 %v1187
          %v2932 = vunpack.c.l.b16 %v1188
          %v2933 = vunpack.c.l.b16 %v1189
          %v2934 = vunpack.c.l.b16 %v1190
          %v2935 = vunpack.c.l.b16 %v1191
          %v2936 = vunpack.c.l.b16 %v1192
          %v2937 = vunpack.c.l.b16 %v1193
          %v2938 = vunpack.c.l.b16 %v1194
          %v2939 = vunpack.c.l.b16 %v1195
          %v2940 = vunpack.c.l.b16 %v1196
          %v2941 = vunpack.c.l.b16 %v1197
          %v2942 = vunpack.c.l.b16 %v1198
          %v2943 = vunpack.c.l.b16 %v1199
          %v2944 = vunpack.c.l.b16 %v1200
          %v2945 = vunpack.c.l.b16 %v1201
          %v2946 = vunpack.c.l.b16 %v1202
          %v2947 = vunpack.c.l.b16 %v1203
          %v2948 = vunpack.c.l.b16 %v1204
          %v2949 = vunpack.c.l.b16 %v1205
          %v2950 = vunpack.c.l.b16 %v1206
          %v2951 = vunpack.c.l.b16 %v1207
          %v2952 = vunpack.c.l.b16 %v1208
          %v2953 = vunpack.c.l.b16 %v1209
          %v2954 = vunpack.c.l.b16 %v1210
          %v2955 = vpack.c.b16 %v2204, %v2203
          %v2956 = vpack.c.b16 %v2206, %v2205
          %v2957 = vpack.c.b16 %v2208, %v2207
          %v2958 = vpack.c.b16 %v2210, %v2209
          %v2959 = vpack.c.b16 %v2212, %v2211
          %v2960 = vpack.c.b16 %v2214, %v2213
          %v2961 = vpack.c.b16 %v2216, %v2215
          %v2962 = vpack.c.b16 %v2218, %v2217
          %v2963 = vpack.c.b16 %v2220, %v2219
          %v2964 = vpack.c.b16 %v2222, %v2221
          %v2965 = vpack.c.b16 %v2224, %v2223
          %v2966 = vpack.c.b16 %v2226, %v2225
          %v2967 = vpack.c.b16 %v2228, %v2227
          %v2968 = vpack.c.b16 %v2230, %v2229
          %v2969 = vpack.c.b16 %v2232, %v2231
          %v2970 = vpack.c.b16 %v2234, %v2233
          %v2971 = vpack.c.b16 %v2236, %v2235
          %v2972 = vpack.c.b16 %v2238, %v2237
          %v2973 = vpack.c.b16 %v2240, %v2239
          %v2974 = vpack.c.b16 %v2242, %v2241
          %v2975 = vpack.c.b16 %v2244, %v2243
          %v2976 = vpack.c.b16 %v2246, %v2245
          %v2977 = vpack.c.b16 %v2248, %v2247
          %v2978 = vpack.c.b16 %v2250, %v2249
          %v2979 = vpack.c.b16 %v2252, %v2251
          %v2980 = vpack.c.b16 %v2254, %v2253
          %v2981 = vpack.c.b16 %v2256, %v2255
          %v2982 = vpack.c.b16 %v2258, %v2257
          %v2983 = vpack.c.b16 %v2260, %v2259
          %v2984 = vpack.c.b16 %v2262, %v2261
          %v2985 = vpack.c.b16 %v2264, %v2263
          %v2986 = vpack.c.b16 %v2266, %v2265
          %v2987 = vpack.c.b16 %v2268, %v2267
          %v2988 = vpack.c.b16 %v2270, %v2269
          %v2989 = vpack.c.b16 %v2272, %v2271
          %v2990 = vpack.c.b16 %v2274, %v2273
          %v2991 = vpack.c.b16 %v2276, %v2275
          %v2992 = vpack.c.b16 %v2278, %v2277
          %v2993 = vpack.c.b16 %v2280, %v2279
          %v2994 = vpack.c.b16 %v2282, %v2281
          %v2995 = vpack.c.b16 %v2284, %v2283
          %v2996 = vpack.c.b16 %v2286, %v2285
          %v2997 = vpack.c.b16 %v2288, %v2287
          %v2998 = vpack.c.b16 %v2290, %v2289
          %v2999 = vpack.c.b16 %v2292, %v2291
          %v3000 = vpack.c.b16 %v2294, %v2293
          %v3001 = vpack.c.b16 %v2296, %v2295
          %v3002 = vpack.c.b16 %v2298, %v2297
          %v3003 = vpack.c.b16 %v2300, %v2299
          %v3004 = vpack.c.b16 %v2302, %v2301
          %v3005 = vpack.c.b16 %v2304, %v2303
          %v3006 = vpack.c.b16 %v2306, %v2305
          %v3007 = vpack.c.b16 %v2308, %v2307
          %v3008 = vpack.c.b16 %v2310, %v2309
          %v3009 = vpack.c.b16 %v2312, %v2311
          %v3010 = vpack.c.b16 %v2314, %v2313
          %v3011 = vpack.c.b16 %v2316, %v2315
          %v3012 = vpack.c.b16 %v2318, %v2317
          %v3013 = vpack.c.b16 %v2320, %v2319
          %v3014 = vpack.c.b16 %v2322, %v2321
          %v3015 = vpack.c.b16 %v2324, %v2323
          %v3016 = vpack.c.b16 %v2326, %v2325
          %v3017 = vpack.c.b16 %v2328, %v2327
          %v3018 = vpack.c.b16 %v2330, %v2329
          %v3019 = vpack.c.b16 %v2332, %v2331
          %v3020 = vpack.c.b16 %v2334, %v2333
          %v3021 = vpack.c.b16 %v2336, %v2335
          %v3022 = vpack.c.b16 %v2338, %v2337
          %v3023 = vpack.c.b16 %v2340, %v2339
          %v3024 = vpack.c.b16 %v2342, %v2341
          %v3025 = vpack.c.b16 %v2344, %v2343
          %v3026 = vpack.c.b16 %v2346, %v2345
          %v3027 = vpack.c.b16 %v2348, %v2347
          %v3028 = vpack.c.b16 %v2350, %v2349
          %v3029 = vpack.c.b16 %v2352, %v2351
          %v3030 = vpack.c.b16 %v2354, %v2353
          %v3031 = vpack.c.b16 %v2356, %v2355
          %v3032 = vpack.c.b16 %v2358, %v2357
          %v3033 = vpack.c.b16 %v2360, %v2359
          %v3034 = vpack.c.b16 %v2362, %v2361
          %v3035 = vpack.c.b16 %v2364, %v2363
          %v3036 = vpack.c.b16 %v2366, %v2365
          %v3037 = vpack.c.b16 %v2368, %v2367
          %v3038 = vpack.c.b16 %v2370, %v2369
          %v3039 = vpack.c.b16 %v2372, %v2371
          %v3040 = vpack.c.b16 %v2374, %v2373
          %v3041 = vpack.c.b16 %v2376, %v2375
          %v3042 = vpack.c.b16 %v2378, %v2377
          %v3043 = vpack.c.b16 %v2380, %v2379
          %v3044 = vpack.c.b16 %v2382, %v2381
          %v3045 = vpack.c.b16 %v2384, %v2383
          %v3046 = vpack.c.b16 %v2386, %v2385
          %v3047 = vpack.c.b16 %v2388, %v2387
          %v3048 = vpack.c.b16 %v2390, %v2389
          %v3049 = vpack.c.b16 %v2392, %v2391
          %v3050 = vpack.c.b16 %v2394, %v2393
          %v3051 = vpack.c.b16 %v2396, %v2395
          %v3052 = vpack.c.b16 %v2398, %v2397
          %v3053 = vpack.c.b16 %v2400, %v2399
          %v3054 = vpack.c.b16 %v2402, %v2401
          %v3055 = vpack.c.b16 %v2404, %v2403
          %v3056 = vpack.c.b16 %v2406, %v2405
          %v3057 = vpack.c.b16 %v2408, %v2407
          %v3058 = vpack.c.b16 %v2410, %v2409
          %v3059 = vpack.c.b16 %v2412, %v2411
          %v3060 = vpack.c.b16 %v2414, %v2413
          %v3061 = vpack.c.b16 %v2416, %v2415
          %v3062 = vpack.c.b16 %v2418, %v2417
          %v3063 = vpack.c.b16 %v2420, %v2419
          %v3064 = vpack.c.b16 %v2422, %v2421
          %v3065 = vpack.c.b16 %v2424, %v2423
          %v3066 = vpack.c.b16 %v2426, %v2425
          %v3067 = vpack.c.b16 %v2428, %v2427
          %v3068 = vpack.c.b16 %v2430, %v2429
          %v3069 = vpack.c.b16 %v2432, %v2431
          %v3070 = vpack.c.b16 %v2434, %v2433
          %v3071 = vpack.c.b16 %v2436, %v2435
          %v3072 = vpack.c.b16 %v2438, %v2437
          %v3073 = vpack.c.b16 %v2440, %v2439
          %v3074 = vpack.c.b16 %v2442, %v2441
          %v3075 = vpack.c.b16 %v2444, %v2443
          %v3076 = vpack.c.b16 %v2446, %v2445
          %v3077 = vpack.c.b16 %v2448, %v2447
          %v3078 = vpack.c.b16 %v2450, %v2449
          %v3079 = vpack.c.b16 %v2452, %v2451
          %v3080 = vpack.c.b16 %v2454, %v2453
          %v3081 = vpack.c.b16 %v2456, %v2455
          %v3082 = vpack.c.b16 %v2458, %v2457
          %v3083 = vpack.c.b16 %v2460, %v2459
          %v3084 = vpack.c.b16 %v2462, %v2461
          %v3085 = vpack.c.b16 %v2464, %v2463
          %v3086 = vpack.c.b16 %v2466, %v2465
          %v3087 = vpack.c.b16 %v2468, %v2467
          %v3088 = vpack.c.b16 %v2470, %v2469
          %v3089 = vpack.c.b16 %v2472, %v2471
          %v3090 = vpack.c.b16 %v2474, %v2473
          %v3091 = vpack.c.b16 %v2476, %v2475
          %v3092 = vpack.c.b16 %v2478, %v2477
          %v3093 = vpack.c.b16 %v2480, %v2479
          %v3094 = vpack.c.b16 %v2482, %v2481
          %v3095 = vpack.c.b16 %v2484, %v2483
          %v3096 = vpack.c.b16 %v2486, %v2485
          %v3097 = vpack.c.b16 %v2488, %v2487
          %v3098 = vpack.c.b16 %v2490, %v2489
          %v3099 = vpack.c.b16 %v2492, %v2491
          %v3100 = vpack.c.b16 %v2494, %v2493
          %v3101 = vpack.c.b16 %v2496, %v2495
          %v3102 = vpack.c.b16 %v2498, %v2497
          %v3103 = vpack.c.b16 %v2500, %v2499
          %v3104 = vpack.c.b16 %v2502, %v2501
          %v3105 = vpack.c.b16 %v2504, %v2503
          %v3106 = vpack.c.b16 %v2506, %v2505
          %v3107 = vpack.c.b16 %v2508, %v2507
          %v3108 = vpack.c.b16 %v2510, %v2509
          %v3109 = vpack.c.b16 %v2512, %v2511
          %v3110 = vpack.c.b16 %v2514, %v2513
          %v3111 = vpack.c.b16 %v2516, %v2515
          %v3112 = vpack.c.b16 %v2518, %v2517
          %v3113 = vpack.c.b16 %v2520, %v2519
          %v3114 = vpack.c.b16 %v2522, %v2521
          %v3115 = vpack.c.b16 %v2524, %v2523
          %v3116 = vpack.c.b16 %v2526, %v2525
          %v3117 = vpack.c.b16 %v2528, %v2527
          %v3118 = vpack.c.b16 %v2530, %v2529
          %v3119 = vpack.c.b16 %v2532, %v2531
          %v3120 = vpack.c.b16 %v2534, %v2533
          %v3121 = vpack.c.b16 %v2536, %v2535
          %v3122 = vpack.c.b16 %v2538, %v2537
          %v3123 = vpack.c.b16 %v2540, %v2539
          %v3124 = vpack.c.b16 %v2542, %v2541
          %v3125 = vpack.c.b16 %v2544, %v2543
          %v3126 = vpack.c.b16 %v2546, %v2545
          %v3127 = vpack.c.b16 %v2548, %v2547
          %v3128 = vpack.c.b16 %v2550, %v2549
          %v3129 = vpack.c.b16 %v2552, %v2551
          %v3130 = vpack.c.b16 %v2554, %v2553
          %v3131 = vpack.c.b16 %v2556, %v2555
          %v3132 = vpack.c.b16 %v2558, %v2557
          %v3133 = vpack.c.b16 %v2560, %v2559
          %v3134 = vpack.c.b16 %v2562, %v2561
          %v3135 = vpack.c.b16 %v2564, %v2563
          %v3136 = vpack.c.b16 %v2566, %v2565
          %v3137 = vpack.c.b16 %v2568, %v2567
          %v3138 = vpack.c.b16 %v2570, %v2569
          %v3139 = vpack.c.b16 %v2572, %v2571
          %v3140 = vpack.c.b16 %v2574, %v2573
          %v3141 = vpack.c.b16 %v2576, %v2575
          %v3142 = vpack.c.b16 %v2578, %v2577
          %v3143 = vpack.c.b16 %v2580, %v2579
          %v3144 = vpack.c.b16 %v2582, %v2581
          %v3145 = vpack.c.b16 %v2584, %v2583
          %v3146 = vpack.c.b16 %v2586, %v2585
          %v3147 = vpack.c.b16 %v2588, %v2587
          %v3148 = vpack.c.b16 %v2590, %v2589
          %v3149 = vpack.c.b16 %v2592, %v2591
          %v3150 = vpack.c.b16 %v2594, %v2593
          %v3151 = vpack.c.b16 %v2596, %v2595
          %v3152 = vpack.c.b16 %v2598, %v2597
          %v3153 = vpack.c.b16 %v2600, %v2599
          %v3154 = vpack.c.b16 %v2602, %v2601
          %v3155 = vpack.c.b16 %v2604, %v2603
          %v3156 = vpack.c.b16 %v2606, %v2605
          %v3157 = vpack.c.b16 %v2608, %v2607
          %v3158 = vpack.c.b16 %v2610, %v2609
          %v3159 = vpack.c.b16 %v2612, %v2611
          %v3160 = vpack.c.b16 %v2614, %v2613
          %v3161 = vpack.c.b16 %v2616, %v2615
          %v3162 = vpack.c.b16 %v2618, %v2617
          %v3163 = vpack.c.b16 %v2620, %v2619
          %v3164 = vpack.c.b16 %v2622, %v2621
          %v3165 = vpack.c.b16 %v2624, %v2623
          %v3166 = vpack.c.b16 %v2626, %v2625
          %v3167 = vpack.c.b16 %v2628, %v2627
          %v3168 = vpack.c.b16 %v2630, %v2629
          %v3169 = vpack.c.b16 %v2632, %v2631
          %v3170 = vpack.c.b16 %v2634, %v2633
          %v3171 = vpack.c.b16 %v2636, %v2635
          %v3172 = vpack.c.b16 %v2638, %v2637
          %v3173 = vpack.c.b16 %v2640, %v2639
          %v3174 = vpack.c.b16 %v2642, %v2641
          %v3175 = vpack.c.b16 %v2644, %v2643
          %v3176 = vpack.c.b16 %v2646, %v2645
          %v3177 = vpack.c.b16 %v2648, %v2647
          %v3178 = vpack.c.b16 %v2650, %v2649
          %v3179 = vpack.c.b16 %v2652, %v2651
          %v3180 = vpack.c.b16 %v2654, %v2653
          %v3181 = vpack.c.b16 %v2656, %v2655
          %v3182 = vpack.c.b16 %v2658, %v2657
          %v3183 = vpack.c.b16 %v2660, %v2659
          %v3184 = vpack.c.b16 %v2662, %v2661
          %v3185 = vpack.c.b16 %v2664, %v2663
          %v3186 = vpack.c.b16 %v2666, %v2665
          %v3187 = vpack.c.b16 %v2668, %v2667
          %v3188 = vpack.c.b16 %v2670, %v2669
          %v3189 = vpack.c.b16 %v2672, %v2671
          %v3190 = vpack.c.b16 %v2674, %v2673
          %v3191 = vpack.c.b16 %v2676, %v2675
          %v3192 = vpack.c.b16 %v2678, %v2677
          %v3193 = vpack.c.b16 %v2680, %v2679
          %v3194 = vpack.c.b16 %v2682, %v2681
          %v3195 = vpack.c.b16 %v2684, %v2683
          %v3196 = vpack.c.b16 %v2686, %v2685
          %v3197 = vpack.c.b16 %v2688, %v2687
          %v3198 = vpack.c.b16 %v2690, %v2689
          %v3199 = vpack.c.b16 %v2692, %v2691
          %v3200 = vpack.c.b16 %v2694, %v2693
          %v3201 = vpack.c.b16 %v2696, %v2695
          %v3202 = vpack.c.b16 %v2698, %v2697
          %v3203 = vpack.c.b16 %v2700, %v2699
          %v3204 = vpack.c.b16 %v2702, %v2701
          %v3205 = vpack.c.b16 %v2704, %v2703
          %v3206 = vpack.c.b16 %v2706, %v2705
          %v3207 = vpack.c.b16 %v2708, %v2707
          %v3208 = vpack.c.b16 %v2710, %v2709
          %v3209 = vpack.c.b16 %v2712, %v2711
          %v3210 = vpack.c.b16 %v2714, %v2713
          %v3211 = vpack.c.b16 %v2716, %v2715
          %v3212 = vpack.c.b16 %v2718, %v2717
          %v3213 = vpack.c.b16 %v2720, %v2719
          %v3214 = vpack.c.b16 %v2722, %v2721
          %v3215 = vpack.c.b16 %v2724, %v2723
          %v3216 = vpack.c.b16 %v2726, %v2725
          %v3217 = vpack.c.b16 %v2728, %v2727
          %v3218 = vpack.c.b16 %v2730, %v2729
          %v3219 = vpack.c.b16 %v2732, %v2731
          %v3220 = vpack.c.b16 %v2734, %v2733
          %v3221 = vpack.c.b16 %v2736, %v2735
          %v3222 = vpack.c.b16 %v2738, %v2737
          %v3223 = vpack.c.b16 %v2740, %v2739
          %v3224 = vpack.c.b16 %v2742, %v2741
          %v3225 = vpack.c.b16 %v2744, %v2743
          %v3226 = vpack.c.b16 %v2746, %v2745
          %v3227 = vpack.c.b16 %v2748, %v2747
          %v3228 = vpack.c.b16 %v2750, %v2749
          %v3229 = vpack.c.b16 %v2752, %v2751
          %v3230 = vpack.c.b16 %v2754, %v2753
          %v3231 = vpack.c.b16 %v2756, %v2755
          %v3232 = vpack.c.b16 %v2758, %v2757
          %v3233 = vpack.c.b16 %v2760, %v2759
          %v3234 = vpack.c.b16 %v2762, %v2761
          %v3235 = vpack.c.b16 %v2764, %v2763
          %v3236 = vpack.c.b16 %v2766, %v2765
          %v3237 = vpack.c.b16 %v2768, %v2767
          %v3238 = vpack.c.b16 %v2770, %v2769
          %v3239 = vpack.c.b16 %v2772, %v2771
          %v3240 = vpack.c.b16 %v2774, %v2773
          %v3241 = vpack.c.b16 %v2776, %v2775
          %v3242 = vpack.c.b16 %v2778, %v2777
          %v3243 = vpack.c.b16 %v2780, %v2779
          %v3244 = vpack.c.b16 %v2782, %v2781
          %v3245 = vpack.c.b16 %v2784, %v2783
          %v3246 = vpack.c.b16 %v2786, %v2785
          %v3247 = vpack.c.b16 %v2788, %v2787
          %v3248 = vpack.c.b16 %v2790, %v2789
          %v3249 = vpack.c.b16 %v2792, %v2791
          %v3250 = vpack.c.b16 %v2794, %v2793
          %v3251 = vpack.c.b16 %v2796, %v2795
          %v3252 = vpack.c.b16 %v2798, %v2797
          %v3253 = vpack.c.b16 %v2800, %v2799
          %v3254 = vpack.c.b16 %v2802, %v2801
          %v3255 = vpack.c.b16 %v2804, %v2803
          %v3256 = vpack.c.b16 %v2806, %v2805
          %v3257 = vpack.c.b16 %v2808, %v2807
          %v3258 = vpack.c.b16 %v2810, %v2809
          %v3259 = vpack.c.b16 %v2812, %v2811
          %v3260 = vpack.c.b16 %v2814, %v2813
          %v3261 = vpack.c.b16 %v2816, %v2815
          %v3262 = vpack.c.b16 %v2818, %v2817
          %v3263 = vpack.c.b16 %v2820, %v2819
          %v3264 = vpack.c.b16 %v2822, %v2821
          %v3265 = vpack.c.b16 %v2824, %v2823
          %v3266 = vpack.c.b16 %v2826, %v2825
          %v3267 = vpack.c.b16 %v2828, %v2827
          %v3268 = vpack.c.b16 %v2830, %v2829
          %v3269 = vpack.c.b16 %v2832, %v2831
          %v3270 = vpack.c.b16 %v2834, %v2833
          %v3271 = vpack.c.b16 %v2836, %v2835
          %v3272 = vpack.c.b16 %v2838, %v2837
          %v3273 = vpack.c.b16 %v2840, %v2839
          %v3274 = vpack.c.b16 %v2842, %v2841
          %v3275 = vpack.c.b16 %v2844, %v2843
          %v3276 = vpack.c.b16 %v2846, %v2845
          %v3277 = vpack.c.b16 %v2848, %v2847
          %v3278 = vpack.c.b16 %v2850, %v2849
          %v3279 = vpack.c.b16 %v2852, %v2851
          %v3280 = vpack.c.b16 %v2854, %v2853
          %v3281 = vpack.c.b16 %v2856, %v2855
          %v3282 = vpack.c.b16 %v2858, %v2857
          %v3283 = vpack.c.b16 %v2860, %v2859
          %v3284 = vpack.c.b16 %v2862, %v2861
          %v3285 = vpack.c.b16 %v2864, %v2863
          %v3286 = vpack.c.b16 %v2866, %v2865
          %v3287 = vpack.c.b16 %v2868, %v2867
          %v3288 = vpack.c.b16 %v2870, %v2869
          %v3289 = vpack.c.b16 %v2872, %v2871
          %v3290 = vpack.c.b16 %v2874, %v2873
          %v3291 = vpack.c.b16 %v2876, %v2875
          %v3292 = vpack.c.b16 %v2878, %v2877
          %v3293 = vpack.c.b16 %v2880, %v2879
          %v3294 = vpack.c.b16 %v2882, %v2881
          %v3295 = vpack.c.b16 %v2884, %v2883
          %v3296 = vpack.c.b16 %v2886, %v2885
          %v3297 = vpack.c.b16 %v2888, %v2887
          %v3298 = vpack.c.b16 %v2890, %v2889
          %v3299 = vpack.c.b16 %v2892, %v2891
          %v3300 = vpack.c.b16 %v2894, %v2893
          %v3301 = vpack.c.b16 %v2896, %v2895
          %v3302 = vpack.c.b16 %v2898, %v2897
          %v3303 = vpack.c.b16 %v2900, %v2899
          %v3304 = vpack.c.b16 %v2902, %v2901
          %v3305 = vpack.c.b16 %v2904, %v2903
          %v3306 = vpack.c.b16 %v2906, %v2905
          %v3307 = vpack.c.b16 %v2908, %v2907
          %v3308 = vpack.c.b16 %v2910, %v2909
          %v3309 = vpack.c.b16 %v2912, %v2911
          %v3310 = vpack.c.b16 %v2914, %v2913
          %v3311 = vpack.c.b16 %v2916, %v2915
          %v3312 = vpack.c.b16 %v2918, %v2917
          %v3313 = vpack.c.b16 %v2920, %v2919
          %v3314 = vpack.c.b16 %v2922, %v2921
          %v3315 = vpack.c.b16 %v2924, %v2923
          %v3316 = vpack.c.b16 %v2926, %v2925
          %v3317 = vpack.c.b16 %v2928, %v2927
          %v3318 = vpack.c.b16 %v2930, %v2929
          %v3319 = vpack.c.b16 %v2932, %v2931
          %v3320 = vpack.c.b16 %v2934, %v2933
          %v3321 = vpack.c.b16 %v2936, %v2935
          %v3322 = vpack.c.b16 %v2938, %v2937
          %v3323 = vpack.c.b16 %v2940, %v2939
          %v3324 = vpack.c.b16 %v2942, %v2941
          %v3325 = vpack.c.b16 %v2944, %v2943
          %v3326 = vpack.c.b16 %v2946, %v2945
          %v3327 = vpack.c.b16 %v2948, %v2947
          %v3328 = vpack.c.b16 %v2950, %v2949
          %v3329 = vpack.c.b16 %v2952, %v2951
          %v3330 = vpack.c.b16 %v2954, %v2953
          %3707 = vmatpush.bf16.msra.mxu0 %v2962
          %3708 = vmatpush.bf16.msra.mxu0 %v2961
          %3709 = vmatpush.bf16.msra.mxu0 %v2960
          %3710 = vmatpush.bf16.msra.mxu0 %v2959
          %3711 = vmatpush.bf16.msra.mxu0 %v2958
          %3712 = vmatpush.bf16.msra.mxu0 %v2957
          %3713 = vmatpush.bf16.msra.mxu0 %v2956
          %3714 = vmatpush.bf16.msra.mxu0 %v2955
          %3715 = vmatmul.bf16.gmra.mxu0 %v1357
          %v3716 = vpop.f32.mrf.mxu0
          %v3717 = vadd.f32 %v1213, %v3716
          %v3718 = vpop.f32.mrf.mxu0
          %v3719 = vadd.f32 %v1213, %v3718
          %3720 = vdwg.mxu0
          %3721 = vmatpush.bf16.msra.mxu0 %v2970
          %3722 = vmatpush.bf16.msra.mxu0 %v2969
          %3723 = vmatpush.bf16.msra.mxu0 %v2968
          %3724 = vmatpush.bf16.msra.mxu0 %v2967
          %3725 = vmatpush.bf16.msra.mxu0 %v2966
          %3726 = vmatpush.bf16.msra.mxu0 %v2965
          %3727 = vmatpush.bf16.msra.mxu0 %v2964
          %3728 = vmatpush.bf16.msra.mxu0 %v2963
          %3729 = vmatmul.bf16.gmra.mxu0 %v1358
          %v3730 = vpop.f32.mrf.mxu0
          %v3731 = vadd.f32 %v3717, %v3730
          %v3732 = vpop.f32.mrf.mxu0
          %v3733 = vadd.f32 %v3719, %v3732
          %3734 = vdwg.mxu0
          %3735 = vmatpush.bf16.msra.mxu0 %v2978
          %3736 = vmatpush.bf16.msra.mxu0 %v2977
          %3737 = vmatpush.bf16.msra.mxu0 %v2976
          %3738 = vmatpush.bf16.msra.mxu0 %v2975
          %3739 = vmatpush.bf16.msra.mxu0 %v2974
          %3740 = vmatpush.bf16.msra.mxu0 %v2973
          %3741 = vmatpush.bf16.msra.mxu0 %v2972
          %3742 = vmatpush.bf16.msra.mxu0 %v2971
          %3743 = vmatmul.bf16.gmra.mxu0 %v1359
          %v3744 = vpop.f32.mrf.mxu0
          %v3745 = vadd.f32 %v3731, %v3744
          %v3746 = vpop.f32.mrf.mxu0
          %v3747 = vadd.f32 %v3733, %v3746
          %3748 = vdwg.mxu0
          %3749 = vmatpush.bf16.msra.mxu0 %v2986
          %3750 = vmatpush.bf16.msra.mxu0 %v2985
          %3751 = vmatpush.bf16.msra.mxu0 %v2984
          %3752 = vmatpush.bf16.msra.mxu0 %v2983
          %3753 = vmatpush.bf16.msra.mxu0 %v2982
          %3754 = vmatpush.bf16.msra.mxu0 %v2981
          %3755 = vmatpush.bf16.msra.mxu0 %v2980
          %3756 = vmatpush.bf16.msra.mxu0 %v2979
          %3757 = vmatmul.bf16.gmra.mxu0 %v1360
          %v3758 = vpop.f32.mrf.mxu0
          %v3759 = vadd.f32 %v3745, %v3758
          %v3760 = vpop.f32.mrf.mxu0
          %v3761 = vadd.f32 %v3747, %v3760
          %3762 = vdwg.mxu0
          %3763 = vmatpush.bf16.msra.mxu0 %v2994
          %3764 = vmatpush.bf16.msra.mxu0 %v2993
          %3765 = vmatpush.bf16.msra.mxu0 %v2992
          %3766 = vmatpush.bf16.msra.mxu0 %v2991
          %3767 = vmatpush.bf16.msra.mxu0 %v2990
          %3768 = vmatpush.bf16.msra.mxu0 %v2989
          %3769 = vmatpush.bf16.msra.mxu0 %v2988
          %3770 = vmatpush.bf16.msra.mxu0 %v2987
          %3771 = vmatmul.bf16.gmra.mxu0 %v1361
          %v3772 = vpop.f32.mrf.mxu0
          %v3773 = vadd.f32 %v3759, %v3772
          %v3774 = vpop.f32.mrf.mxu0
          %v3775 = vadd.f32 %v3761, %v3774
          %3776 = vdwg.mxu0
          %3777 = vmatpush.bf16.msra.mxu0 %v3002
          %3778 = vmatpush.bf16.msra.mxu0 %v3001
          %3779 = vmatpush.bf16.msra.mxu0 %v3000
          %3780 = vmatpush.bf16.msra.mxu0 %v2999
          %3781 = vmatpush.bf16.msra.mxu0 %v2998
          %3782 = vmatpush.bf16.msra.mxu0 %v2997
          %3783 = vmatpush.bf16.msra.mxu0 %v2996
          %3784 = vmatpush.bf16.msra.mxu0 %v2995
          %3785 = vmatmul.bf16.gmra.mxu0 %v1362
          %v3786 = vpop.f32.mrf.mxu0
          %v3787 = vadd.f32 %v3773, %v3786
          %v3788 = vpop.f32.mrf.mxu0
          %v3789 = vadd.f32 %v3775, %v3788
          %3790 = vdwg.mxu0
          %3791 = vmatpush.bf16.msra.mxu0 %v3010
          %3792 = vmatpush.bf16.msra.mxu0 %v3009
          %3793 = vmatpush.bf16.msra.mxu0 %v3008
          %3794 = vmatpush.bf16.msra.mxu0 %v3007
          %3795 = vmatpush.bf16.msra.mxu0 %v3006
          %3796 = vmatpush.bf16.msra.mxu0 %v3005
          %3797 = vmatpush.bf16.msra.mxu0 %v3004
          %3798 = vmatpush.bf16.msra.mxu0 %v3003
          %3799 = vmatmul.bf16.gmra.mxu0 %v1363
          %v3800 = vpop.f32.mrf.mxu0
          %v3801 = vadd.f32 %v3787, %v3800
          %v3802 = vpop.f32.mrf.mxu0
          %v3803 = vadd.f32 %v3789, %v3802
          %3804 = vdwg.mxu0
          %3805 = vmatpush.bf16.msra.mxu0 %v3018
          %3806 = vmatpush.bf16.msra.mxu0 %v3017
          %3807 = vmatpush.bf16.msra.mxu0 %v3016
          %3808 = vmatpush.bf16.msra.mxu0 %v3015
          %3809 = vmatpush.bf16.msra.mxu0 %v3014
          %3810 = vmatpush.bf16.msra.mxu0 %v3013
          %3811 = vmatpush.bf16.msra.mxu0 %v3012
          %3812 = vmatpush.bf16.msra.mxu0 %v3011
          %3813 = vmatmul.bf16.gmra.mxu0 %v1364
          %v3814 = vpop.f32.mrf.mxu0
          %v3815 = vadd.f32 %v3801, %v3814
          %v3816 = vpop.f32.mrf.mxu0
          %v3817 = vadd.f32 %v3803, %v3816
          %3818 = vdwg.mxu0
          %3819 = vmatpush.bf16.msra.mxu0 %v3026
          %3820 = vmatpush.bf16.msra.mxu0 %v3025
          %3821 = vmatpush.bf16.msra.mxu0 %v3024
          %3822 = vmatpush.bf16.msra.mxu0 %v3023
          %3823 = vmatpush.bf16.msra.mxu0 %v3022
          %3824 = vmatpush.bf16.msra.mxu0 %v3021
          %3825 = vmatpush.bf16.msra.mxu0 %v3020
          %3826 = vmatpush.bf16.msra.mxu0 %v3019
          %3827 = vmatmul.bf16.gmra.mxu0 %v1365
          %v3828 = vpop.f32.mrf.mxu0
          %v3829 = vadd.f32 %v3815, %v3828
          %v3830 = vpop.f32.mrf.mxu0
          %v3831 = vadd.f32 %v3817, %v3830
          %3832 = vdwg.mxu0
          %3833 = vmatpush.bf16.msra.mxu0 %v3034
          %3834 = vmatpush.bf16.msra.mxu0 %v3033
          %3835 = vmatpush.bf16.msra.mxu0 %v3032
          %3836 = vmatpush.bf16.msra.mxu0 %v3031
          %3837 = vmatpush.bf16.msra.mxu0 %v3030
          %3838 = vmatpush.bf16.msra.mxu0 %v3029
          %3839 = vmatpush.bf16.msra.mxu0 %v3028
          %3840 = vmatpush.bf16.msra.mxu0 %v3027
          %3841 = vmatmul.bf16.gmra.mxu0 %v1366
          %v3842 = vpop.f32.mrf.mxu0
          %v3843 = vadd.f32 %v3829, %v3842
          %v3844 = vpop.f32.mrf.mxu0
          %v3845 = vadd.f32 %v3831, %v3844
          %3846 = vdwg.mxu0
          %3847 = vmatpush.bf16.msra.mxu0 %v3042
          %3848 = vmatpush.bf16.msra.mxu0 %v3041
          %3849 = vmatpush.bf16.msra.mxu0 %v3040
          %3850 = vmatpush.bf16.msra.mxu0 %v3039
          %3851 = vmatpush.bf16.msra.mxu0 %v3038
          %3852 = vmatpush.bf16.msra.mxu0 %v3037
          %3853 = vmatpush.bf16.msra.mxu0 %v3036
          %3854 = vmatpush.bf16.msra.mxu0 %v3035
          %3855 = vmatmul.bf16.gmra.mxu0 %v1367
          %v3856 = vpop.f32.mrf.mxu0
          %v3857 = vadd.f32 %v3843, %v3856
          %v3858 = vpop.f32.mrf.mxu0
          %v3859 = vadd.f32 %v3845, %v3858
          %3860 = vdwg.mxu0
          %3861 = vmatpush.bf16.msra.mxu0 %v3050
          %3862 = vmatpush.bf16.msra.mxu0 %v3049
          %3863 = vmatpush.bf16.msra.mxu0 %v3048
          %3864 = vmatpush.bf16.msra.mxu0 %v3047
          %3865 = vmatpush.bf16.msra.mxu0 %v3046
          %3866 = vmatpush.bf16.msra.mxu0 %v3045
          %3867 = vmatpush.bf16.msra.mxu0 %v3044
          %3868 = vmatpush.bf16.msra.mxu0 %v3043
          %3869 = vmatmul.bf16.gmra.mxu0 %v1368
          %v3870 = vpop.f32.mrf.mxu0
          %v3871 = vadd.f32 %v3857, %v3870
          %v3872 = vpop.f32.mrf.mxu0
          %v3873 = vadd.f32 %v3859, %v3872
          %3874 = vdwg.mxu0
          %3875 = vmatpush.bf16.msra.mxu0 %v3058
          %3876 = vmatpush.bf16.msra.mxu0 %v3057
          %3877 = vmatpush.bf16.msra.mxu0 %v3056
          %3878 = vmatpush.bf16.msra.mxu0 %v3055
          %3879 = vmatpush.bf16.msra.mxu0 %v3054
          %3880 = vmatpush.bf16.msra.mxu0 %v3053
          %3881 = vmatpush.bf16.msra.mxu0 %v3052
          %3882 = vmatpush.bf16.msra.mxu0 %v3051
          %3883 = vmatmul.bf16.gmra.mxu0 %v1369
          %v3884 = vpop.f32.mrf.mxu0
          %v3885 = vadd.f32 %v3871, %v3884
          %v3886 = vpop.f32.mrf.mxu0
          %v3887 = vadd.f32 %v3873, %v3886
          %3888 = vdwg.mxu0
          %3889 = vmatpush.bf16.msra.mxu0 %v3066
          %3890 = vmatpush.bf16.msra.mxu0 %v3065
          %3891 = vmatpush.bf16.msra.mxu0 %v3064
          %3892 = vmatpush.bf16.msra.mxu0 %v3063
          %3893 = vmatpush.bf16.msra.mxu0 %v3062
          %3894 = vmatpush.bf16.msra.mxu0 %v3061
          %3895 = vmatpush.bf16.msra.mxu0 %v3060
          %3896 = vmatpush.bf16.msra.mxu0 %v3059
          %3897 = vmatmul.bf16.gmra.mxu0 %v1370
          %v3898 = vpop.f32.mrf.mxu0
          %v3899 = vadd.f32 %v3885, %v3898
          %v3900 = vpop.f32.mrf.mxu0
          %v3901 = vadd.f32 %v3887, %v3900
          %3902 = vdwg.mxu0
          %3903 = vmatpush.bf16.msra.mxu0 %v3074
          %3904 = vmatpush.bf16.msra.mxu0 %v3073
          %3905 = vmatpush.bf16.msra.mxu0 %v3072
          %3906 = vmatpush.bf16.msra.mxu0 %v3071
          %3907 = vmatpush.bf16.msra.mxu0 %v3070
          %3908 = vmatpush.bf16.msra.mxu0 %v3069
          %3909 = vmatpush.bf16.msra.mxu0 %v3068
          %3910 = vmatpush.bf16.msra.mxu0 %v3067
          %3911 = vmatmul.bf16.gmra.mxu0 %v1371
          %v3912 = vpop.f32.mrf.mxu0
          %v3913 = vadd.f32 %v3899, %v3912
          %v3914 = vpop.f32.mrf.mxu0
          %v3915 = vadd.f32 %v3901, %v3914
          %3916 = vdwg.mxu0
          %3917 = vmatpush.bf16.msra.mxu0 %v3082
          %3918 = vmatpush.bf16.msra.mxu0 %v3081
          %3919 = vmatpush.bf16.msra.mxu0 %v3080
          %3920 = vmatpush.bf16.msra.mxu0 %v3079
          %3921 = vmatpush.bf16.msra.mxu0 %v3078
          %3922 = vmatpush.bf16.msra.mxu0 %v3077
          %3923 = vmatpush.bf16.msra.mxu0 %v3076
          %3924 = vmatpush.bf16.msra.mxu0 %v3075
          %3925 = vmatmul.bf16.gmra.mxu0 %v1372
          %v3926 = vpop.f32.mrf.mxu0
          %v3927 = vadd.f32 %v3913, %v3926
          %v3928 = vpop.f32.mrf.mxu0
          %v3929 = vadd.f32 %v3915, %v3928
          %3930 = vdwg.mxu0
          %3931 = vmatpush.bf16.msra.mxu0 %v3090
          %3932 = vmatpush.bf16.msra.mxu0 %v3089
          %3933 = vmatpush.bf16.msra.mxu0 %v3088
          %3934 = vmatpush.bf16.msra.mxu0 %v3087
          %3935 = vmatpush.bf16.msra.mxu0 %v3086
          %3936 = vmatpush.bf16.msra.mxu0 %v3085
          %3937 = vmatpush.bf16.msra.mxu0 %v3084
          %3938 = vmatpush.bf16.msra.mxu0 %v3083
          %3939 = vmatmul.bf16.gmra.mxu0 %v1373
          %v3940 = vpop.f32.mrf.mxu0
          %v3941 = vadd.f32 %v3927, %v3940
          %v3942 = vpop.f32.mrf.mxu0
          %v3943 = vadd.f32 %v3929, %v3942
          %3944 = vdwg.mxu0
          %3945 = vmatpush.bf16.msra.mxu0 %v3098
          %3946 = vmatpush.bf16.msra.mxu0 %v3097
          %3947 = vmatpush.bf16.msra.mxu0 %v3096
          %3948 = vmatpush.bf16.msra.mxu0 %v3095
          %3949 = vmatpush.bf16.msra.mxu0 %v3094
          %3950 = vmatpush.bf16.msra.mxu0 %v3093
          %3951 = vmatpush.bf16.msra.mxu0 %v3092
          %3952 = vmatpush.bf16.msra.mxu0 %v3091
          %3953 = vmatmul.bf16.gmra.mxu0 %v1374
          %v3954 = vpop.f32.mrf.mxu0
          %v3955 = vadd.f32 %v3941, %v3954
          %v3956 = vpop.f32.mrf.mxu0
          %v3957 = vadd.f32 %v3943, %v3956
          %3958 = vdwg.mxu0
          %3959 = vmatpush.bf16.msra.mxu0 %v3106
          %3960 = vmatpush.bf16.msra.mxu0 %v3105
          %3961 = vmatpush.bf16.msra.mxu0 %v3104
          %3962 = vmatpush.bf16.msra.mxu0 %v3103
          %3963 = vmatpush.bf16.msra.mxu0 %v3102
          %3964 = vmatpush.bf16.msra.mxu0 %v3101
          %3965 = vmatpush.bf16.msra.mxu0 %v3100
          %3966 = vmatpush.bf16.msra.mxu0 %v3099
          %3967 = vmatmul.bf16.gmra.mxu0 %v1375
          %v3968 = vpop.f32.mrf.mxu0
          %v3969 = vadd.f32 %v3955, %v3968
          %v3970 = vpop.f32.mrf.mxu0
          %v3971 = vadd.f32 %v3957, %v3970
          %3972 = vdwg.mxu0
          %3973 = vmatpush.bf16.msra.mxu0 %v3114
          %3974 = vmatpush.bf16.msra.mxu0 %v3113
          %3975 = vmatpush.bf16.msra.mxu0 %v3112
          %3976 = vmatpush.bf16.msra.mxu0 %v3111
          %3977 = vmatpush.bf16.msra.mxu0 %v3110
          %3978 = vmatpush.bf16.msra.mxu0 %v3109
          %3979 = vmatpush.bf16.msra.mxu0 %v3108
          %3980 = vmatpush.bf16.msra.mxu0 %v3107
          %3981 = vmatmul.bf16.gmra.mxu0 %v1376
          %v3982 = vpop.f32.mrf.mxu0
          %v3983 = vadd.f32 %v3969, %v3982
          %v3984 = vpop.f32.mrf.mxu0
          %v3985 = vadd.f32 %v3971, %v3984
          %3986 = vdwg.mxu0
          %3987 = vmatpush.bf16.msra.mxu0 %v3122
          %3988 = vmatpush.bf16.msra.mxu0 %v3121
          %3989 = vmatpush.bf16.msra.mxu0 %v3120
          %3990 = vmatpush.bf16.msra.mxu0 %v3119
          %3991 = vmatpush.bf16.msra.mxu0 %v3118
          %3992 = vmatpush.bf16.msra.mxu0 %v3117
          %3993 = vmatpush.bf16.msra.mxu0 %v3116
          %3994 = vmatpush.bf16.msra.mxu0 %v3115
          %3995 = vmatmul.bf16.gmra.mxu0 %v1377
          %v3996 = vpop.f32.mrf.mxu0
          %v3997 = vadd.f32 %v3983, %v3996
          %v3998 = vpop.f32.mrf.mxu0
          %v3999 = vadd.f32 %v3985, %v3998
          %4000 = vdwg.mxu0
          %4001 = vmatpush.bf16.msra.mxu0 %v3130
          %4002 = vmatpush.bf16.msra.mxu0 %v3129
          %4003 = vmatpush.bf16.msra.mxu0 %v3128
          %4004 = vmatpush.bf16.msra.mxu0 %v3127
          %4005 = vmatpush.bf16.msra.mxu0 %v3126
          %4006 = vmatpush.bf16.msra.mxu0 %v3125
          %4007 = vmatpush.bf16.msra.mxu0 %v3124
          %4008 = vmatpush.bf16.msra.mxu0 %v3123
          %4009 = vmatmul.bf16.gmra.mxu0 %v1378
          %v4010 = vpop.f32.mrf.mxu0
          %v4011 = vadd.f32 %v3997, %v4010
          %v4012 = vpop.f32.mrf.mxu0
          %v4013 = vadd.f32 %v3999, %v4012
          %4014 = vdwg.mxu0
          %4015 = vmatpush.bf16.msra.mxu0 %v3138
          %4016 = vmatpush.bf16.msra.mxu0 %v3137
          %4017 = vmatpush.bf16.msra.mxu0 %v3136
          %4018 = vmatpush.bf16.msra.mxu0 %v3135
          %4019 = vmatpush.bf16.msra.mxu0 %v3134
          %4020 = vmatpush.bf16.msra.mxu0 %v3133
          %4021 = vmatpush.bf16.msra.mxu0 %v3132
          %4022 = vmatpush.bf16.msra.mxu0 %v3131
          %4023 = vmatmul.bf16.gmra.mxu0 %v1379
          %v4024 = vpop.f32.mrf.mxu0
          %v4025 = vadd.f32 %v4011, %v4024
          %v4026 = vpop.f32.mrf.mxu0
          %v4027 = vadd.f32 %v4013, %v4026
          %4028 = vdwg.mxu0
          %4029 = vmatpush.bf16.msra.mxu0 %v3146
          %4030 = vmatpush.bf16.msra.mxu0 %v3145
          %4031 = vmatpush.bf16.msra.mxu0 %v3144
          %4032 = vmatpush.bf16.msra.mxu0 %v3143
          %4033 = vmatpush.bf16.msra.mxu0 %v3142
          %4034 = vmatpush.bf16.msra.mxu0 %v3141
          %4035 = vmatpush.bf16.msra.mxu0 %v3140
          %4036 = vmatpush.bf16.msra.mxu0 %v3139
          %4037 = vmatmul.bf16.gmra.mxu0 %v1380
          %v4038 = vpop.f32.mrf.mxu0
          %v4039 = vadd.f32 %v4025, %v4038
          %v4040 = vpop.f32.mrf.mxu0
          %v4041 = vadd.f32 %v4027, %v4040
          %4042 = vdwg.mxu0
          %4043 = vmatpush.bf16.msra.mxu0 %v3154
          %4044 = vmatpush.bf16.msra.mxu0 %v3153
          %4045 = vmatpush.bf16.msra.mxu0 %v3152
          %4046 = vmatpush.bf16.msra.mxu0 %v3151
          %4047 = vmatpush.bf16.msra.mxu0 %v3150
          %4048 = vmatpush.bf16.msra.mxu0 %v3149
          %4049 = vmatpush.bf16.msra.mxu0 %v3148
          %4050 = vmatpush.bf16.msra.mxu0 %v3147
          %4051 = vmatmul.bf16.gmra.mxu0 %v1381
          %v4052 = vpop.f32.mrf.mxu0
          %v4053 = vadd.f32 %v4039, %v4052
          %v4054 = vpop.f32.mrf.mxu0
          %v4055 = vadd.f32 %v4041, %v4054
          %4056 = vdwg.mxu0
          %4057 = vmatpush.bf16.msra.mxu0 %v3162
          %4058 = vmatpush.bf16.msra.mxu0 %v3161
          %4059 = vmatpush.bf16.msra.mxu0 %v3160
          %4060 = vmatpush.bf16.msra.mxu0 %v3159
          %4061 = vmatpush.bf16.msra.mxu0 %v3158
          %4062 = vmatpush.bf16.msra.mxu0 %v3157
          %4063 = vmatpush.bf16.msra.mxu0 %v3156
          %4064 = vmatpush.bf16.msra.mxu0 %v3155
          %4065 = vmatmul.bf16.gmra.mxu0 %v1382
          %v4066 = vpop.f32.mrf.mxu0
          %v4067 = vadd.f32 %v4053, %v4066
          %v4068 = vpop.f32.mrf.mxu0
          %v4069 = vadd.f32 %v4055, %v4068
          %4070 = vdwg.mxu0
          %4071 = vmatpush.bf16.msra.mxu0 %v3170
          %4072 = vmatpush.bf16.msra.mxu0 %v3169
          %4073 = vmatpush.bf16.msra.mxu0 %v3168
          %4074 = vmatpush.bf16.msra.mxu0 %v3167
          %4075 = vmatpush.bf16.msra.mxu0 %v3166
          %4076 = vmatpush.bf16.msra.mxu0 %v3165
          %4077 = vmatpush.bf16.msra.mxu0 %v3164
          %4078 = vmatpush.bf16.msra.mxu0 %v3163
          %4079 = vmatmul.bf16.gmra.mxu0 %v1383
          %v4080 = vpop.f32.mrf.mxu0
          %v4081 = vadd.f32 %v4067, %v4080
          %v4082 = vpop.f32.mrf.mxu0
          %v4083 = vadd.f32 %v4069, %v4082
          %4084 = vdwg.mxu0
          %4085 = vmatpush.bf16.msra.mxu0 %v3178
          %4086 = vmatpush.bf16.msra.mxu0 %v3177
          %4087 = vmatpush.bf16.msra.mxu0 %v3176
          %4088 = vmatpush.bf16.msra.mxu0 %v3175
          %4089 = vmatpush.bf16.msra.mxu0 %v3174
          %4090 = vmatpush.bf16.msra.mxu0 %v3173
          %4091 = vmatpush.bf16.msra.mxu0 %v3172
          %4092 = vmatpush.bf16.msra.mxu0 %v3171
          %4093 = vmatmul.bf16.gmra.mxu0 %v1384
          %v4094 = vpop.f32.mrf.mxu0
          %v4095 = vadd.f32 %v4081, %v4094
          %v4096 = vpop.f32.mrf.mxu0
          %v4097 = vadd.f32 %v4083, %v4096
          %4098 = vdwg.mxu0
          %4099 = vmatpush.bf16.msra.mxu0 %v3186
          %4100 = vmatpush.bf16.msra.mxu0 %v3185
          %4101 = vmatpush.bf16.msra.mxu0 %v3184
          %4102 = vmatpush.bf16.msra.mxu0 %v3183
          %4103 = vmatpush.bf16.msra.mxu0 %v3182
          %4104 = vmatpush.bf16.msra.mxu0 %v3181
          %4105 = vmatpush.bf16.msra.mxu0 %v3180
          %4106 = vmatpush.bf16.msra.mxu0 %v3179
          %4107 = vmatmul.bf16.gmra.mxu0 %v1385
          %v4108 = vpop.f32.mrf.mxu0
          %v4109 = vadd.f32 %v4095, %v4108
          %v4110 = vpop.f32.mrf.mxu0
          %v4111 = vadd.f32 %v4097, %v4110
          %4112 = vdwg.mxu0
          %4113 = vmatpush.bf16.msra.mxu0 %v3194
          %4114 = vmatpush.bf16.msra.mxu0 %v3193
          %4115 = vmatpush.bf16.msra.mxu0 %v3192
          %4116 = vmatpush.bf16.msra.mxu0 %v3191
          %4117 = vmatpush.bf16.msra.mxu0 %v3190
          %4118 = vmatpush.bf16.msra.mxu0 %v3189
          %4119 = vmatpush.bf16.msra.mxu0 %v3188
          %4120 = vmatpush.bf16.msra.mxu0 %v3187
          %4121 = vmatmul.bf16.gmra.mxu0 %v1386
          %v4122 = vpop.f32.mrf.mxu0
          %v4123 = vadd.f32 %v4109, %v4122
          %v4124 = vpop.f32.mrf.mxu0
          %v4125 = vadd.f32 %v4111, %v4124
          %4126 = vdwg.mxu0
          %4127 = vmatpush.bf16.msra.mxu0 %v3202
          %4128 = vmatpush.bf16.msra.mxu0 %v3201
          %4129 = vmatpush.bf16.msra.mxu0 %v3200
          %4130 = vmatpush.bf16.msra.mxu0 %v3199
          %4131 = vmatpush.bf16.msra.mxu0 %v3198
          %4132 = vmatpush.bf16.msra.mxu0 %v3197
          %4133 = vmatpush.bf16.msra.mxu0 %v3196
          %4134 = vmatpush.bf16.msra.mxu0 %v3195
          %4135 = vmatmul.bf16.gmra.mxu0 %v1387
          %v4136 = vpop.f32.mrf.mxu0
          %v4137 = vadd.f32 %v4123, %v4136
          %v4138 = vpop.f32.mrf.mxu0
          %v4139 = vadd.f32 %v4125, %v4138
          %4140 = vdwg.mxu0
          %4141 = vmatpush.bf16.msra.mxu0 %v3210
          %4142 = vmatpush.bf16.msra.mxu0 %v3209
          %4143 = vmatpush.bf16.msra.mxu0 %v3208
          %4144 = vmatpush.bf16.msra.mxu0 %v3207
          %4145 = vmatpush.bf16.msra.mxu0 %v3206
          %4146 = vmatpush.bf16.msra.mxu0 %v3205
          %4147 = vmatpush.bf16.msra.mxu0 %v3204
          %4148 = vmatpush.bf16.msra.mxu0 %v3203
          %4149 = vmatmul.bf16.gmra.mxu0 %v1388
          %v4150 = vpop.f32.mrf.mxu0
          %v4151 = vadd.f32 %v4137, %v4150
          %v4152 = vpop.f32.mrf.mxu0
          %v4153 = vadd.f32 %v4139, %v4152
          %4154 = vdwg.mxu0
          %4155 = vmatpush.bf16.msra.mxu0 %v3218
          %4156 = vmatpush.bf16.msra.mxu0 %v3217
          %4157 = vmatpush.bf16.msra.mxu0 %v3216
          %4158 = vmatpush.bf16.msra.mxu0 %v3215
          %4159 = vmatpush.bf16.msra.mxu0 %v3214
          %4160 = vmatpush.bf16.msra.mxu0 %v3213
          %4161 = vmatpush.bf16.msra.mxu0 %v3212
          %4162 = vmatpush.bf16.msra.mxu0 %v3211
          %4163 = vmatmul.bf16.gmra.mxu0 %v1389
          %v4164 = vpop.f32.mrf.mxu0
          %v4165 = vadd.f32 %v4151, %v4164
          %v4166 = vpop.f32.mrf.mxu0
          %v4167 = vadd.f32 %v4153, %v4166
          %4168 = vdwg.mxu0
          %4169 = vmatpush.bf16.msra.mxu0 %v3226
          %4170 = vmatpush.bf16.msra.mxu0 %v3225
          %4171 = vmatpush.bf16.msra.mxu0 %v3224
          %4172 = vmatpush.bf16.msra.mxu0 %v3223
          %4173 = vmatpush.bf16.msra.mxu0 %v3222
          %4174 = vmatpush.bf16.msra.mxu0 %v3221
          %4175 = vmatpush.bf16.msra.mxu0 %v3220
          %4176 = vmatpush.bf16.msra.mxu0 %v3219
          %4177 = vmatmul.bf16.gmra.mxu0 %v1390
          %v4178 = vpop.f32.mrf.mxu0
          %v4179 = vadd.f32 %v4165, %v4178
          %v4180 = vpop.f32.mrf.mxu0
          %v4181 = vadd.f32 %v4167, %v4180
          %4182 = vdwg.mxu0
          %4183 = vmatpush.bf16.msra.mxu0 %v3234
          %4184 = vmatpush.bf16.msra.mxu0 %v3233
          %4185 = vmatpush.bf16.msra.mxu0 %v3232
          %4186 = vmatpush.bf16.msra.mxu0 %v3231
          %4187 = vmatpush.bf16.msra.mxu0 %v3230
          %4188 = vmatpush.bf16.msra.mxu0 %v3229
          %4189 = vmatpush.bf16.msra.mxu0 %v3228
          %4190 = vmatpush.bf16.msra.mxu0 %v3227
          %4191 = vmatmul.bf16.gmra.mxu0 %v1391
          %v4192 = vpop.f32.mrf.mxu0
          %v4193 = vadd.f32 %v4179, %v4192
          %v4194 = vpop.f32.mrf.mxu0
          %v4195 = vadd.f32 %v4181, %v4194
          %4196 = vdwg.mxu0
          %4197 = vmatpush.bf16.msra.mxu0 %v3242
          %4198 = vmatpush.bf16.msra.mxu0 %v3241
          %4199 = vmatpush.bf16.msra.mxu0 %v3240
          %4200 = vmatpush.bf16.msra.mxu0 %v3239
          %4201 = vmatpush.bf16.msra.mxu0 %v3238
          %4202 = vmatpush.bf16.msra.mxu0 %v3237
          %4203 = vmatpush.bf16.msra.mxu0 %v3236
          %4204 = vmatpush.bf16.msra.mxu0 %v3235
          %4205 = vmatmul.bf16.gmra.mxu0 %v1392
          %v4206 = vpop.f32.mrf.mxu0
          %v4207 = vadd.f32 %v4193, %v4206
          %v4208 = vpop.f32.mrf.mxu0
          %v4209 = vadd.f32 %v4195, %v4208
          %4210 = vdwg.mxu0
          %4211 = vmatpush.bf16.msra.mxu0 %v3250
          %4212 = vmatpush.bf16.msra.mxu0 %v3249
          %4213 = vmatpush.bf16.msra.mxu0 %v3248
          %4214 = vmatpush.bf16.msra.mxu0 %v3247
          %4215 = vmatpush.bf16.msra.mxu0 %v3246
          %4216 = vmatpush.bf16.msra.mxu0 %v3245
          %4217 = vmatpush.bf16.msra.mxu0 %v3244
          %4218 = vmatpush.bf16.msra.mxu0 %v3243
          %4219 = vmatmul.bf16.gmra.mxu0 %v1393
          %v4220 = vpop.f32.mrf.mxu0
          %v4221 = vadd.f32 %v4207, %v4220
          %v4222 = vpop.f32.mrf.mxu0
          %v4223 = vadd.f32 %v4209, %v4222
          %4224 = vdwg.mxu0
          %4225 = vmatpush.bf16.msra.mxu0 %v3258
          %4226 = vmatpush.bf16.msra.mxu0 %v3257
          %4227 = vmatpush.bf16.msra.mxu0 %v3256
          %4228 = vmatpush.bf16.msra.mxu0 %v3255
          %4229 = vmatpush.bf16.msra.mxu0 %v3254
          %4230 = vmatpush.bf16.msra.mxu0 %v3253
          %4231 = vmatpush.bf16.msra.mxu0 %v3252
          %4232 = vmatpush.bf16.msra.mxu0 %v3251
          %4233 = vmatmul.bf16.gmra.mxu0 %v1394
          %v4234 = vpop.f32.mrf.mxu0
          %v4235 = vadd.f32 %v4221, %v4234
          %v4236 = vpop.f32.mrf.mxu0
          %v4237 = vadd.f32 %v4223, %v4236
          %4238 = vdwg.mxu0
          %4239 = vmatpush.bf16.msra.mxu0 %v3266
          %4240 = vmatpush.bf16.msra.mxu0 %v3265
          %4241 = vmatpush.bf16.msra.mxu0 %v3264
          %4242 = vmatpush.bf16.msra.mxu0 %v3263
          %4243 = vmatpush.bf16.msra.mxu0 %v3262
          %4244 = vmatpush.bf16.msra.mxu0 %v3261
          %4245 = vmatpush.bf16.msra.mxu0 %v3260
          %4246 = vmatpush.bf16.msra.mxu0 %v3259
          %4247 = vmatmul.bf16.gmra.mxu0 %v1395
          %v4248 = vpop.f32.mrf.mxu0
          %v4249 = vadd.f32 %v4235, %v4248
          %v4250 = vpop.f32.mrf.mxu0
          %v4251 = vadd.f32 %v4237, %v4250
          %4252 = vdwg.mxu0
          %4253 = vmatpush.bf16.msra.mxu0 %v3274
          %4254 = vmatpush.bf16.msra.mxu0 %v3273
          %4255 = vmatpush.bf16.msra.mxu0 %v3272
          %4256 = vmatpush.bf16.msra.mxu0 %v3271
          %4257 = vmatpush.bf16.msra.mxu0 %v3270
          %4258 = vmatpush.bf16.msra.mxu0 %v3269
          %4259 = vmatpush.bf16.msra.mxu0 %v3268
          %4260 = vmatpush.bf16.msra.mxu0 %v3267
          %4261 = vmatmul.bf16.gmra.mxu0 %v1396
          %v4262 = vpop.f32.mrf.mxu0
          %v4263 = vadd.f32 %v4249, %v4262
          %v4264 = vpop.f32.mrf.mxu0
          %v4265 = vadd.f32 %v4251, %v4264
          %4266 = vdwg.mxu0
          %4267 = vmatpush.bf16.msra.mxu0 %v3282
          %4268 = vmatpush.bf16.msra.mxu0 %v3281
          %4269 = vmatpush.bf16.msra.mxu0 %v3280
          %4270 = vmatpush.bf16.msra.mxu0 %v3279
          %4271 = vmatpush.bf16.msra.mxu0 %v3278
          %4272 = vmatpush.bf16.msra.mxu0 %v3277
          %4273 = vmatpush.bf16.msra.mxu0 %v3276
          %4274 = vmatpush.bf16.msra.mxu0 %v3275
          %4275 = vmatmul.bf16.gmra.mxu0 %v1397
          %v4276 = vpop.f32.mrf.mxu0
          %v4277 = vadd.f32 %v4263, %v4276
          %v4278 = vpop.f32.mrf.mxu0
          %v4279 = vadd.f32 %v4265, %v4278
          %4280 = vdwg.mxu0
          %4281 = vmatpush.bf16.msra.mxu0 %v3290
          %4282 = vmatpush.bf16.msra.mxu0 %v3289
          %4283 = vmatpush.bf16.msra.mxu0 %v3288
          %4284 = vmatpush.bf16.msra.mxu0 %v3287
          %4285 = vmatpush.bf16.msra.mxu0 %v3286
          %4286 = vmatpush.bf16.msra.mxu0 %v3285
          %4287 = vmatpush.bf16.msra.mxu0 %v3284
          %4288 = vmatpush.bf16.msra.mxu0 %v3283
          %4289 = vmatmul.bf16.gmra.mxu0 %v1398
          %v4290 = vpop.f32.mrf.mxu0
          %v4291 = vadd.f32 %v4277, %v4290
          %v4292 = vpop.f32.mrf.mxu0
          %v4293 = vadd.f32 %v4279, %v4292
          %4294 = vdwg.mxu0
          %4295 = vmatpush.bf16.msra.mxu0 %v3298
          %4296 = vmatpush.bf16.msra.mxu0 %v3297
          %4297 = vmatpush.bf16.msra.mxu0 %v3296
          %4298 = vmatpush.bf16.msra.mxu0 %v3295
          %4299 = vmatpush.bf16.msra.mxu0 %v3294
          %4300 = vmatpush.bf16.msra.mxu0 %v3293
          %4301 = vmatpush.bf16.msra.mxu0 %v3292
          %4302 = vmatpush.bf16.msra.mxu0 %v3291
          %4303 = vmatmul.bf16.gmra.mxu0 %v1399
          %v4304 = vpop.f32.mrf.mxu0
          %v4305 = vadd.f32 %v4291, %v4304
          %v4306 = vpop.f32.mrf.mxu0
          %v4307 = vadd.f32 %v4293, %v4306
          %4308 = vdwg.mxu0
          %4309 = vmatpush.bf16.msra.mxu0 %v3306
          %4310 = vmatpush.bf16.msra.mxu0 %v3305
          %4311 = vmatpush.bf16.msra.mxu0 %v3304
          %4312 = vmatpush.bf16.msra.mxu0 %v3303
          %4313 = vmatpush.bf16.msra.mxu0 %v3302
          %4314 = vmatpush.bf16.msra.mxu0 %v3301
          %4315 = vmatpush.bf16.msra.mxu0 %v3300
          %4316 = vmatpush.bf16.msra.mxu0 %v3299
          %4317 = vmatmul.bf16.gmra.mxu0 %v1400
          %v4318 = vpop.f32.mrf.mxu0
          %v4319 = vadd.f32 %v4305, %v4318
          %v4320 = vpop.f32.mrf.mxu0
          %v4321 = vadd.f32 %v4307, %v4320
          %4322 = vdwg.mxu0
          %4323 = vmatpush.bf16.msra.mxu0 %v3314
          %4324 = vmatpush.bf16.msra.mxu0 %v3313
          %4325 = vmatpush.bf16.msra.mxu0 %v3312
          %4326 = vmatpush.bf16.msra.mxu0 %v3311
          %4327 = vmatpush.bf16.msra.mxu0 %v3310
          %4328 = vmatpush.bf16.msra.mxu0 %v3309
          %4329 = vmatpush.bf16.msra.mxu0 %v3308
          %4330 = vmatpush.bf16.msra.mxu0 %v3307
          %4331 = vmatmul.bf16.gmra.mxu0 %v1401
          %v4332 = vpop.f32.mrf.mxu0
          %v4333 = vadd.f32 %v4319, %v4332
          %v4334 = vpop.f32.mrf.mxu0
          %v4335 = vadd.f32 %v4321, %v4334
          %4336 = vdwg.mxu0
          %4337 = vmatpush.bf16.msra.mxu0 %v3322
          %4338 = vmatpush.bf16.msra.mxu0 %v3321
          %4339 = vmatpush.bf16.msra.mxu0 %v3320
          %4340 = vmatpush.bf16.msra.mxu0 %v3319
          %4341 = vmatpush.bf16.msra.mxu0 %v3318
          %4342 = vmatpush.bf16.msra.mxu0 %v3317
          %4343 = vmatpush.bf16.msra.mxu0 %v3316
          %4344 = vmatpush.bf16.msra.mxu0 %v3315
          %4345 = vmatmul.bf16.gmra.mxu0 %v1402
          %v4346 = vpop.f32.mrf.mxu0
          %v4347 = vadd.f32 %v4333, %v4346
          %v4348 = vpop.f32.mrf.mxu0
          %v4349 = vadd.f32 %v4335, %v4348
          %4350 = vdwg.mxu0
          %4351 = vmatpush.bf16.msra.mxu0 %v3330
          %4352 = vmatpush.bf16.msra.mxu0 %v3329
          %4353 = vmatpush.bf16.msra.mxu0 %v3328
          %4354 = vmatpush.bf16.msra.mxu0 %v3327
          %4355 = vmatpush.bf16.msra.mxu0 %v3326
          %4356 = vmatpush.bf16.msra.mxu0 %v3325
          %4357 = vmatpush.bf16.msra.mxu0 %v3324
          %4358 = vmatpush.bf16.msra.mxu0 %v3323
          %4359 = vmatmul.bf16.gmra.mxu0 %v1403
          %v4360 = vpop.f32.mrf.mxu0
          %v4361 = vadd.f32 %v4347, %v4360
          %v4362 = vpop.f32.mrf.mxu0
          %v4363 = vadd.f32 %v4349, %v4362
          %4364 = vdwg.mxu0
          %v4365 = vmax.f32 %v4361, 0.0
          %v4366 = vmax.f32 %v4363, 0.0
          %v4367 = vpack.c.bf16 %v4366, %v4365
          %v4368 = vld [vmem:[%s3] sm:$0xf]
          %v4369 = vld [vmem:[%s3 + $0x4] sm:$0xf]
          %v4370 = vld [vmem:[%s3 + $0x8] sm:$0xf]
          %v4371 = vld [vmem:[%s3 + $0xc] sm:$0xf]
          %v4372 = vld [vmem:[%s3 + $0x10] sm:$0xf]
          %v4373 = vld [vmem:[%s3 + $0x14] sm:$0xf]
          %v4374 = vld [vmem:[%s3 + $0x18] sm:$0xf]
          %v4375 = vld [vmem:[%s3 + $0x1c] sm:$0xf]
          %v4376 = vld [vmem:[%s3 + $0x20] sm:$0xf]
          %v4377 = vld [vmem:[%s3 + $0x24] sm:$0xf]
          %v4378 = vld [vmem:[%s3 + $0x28] sm:$0xf]
          %v4379 = vld [vmem:[%s3 + $0x2c] sm:$0xf]
          %v4380 = vld [vmem:[%s3 + $0x30] sm:$0xf]
          %v4381 = vld [vmem:[%s3 + $0x34] sm:$0xf]
          %v4382 = vld [vmem:[%s3 + $0x38] sm:$0xf]
          %v4383 = vld [vmem:[%s3 + $0x3c] sm:$0xf]
          %v4384 = vld [vmem:[%s4] sm:$0x1]
          %v4386 = vperm.slane %v4384, 0
          %v4404 = vunpack.c.l.b16 %v4368
          %v4405 = vunpack.c.l.b16 %v4369
          %v4406 = vunpack.c.l.b16 %v4370
          %v4407 = vunpack.c.l.b16 %v4371
          %v4408 = vunpack.c.l.b16 %v4372
          %v4409 = vunpack.c.l.b16 %v4373
          %v4410 = vunpack.c.l.b16 %v4374
          %v4411 = vunpack.c.l.b16 %v4375
          %v4412 = vunpack.c.l.b16 %v4376
          %v4413 = vunpack.c.l.b16 %v4377
          %v4414 = vunpack.c.l.b16 %v4378
          %v4415 = vunpack.c.l.b16 %v4379
          %v4416 = vunpack.c.l.b16 %v4380
          %v4417 = vunpack.c.l.b16 %v4381
          %v4418 = vunpack.c.l.b16 %v4382
          %v4419 = vunpack.c.l.b16 %v4383
          %v4420 = vpack.c.b16 %v4405, %v4404
          %v4421 = vpack.c.b16 %v4407, %v4406
          %v4422 = vpack.c.b16 %v4409, %v4408
          %v4423 = vpack.c.b16 %v4411, %v4410
          %v4424 = vpack.c.b16 %v4413, %v4412
          %v4425 = vpack.c.b16 %v4415, %v4414
          %v4426 = vpack.c.b16 %v4417, %v4416
          %v4427 = vpack.c.b16 %v4419, %v4418
          %4436 = vmatpush.bf16.msra.mxu0 %v4427
          %4437 = vmatpush.bf16.msra.mxu0 %v4426
          %4438 = vmatpush.bf16.msra.mxu0 %v4425
          %4439 = vmatpush.bf16.msra.mxu0 %v4424
          %4440 = vmatpush.bf16.msra.mxu0 %v4423
          %4441 = vmatpush.bf16.msra.mxu0 %v4422
          %4442 = vmatpush.bf16.msra.mxu0 %v4421
          %4443 = vmatpush.bf16.msra.mxu0 %v4420
          %4444 = vmatmul.bf16.gmra.mxu0 %v4367
          %v4445 = vpop.f32.mrf.mxu0
          %v4446 = vadd.f32 %v4386, %v4445
          %v4447 = vpop.f32.mrf.mxu0
          %v4448 = vadd.f32 %v4386, %v4447
          %4449 = vdwg.mxu0
          %vm4450 = vcmask 80896
          %v4451 = vsel %vm4450, %v4446, -inf
          %4452 = vmax.xlane.f32.xlu0 %v4451
          %v4453 = vpop.xlane.xlu0 %4452
          %v4454 = vsel %vm4450, %v4448, -inf
          %4455 = vmax.xlane.f32.xlu0 %v4454
          %v4456 = vpop.xlane.xlu0 %4455
          %v4457 = vsub.f32 %v4446, %v4453
          %v4458 = vsub.f32 %v4448, %v4456
          %v4459 = vmul.f32 %v4457, 1.442695
          %v4460 = vpow.pop %v4459
          %v4461 = vmul.f32 %v4458, 1.442695
          %v4462 = vpow.pop %v4461
          %v4463 = vsel %vm4450, %v4460, 0.0
          %4464 = vadd.xlane.f32.xlu0 %v4463
          %v4465 = vpop.xlane.xlu0 %4464
          %v4466 = vsel %vm4450, %v4462, 0.0
          %4467 = vadd.xlane.f32.xlu0 %v4466
          %v4468 = vpop.xlane.xlu0 %4467
          %v4469 = vrcp.pop %v4465
          %v4470 = vrcp.pop %v4468
          %v4471 = vmul.f32 %v4460, %v4469
          %v4472 = vmul.f32 %v4462, %v4470
          %4473 = vst.msk [vmem:[#allocation2] sm:$0xff] %vm4450, %v4471
          %4474 = vst.msk [vmem:[#allocation2 + $0x8] sm:$0xff] %vm4450, %v4472
        $region78: #{alignment_layer.1} parent=69 // pred_fallthru
          _
        %v4475 = vld [vmem:[#allocation2] sm:$0xff]
        %v4476 = vld [vmem:[#allocation2 + $0x8] sm:$0xff]
        %v4477 = vpack.c.bf16 %v4476, %v4475
        %v4478 = vld [vmem:[%s353] sm:$0xff]
        %v4479 = vld [vmem:[%s353 + $0x8] sm:$0xff]
        %v4480 = vld [vmem:[%s353 + $0x10] sm:$0xff]
        %v4481 = vld [vmem:[%s353 + $0x18] sm:$0xff]
        %v4482 = vld [vmem:[%s353 + $0x20] sm:$0xff]
        %v4483 = vld [vmem:[%s353 + $0x28] sm:$0xff]
        %v4484 = vld [vmem:[%s353 + $0x30] sm:$0xff]
        %v4485 = vld [vmem:[%s353 + $0x38] sm:$0xff]
        %v4486 = vld [vmem:[%s353 + $0x40] sm:$0xff]
        %v4487 = vld [vmem:[%s353 + $0x48] sm:$0xff]
        %v4488 = vld [vmem:[%s353 + $0x50] sm:$0xf]
        %v4489 = vld [vmem:[%s353 + $0x54] sm:$0x11]
        %v4490 = vld [vmem:[%s353 + $0x5c] sm:$0x11]
        %v4491 = vld [vmem:[%s353 + $0x64] sm:$0x11]
        %v4492 = vld [vmem:[%s353 + $0x6c] sm:$0x11]
        %v4493 = vld [vmem:[%s353 + $0x74] sm:$0x11]
        %v4494 = vld [vmem:[%s353 + $0x7c] sm:$0x11]
        %v4495 = vld [vmem:[%s353 + $0x84] sm:$0x11]
        %v4496 = vld [vmem:[%s353 + $0x8c] sm:$0x11]
        %v4497 = vld [vmem:[%s353 + $0x94] sm:$0x11]
        %v4498 = vld [vmem:[%s353 + $0x9c] sm:$0x11]
        %v4499 = vld [vmem:[%s353 + $0xa4] sm:$0x1]
        %v4500 = vld [vmem:[%s402] sm:$0xff]
        %v4501 = vld [vmem:[%s402 + $0x8] sm:$0xff]
        %v4502 = vld [vmem:[%s402 + $0x10] sm:$0x1f]
        %v4506 = vperm.slane %v4500, 0
        %v4507 = vperm.slane %v4500, 1
        %v4508 = vperm.slane %v4500, 2
        %v4509 = vperm.slane %v4500, 3
        %v4510 = vperm.slane %v4500, 4
        %v4511 = vperm.slane %v4500, 5
        %v4512 = vperm.slane %v4500, 6
        %v4513 = vperm.slane %v4500, 7
        %v4514 = vperm.slane %v4501, 0
        %v4515 = vperm.slane %v4501, 1
        %v4516 = vperm.slane %v4501, 2
        %v4517 = vperm.slane %v4501, 3
        %v4518 = vperm.slane %v4501, 4
        %v4519 = vperm.slane %v4501, 5
        %v4520 = vperm.slane %v4501, 6
        %v4521 = vperm.slane %v4501, 7
        %v4522 = vperm.slane %v4502, 0
        %v4523 = vperm.slane %v4502, 1
        %v4524 = vperm.slane %v4502, 2
        %v4525 = vperm.slane %v4502, 3
        %v4526 = vperm.slane %v4502, 4
        %v4570 = vunpack.c.l.b16 %v4478
        %v4571 = vunpack.c.h.b16 %v4478
        %v4572 = vunpack.c.l.b16 %v4479
        %v4573 = vunpack.c.h.b16 %v4479
        %v4574 = vunpack.c.l.b16 %v4480
        %v4575 = vunpack.c.h.b16 %v4480
        %v4576 = vunpack.c.l.b16 %v4481
        %v4577 = vunpack.c.h.b16 %v4481
        %v4578 = vunpack.c.l.b16 %v4482
        %v4579 = vunpack.c.h.b16 %v4482
        %v4580 = vunpack.c.l.b16 %v4483
        %v4581 = vunpack.c.h.b16 %v4483
        %v4582 = vunpack.c.l.b16 %v4484
        %v4583 = vunpack.c.h.b16 %v4484
        %v4584 = vunpack.c.l.b16 %v4485
        %v4585 = vunpack.c.h.b16 %v4485
        %v4586 = vunpack.c.l.b16 %v4486
        %v4587 = vunpack.c.h.b16 %v4486
        %v4588 = vunpack.c.l.b16 %v4487
        %v4589 = vunpack.c.h.b16 %v4487
        %v4590 = vunpack.c.l.b16 %v4488
        %v4591 = vunpack.c.l.b16 %v4489
        %v4592 = vunpack.c.h.b16 %v4489
        %v4593 = vunpack.c.l.b16 %v4490
        %v4594 = vunpack.c.h.b16 %v4490
        %v4595 = vunpack.c.l.b16 %v4491
        %v4596 = vunpack.c.h.b16 %v4491
        %v4597 = vunpack.c.l.b16 %v4492
        %v4598 = vunpack.c.h.b16 %v4492
        %v4599 = vunpack.c.l.b16 %v4493
        %v4600 = vunpack.c.h.b16 %v4493
        %v4601 = vunpack.c.l.b16 %v4494
        %v4602 = vunpack.c.h.b16 %v4494
        %v4603 = vunpack.c.l.b16 %v4495
        %v4604 = vunpack.c.h.b16 %v4495
        %v4605 = vunpack.c.l.b16 %v4496
        %v4606 = vunpack.c.h.b16 %v4496
        %v4607 = vunpack.c.l.b16 %v4497
        %v4608 = vunpack.c.h.b16 %v4497
        %v4609 = vunpack.c.l.b16 %v4498
        %v4610 = vunpack.c.h.b16 %v4498
        %v4611 = vunpack.c.l.b16 %v4499
        %v4612 = vpack.c.b16 %v4591, %v4570
        %v4613 = vpack.c.b16 %v4592, %v4571
        %v4614 = vpack.c.b16 %v4593, %v4572
        %v4615 = vpack.c.b16 %v4594, %v4573
        %v4616 = vpack.c.b16 %v4595, %v4574
        %v4617 = vpack.c.b16 %v4596, %v4575
        %v4618 = vpack.c.b16 %v4597, %v4576
        %v4619 = vpack.c.b16 %v4598, %v4577
        %v4620 = vpack.c.b16 %v4599, %v4578
        %v4621 = vpack.c.b16 %v4600, %v4579
        %v4622 = vpack.c.b16 %v4601, %v4580
        %v4623 = vpack.c.b16 %v4602, %v4581
        %v4624 = vpack.c.b16 %v4603, %v4582
        %v4625 = vpack.c.b16 %v4604, %v4583
        %v4626 = vpack.c.b16 %v4605, %v4584
        %v4627 = vpack.c.b16 %v4606, %v4585
        %v4628 = vpack.c.b16 %v4607, %v4586
        %v4629 = vpack.c.b16 %v4608, %v4587
        %v4630 = vpack.c.b16 %v4609, %v4588
        %v4631 = vpack.c.b16 %v4610, %v4589
        %v4632 = vpack.c.b16 %v4611, %v4590
        %vm4633 = vcmask 80896
        %v4635 = vsel %vm4633, %v4477, 0
        %vm4637 = vcmask 1044480
        %v4639 = vsel %vm4637, %v4612, 0
        %v4642 = vsel %vm4637, %v4613, 0
        %v4645 = vsel %vm4637, %v4614, 0
        %v4648 = vsel %vm4637, %v4615, 0
        %v4651 = vsel %vm4637, %v4616, 0
        %v4654 = vsel %vm4637, %v4617, 0
        %v4657 = vsel %vm4637, %v4618, 0
        %v4660 = vsel %vm4637, %v4619, 0
        %v4663 = vsel %vm4637, %v4620, 0
        %v4666 = vsel %vm4637, %v4621, 0
        %v4669 = vsel %vm4637, %v4622, 0
        %v4672 = vsel %vm4637, %v4623, 0
        %v4675 = vsel %vm4637, %v4624, 0
        %v4678 = vsel %vm4637, %v4625, 0
        %v4681 = vsel %vm4637, %v4626, 0
        %v4684 = vsel %vm4637, %v4627, 0
        %v4687 = vsel %vm4637, %v4628, 0
        %v4690 = vsel %vm4637, %v4629, 0
        %v4693 = vsel %vm4637, %v4630, 0
        %v4696 = vsel %vm4637, %v4631, 0
        %v4699 = vsel %vm4637, %v4632, 0
        %4701 = vmatpush.bf16.msra.mxu0 0
        %4702 = vmatpush.bf16.msra.mxu0 0
        %4703 = vmatpush.bf16.msra.mxu0 0
        %4704 = vmatpush.bf16.msra.mxu0 0
        %4705 = vmatpush.bf16.msra.mxu0 0
        %4706 = vmatpush.bf16.msra.mxu0 0
        %4707 = vmatpush.bf16.msra.mxu0 0
        %4708 = vmatpush.bf16.msra.mxu0 %v4639
        %4709 = vmatmul.bf16.gmra.mxu0 %v4635
        %v4710 = vpop.f32.mrf.mxu0
        %v4711 = vadd.f32 %v4506, %v4710
        %v4712 = vpop.f32.mrf.mxu0
        %v4713 = vadd.f32 %v4506, %v4712
        %4714 = vdwg.mxu0
        %4715 = vmatpush.bf16.msra.mxu0 0
        %4716 = vmatpush.bf16.msra.mxu0 0
        %4717 = vmatpush.bf16.msra.mxu0 0
        %4718 = vmatpush.bf16.msra.mxu0 0
        %4719 = vmatpush.bf16.msra.mxu0 0
        %4720 = vmatpush.bf16.msra.mxu0 0
        %4721 = vmatpush.bf16.msra.mxu0 0
        %4722 = vmatpush.bf16.msra.mxu0 %v4642
        %4723 = vmatmul.bf16.gmra.mxu0 %v4635
        %v4724 = vpop.f32.mrf.mxu0
        %v4725 = vadd.f32 %v4507, %v4724
        %v4726 = vpop.f32.mrf.mxu0
        %v4727 = vadd.f32 %v4507, %v4726
        %4728 = vdwg.mxu0
        %4729 = vmatpush.bf16.msra.mxu0 0
        %4730 = vmatpush.bf16.msra.mxu0 0
        %4731 = vmatpush.bf16.msra.mxu0 0
        %4732 = vmatpush.bf16.msra.mxu0 0
        %4733 = vmatpush.bf16.msra.mxu0 0
        %4734 = vmatpush.bf16.msra.mxu0 0
        %4735 = vmatpush.bf16.msra.mxu0 0
        %4736 = vmatpush.bf16.msra.mxu0 %v4645
        %4737 = vmatmul.bf16.gmra.mxu0 %v4635
        %v4738 = vpop.f32.mrf.mxu0
        %v4739 = vadd.f32 %v4508, %v4738
        %v4740 = vpop.f32.mrf.mxu0
        %v4741 = vadd.f32 %v4508, %v4740
        %4742 = vdwg.mxu0
        %4743 = vmatpush.bf16.msra.mxu0 0
        %4744 = vmatpush.bf16.msra.mxu0 0
        %4745 = vmatpush.bf16.msra.mxu0 0
        %4746 = vmatpush.bf16.msra.mxu0 0
        %4747 = vmatpush.bf16.msra.mxu0 0
        %4748 = vmatpush.bf16.msra.mxu0 0
        %4749 = vmatpush.bf16.msra.mxu0 0
        %4750 = vmatpush.bf16.msra.mxu0 %v4648
        %4751 = vmatmul.bf16.gmra.mxu0 %v4635
        %v4752 = vpop.f32.mrf.mxu0
        %v4753 = vadd.f32 %v4509, %v4752
        %v4754 = vpop.f32.mrf.mxu0
        %v4755 = vadd.f32 %v4509, %v4754
        %4756 = vdwg.mxu0
        %4757 = vmatpush.bf16.msra.mxu0 0
        %4758 = vmatpush.bf16.msra.mxu0 0
        %4759 = vmatpush.bf16.msra.mxu0 0
        %4760 = vmatpush.bf16.msra.mxu0 0
        %4761 = vmatpush.bf16.msra.mxu0 0
        %4762 = vmatpush.bf16.msra.mxu0 0
        %4763 = vmatpush.bf16.msra.mxu0 0
        %4764 = vmatpush.bf16.msra.mxu0 %v4651
        %4765 = vmatmul.bf16.gmra.mxu0 %v4635
        %v4766 = vpop.f32.mrf.mxu0
        %v4767 = vadd.f32 %v4510, %v4766
        %v4768 = vpop.f32.mrf.mxu0
        %v4769 = vadd.f32 %v4510, %v4768
        %4770 = vdwg.mxu0
        %4771 = vmatpush.bf16.msra.mxu0 0
        %4772 = vmatpush.bf16.msra.mxu0 0
        %4773 = vmatpush.bf16.msra.mxu0 0
        %4774 = vmatpush.bf16.msra.mxu0 0
        %4775 = vmatpush.bf16.msra.mxu0 0
        %4776 = vmatpush.bf16.msra.mxu0 0
        %4777 = vmatpush.bf16.msra.mxu0 0
        %4778 = vmatpush.bf16.msra.mxu0 %v4654
        %4779 = vmatmul.bf16.gmra.mxu0 %v4635
        %v4780 = vpop.f32.mrf.mxu0
        %v4781 = vadd.f32 %v4511, %v4780
        %v4782 = vpop.f32.mrf.mxu0
        %v4783 = vadd.f32 %v4511, %v4782
        %4784 = vdwg.mxu0
        %4785 = vmatpush.bf16.msra.mxu0 0
        %4786 = vmatpush.bf16.msra.mxu0 0
        %4787 = vmatpush.bf16.msra.mxu0 0
        %4788 = vmatpush.bf16.msra.mxu0 0
        %4789 = vmatpush.bf16.msra.mxu0 0
        %4790 = vmatpush.bf16.msra.mxu0 0
        %4791 = vmatpush.bf16.msra.mxu0 0
        %4792 = vmatpush.bf16.msra.mxu0 %v4657
        %4793 = vmatmul.bf16.gmra.mxu0 %v4635
        %v4794 = vpop.f32.mrf.mxu0
        %v4795 = vadd.f32 %v4512, %v4794
        %v4796 = vpop.f32.mrf.mxu0
        %v4797 = vadd.f32 %v4512, %v4796
        %4798 = vdwg.mxu0
        %4799 = vmatpush.bf16.msra.mxu0 0
        %4800 = vmatpush.bf16.msra.mxu0 0
        %4801 = vmatpush.bf16.msra.mxu0 0
        %4802 = vmatpush.bf16.msra.mxu0 0
        %4803 = vmatpush.bf16.msra.mxu0 0
        %4804 = vmatpush.bf16.msra.mxu0 0
        %4805 = vmatpush.bf16.msra.mxu0 0
        %4806 = vmatpush.bf16.msra.mxu0 %v4660
        %4807 = vmatmul.bf16.gmra.mxu0 %v4635
        %v4808 = vpop.f32.mrf.mxu0
        %v4809 = vadd.f32 %v4513, %v4808
        %v4810 = vpop.f32.mrf.mxu0
        %v4811 = vadd.f32 %v4513, %v4810
        %4812 = vdwg.mxu0
        %4813 = vmatpush.bf16.msra.mxu0 0
        %4814 = vmatpush.bf16.msra.mxu0 0
        %4815 = vmatpush.bf16.msra.mxu0 0
        %4816 = vmatpush.bf16.msra.mxu0 0
        %4817 = vmatpush.bf16.msra.mxu0 0
        %4818 = vmatpush.bf16.msra.mxu0 0
        %4819 = vmatpush.bf16.msra.mxu0 0
        %4820 = vmatpush.bf16.msra.mxu0 %v4663
        %4821 = vmatmul.bf16.gmra.mxu0 %v4635
        %v4822 = vpop.f32.mrf.mxu0
        %v4823 = vadd.f32 %v4514, %v4822
        %v4824 = vpop.f32.mrf.mxu0
        %v4825 = vadd.f32 %v4514, %v4824
        %4826 = vdwg.mxu0
        %4827 = vmatpush.bf16.msra.mxu0 0
        %4828 = vmatpush.bf16.msra.mxu0 0
        %4829 = vmatpush.bf16.msra.mxu0 0
        %4830 = vmatpush.bf16.msra.mxu0 0
        %4831 = vmatpush.bf16.msra.mxu0 0
        %4832 = vmatpush.bf16.msra.mxu0 0
        %4833 = vmatpush.bf16.msra.mxu0 0
        %4834 = vmatpush.bf16.msra.mxu0 %v4666
        %4835 = vmatmul.bf16.gmra.mxu0 %v4635
        %v4836 = vpop.f32.mrf.mxu0
        %v4837 = vadd.f32 %v4515, %v4836
        %v4838 = vpop.f32.mrf.mxu0
        %v4839 = vadd.f32 %v4515, %v4838
        %4840 = vdwg.mxu0
        %4841 = vmatpush.bf16.msra.mxu0 0
        %4842 = vmatpush.bf16.msra.mxu0 0
        %4843 = vmatpush.bf16.msra.mxu0 0
        %4844 = vmatpush.bf16.msra.mxu0 0
        %4845 = vmatpush.bf16.msra.mxu0 0
        %4846 = vmatpush.bf16.msra.mxu0 0
        %4847 = vmatpush.bf16.msra.mxu0 0
        %4848 = vmatpush.bf16.msra.mxu0 %v4669
        %4849 = vmatmul.bf16.gmra.mxu0 %v4635
        %v4850 = vpop.f32.mrf.mxu0
        %v4851 = vadd.f32 %v4516, %v4850
        %v4852 = vpop.f32.mrf.mxu0
        %v4853 = vadd.f32 %v4516, %v4852
        %4854 = vdwg.mxu0
        %4855 = vmatpush.bf16.msra.mxu0 0
        %4856 = vmatpush.bf16.msra.mxu0 0
        %4857 = vmatpush.bf16.msra.mxu0 0
        %4858 = vmatpush.bf16.msra.mxu0 0
        %4859 = vmatpush.bf16.msra.mxu0 0
        %4860 = vmatpush.bf16.msra.mxu0 0
        %4861 = vmatpush.bf16.msra.mxu0 0
        %4862 = vmatpush.bf16.msra.mxu0 %v4672
        %4863 = vmatmul.bf16.gmra.mxu0 %v4635
        %v4864 = vpop.f32.mrf.mxu0
        %v4865 = vadd.f32 %v4517, %v4864
        %v4866 = vpop.f32.mrf.mxu0
        %v4867 = vadd.f32 %v4517, %v4866
        %4868 = vdwg.mxu0
        %4869 = vmatpush.bf16.msra.mxu0 0
        %4870 = vmatpush.bf16.msra.mxu0 0
        %4871 = vmatpush.bf16.msra.mxu0 0
        %4872 = vmatpush.bf16.msra.mxu0 0
        %4873 = vmatpush.bf16.msra.mxu0 0
        %4874 = vmatpush.bf16.msra.mxu0 0
        %4875 = vmatpush.bf16.msra.mxu0 0
        %4876 = vmatpush.bf16.msra.mxu0 %v4675
        %4877 = vmatmul.bf16.gmra.mxu0 %v4635
        %v4878 = vpop.f32.mrf.mxu0
        %v4879 = vadd.f32 %v4518, %v4878
        %v4880 = vpop.f32.mrf.mxu0
        %v4881 = vadd.f32 %v4518, %v4880
        %4882 = vdwg.mxu0
        %4883 = vmatpush.bf16.msra.mxu0 0
        %4884 = vmatpush.bf16.msra.mxu0 0
        %4885 = vmatpush.bf16.msra.mxu0 0
        %4886 = vmatpush.bf16.msra.mxu0 0
        %4887 = vmatpush.bf16.msra.mxu0 0
        %4888 = vmatpush.bf16.msra.mxu0 0
        %4889 = vmatpush.bf16.msra.mxu0 0
        %4890 = vmatpush.bf16.msra.mxu0 %v4678
        %4891 = vmatmul.bf16.gmra.mxu0 %v4635
        %v4892 = vpop.f32.mrf.mxu0
        %v4893 = vadd.f32 %v4519, %v4892
        %v4894 = vpop.f32.mrf.mxu0
        %v4895 = vadd.f32 %v4519, %v4894
        %4896 = vdwg.mxu0
        %4897 = vmatpush.bf16.msra.mxu0 0
        %4898 = vmatpush.bf16.msra.mxu0 0
        %4899 = vmatpush.bf16.msra.mxu0 0
        %4900 = vmatpush.bf16.msra.mxu0 0
        %4901 = vmatpush.bf16.msra.mxu0 0
        %4902 = vmatpush.bf16.msra.mxu0 0
        %4903 = vmatpush.bf16.msra.mxu0 0
        %4904 = vmatpush.bf16.msra.mxu0 %v4681
        %4905 = vmatmul.bf16.gmra.mxu0 %v4635
        %v4906 = vpop.f32.mrf.mxu0
        %v4907 = vadd.f32 %v4520, %v4906
        %v4908 = vpop.f32.mrf.mxu0
        %v4909 = vadd.f32 %v4520, %v4908
        %4910 = vdwg.mxu0
        %4911 = vmatpush.bf16.msra.mxu0 0
        %4912 = vmatpush.bf16.msra.mxu0 0
        %4913 = vmatpush.bf16.msra.mxu0 0
        %4914 = vmatpush.bf16.msra.mxu0 0
        %4915 = vmatpush.bf16.msra.mxu0 0
        %4916 = vmatpush.bf16.msra.mxu0 0
        %4917 = vmatpush.bf16.msra.mxu0 0
        %4918 = vmatpush.bf16.msra.mxu0 %v4684
        %4919 = vmatmul.bf16.gmra.mxu0 %v4635
        %v4920 = vpop.f32.mrf.mxu0
        %v4921 = vadd.f32 %v4521, %v4920
        %v4922 = vpop.f32.mrf.mxu0
        %v4923 = vadd.f32 %v4521, %v4922
        %4924 = vdwg.mxu0
        %4925 = vmatpush.bf16.msra.mxu0 0
        %4926 = vmatpush.bf16.msra.mxu0 0
        %4927 = vmatpush.bf16.msra.mxu0 0
        %4928 = vmatpush.bf16.msra.mxu0 0
        %4929 = vmatpush.bf16.msra.mxu0 0
        %4930 = vmatpush.bf16.msra.mxu0 0
        %4931 = vmatpush.bf16.msra.mxu0 0
        %4932 = vmatpush.bf16.msra.mxu0 %v4687
        %4933 = vmatmul.bf16.gmra.mxu0 %v4635
        %v4934 = vpop.f32.mrf.mxu0
        %v4935 = vadd.f32 %v4522, %v4934
        %v4936 = vpop.f32.mrf.mxu0
        %v4937 = vadd.f32 %v4522, %v4936
        %4938 = vdwg.mxu0
        %4939 = vmatpush.bf16.msra.mxu0 0
        %4940 = vmatpush.bf16.msra.mxu0 0
        %4941 = vmatpush.bf16.msra.mxu0 0
        %4942 = vmatpush.bf16.msra.mxu0 0
        %4943 = vmatpush.bf16.msra.mxu0 0
        %4944 = vmatpush.bf16.msra.mxu0 0
        %4945 = vmatpush.bf16.msra.mxu0 0
        %4946 = vmatpush.bf16.msra.mxu0 %v4690
        %4947 = vmatmul.bf16.gmra.mxu0 %v4635
        %v4948 = vpop.f32.mrf.mxu0
        %v4949 = vadd.f32 %v4523, %v4948
        %v4950 = vpop.f32.mrf.mxu0
        %v4951 = vadd.f32 %v4523, %v4950
        %4952 = vdwg.mxu0
        %4953 = vmatpush.bf16.msra.mxu0 0
        %4954 = vmatpush.bf16.msra.mxu0 0
        %4955 = vmatpush.bf16.msra.mxu0 0
        %4956 = vmatpush.bf16.msra.mxu0 0
        %4957 = vmatpush.bf16.msra.mxu0 0
        %4958 = vmatpush.bf16.msra.mxu0 0
        %4959 = vmatpush.bf16.msra.mxu0 0
        %4960 = vmatpush.bf16.msra.mxu0 %v4693
        %4961 = vmatmul.bf16.gmra.mxu0 %v4635
        %v4962 = vpop.f32.mrf.mxu0
        %v4963 = vadd.f32 %v4524, %v4962
        %v4964 = vpop.f32.mrf.mxu0
        %v4965 = vadd.f32 %v4524, %v4964
        %4966 = vdwg.mxu0
        %4967 = vmatpush.bf16.msra.mxu0 0
        %4968 = vmatpush.bf16.msra.mxu0 0
        %4969 = vmatpush.bf16.msra.mxu0 0
        %4970 = vmatpush.bf16.msra.mxu0 0
        %4971 = vmatpush.bf16.msra.mxu0 0
        %4972 = vmatpush.bf16.msra.mxu0 0
        %4973 = vmatpush.bf16.msra.mxu0 0
        %4974 = vmatpush.bf16.msra.mxu0 %v4696
        %4975 = vmatmul.bf16.gmra.mxu0 %v4635
        %v4976 = vpop.f32.mrf.mxu0
        %v4977 = vadd.f32 %v4525, %v4976
        %v4978 = vpop.f32.mrf.mxu0
        %v4979 = vadd.f32 %v4525, %v4978
        %4980 = vdwg.mxu0
        %4981 = vmatpush.bf16.msra.mxu0 0
        %4982 = vmatpush.bf16.msra.mxu0 0
        %4983 = vmatpush.bf16.msra.mxu0 0
        %4984 = vmatpush.bf16.msra.mxu0 0
        %4985 = vmatpush.bf16.msra.mxu0 0
        %4986 = vmatpush.bf16.msra.mxu0 0
        %4987 = vmatpush.bf16.msra.mxu0 0
        %4988 = vmatpush.bf16.msra.mxu0 %v4699
        %4989 = vmatmul.bf16.gmra.mxu0 %v4635
        %v4990 = vpop.f32.mrf.mxu0
        %v4991 = vadd.f32 %v4526, %v4990
        %v4992 = vpop.f32.mrf.mxu0
        %v4993 = vadd.f32 %v4526, %v4992
        %4994 = vdwg.mxu0
        %v4995 = vpack.c.bf16 %v4725, %v4711
        %v4996 = vpack.c.bf16 %v4753, %v4739
        %v4997 = vpack.c.bf16 %v4781, %v4767
        %v4998 = vpack.c.bf16 %v4809, %v4795
        %v4999 = vpack.c.bf16 %v4837, %v4823
        %v5000 = vpack.c.bf16 %v4865, %v4851
        %v5001 = vpack.c.bf16 %v4893, %v4879
        %v5002 = vpack.c.bf16 %v4921, %v4907
        %v5003 = vpack.c.bf16 %v4949, %v4935
        %v5004 = vpack.c.bf16 %v4977, %v4963
        %v5005 = vpack.c.bf16 %v4991, %v4991
        %v5006 = vpack.c.bf16 %v4727, %v4713
        %v5007 = vpack.c.bf16 %v4755, %v4741
        %v5008 = vpack.c.bf16 %v4783, %v4769
        %v5009 = vpack.c.bf16 %v4811, %v4797
        %v5010 = vpack.c.bf16 %v4839, %v4825
        %v5011 = vpack.c.bf16 %v4867, %v4853
        %v5012 = vpack.c.bf16 %v4895, %v4881
        %v5013 = vpack.c.bf16 %v4923, %v4909
        %v5014 = vpack.c.bf16 %v4951, %v4937
        %v5015 = vpack.c.bf16 %v4979, %v4965
        %v5016 = vpack.c.bf16 %v4993, %v4993
        %5017 = vst [vmem:[%s390] sm:$0xff] %v4995
        %5018 = vst [vmem:[%s390 + $0x8] sm:$0xff] %v4996
        %5019 = vst [vmem:[%s390 + $0x10] sm:$0xff] %v4997
        %5020 = vst [vmem:[%s390 + $0x18] sm:$0xff] %v4998
        %5021 = vst [vmem:[%s390 + $0x20] sm:$0xff] %v4999
        %5022 = vst [vmem:[%s390 + $0x28] sm:$0xff] %v5000
        %5023 = vst [vmem:[%s390 + $0x30] sm:$0xff] %v5001
        %5024 = vst [vmem:[%s390 + $0x38] sm:$0xff] %v5002
        %5025 = vst [vmem:[%s390 + $0x40] sm:$0xff] %v5003
        %5026 = vst [vmem:[%s390 + $0x48] sm:$0xff] %v5004
        %5027 = vst [vmem:[%s390 + $0x50] sm:$0xf] %v5005
        %5028 = vst [vmem:[%s390 + $0x54] sm:$0xff] %v5006
        %5029 = vst [vmem:[%s390 + $0x5c] sm:$0xff] %v5007
        %5030 = vst [vmem:[%s390 + $0x64] sm:$0xff] %v5008
        %5031 = vst [vmem:[%s390 + $0x6c] sm:$0xff] %v5009
        %5032 = vst [vmem:[%s390 + $0x74] sm:$0xff] %v5010
        %5033 = vst [vmem:[%s390 + $0x7c] sm:$0xff] %v5011
        %5034 = vst [vmem:[%s390 + $0x84] sm:$0xff] %v5012
        %5035 = vst [vmem:[%s390 + $0x8c] sm:$0xff] %v5013
        %5036 = vst [vmem:[%s390 + $0x94] sm:$0xff] %v5014
        %5037 = vst [vmem:[%s390 + $0x9c] sm:$0xff] %v5015
        %5038 = vst [vmem:[%s390 + $0xa4] sm:$0xf] %v5016
        %s5039 = sand.u32 %s202, 1
        %s5040 = sand.u32 %s202, 1
        %s5041 = smul.addr %s5040, 168
        %s5042 = scalar_lea.vmem [#allocation4], %s5041
        // Predicated region
        $region79: #{alignment_layer.1} parent=69 // pred_check
          %p5043 = pneg %p212
        $region80: #{alignment_layer.1} parent=69 // pred_check_branch
          %5045 = sbr.rel (%p5043) target = $region82
        $region81: #{alignment_layer.1} parent=69 // pred_region
          %s5046 = smul.u32 2, %s22
          %s5047 = smul.u32 21, %s23
          %s5048 = smul.addr %s5046, 84
          %s5049 = sadd.s32 %s5047, %s5048
          %s5050 = smul.addr %s5049, 4
          %s5051 = scalar_lea.vmem %s7, %s5050
          // Predicated region
          $region83: #{alignment_layer.1} parent=81 // pred_check
            _
          $region84: #{alignment_layer.1} parent=81 // pred_check_branch
            %5053 = sbr.rel (0) target = $region86
          $region85: #{alignment_layer.1} parent=81 // pred_region
            // Predicated region
            $region87: #{alignment_layer.1} parent=85 // pred_check
              _
            $region88: #{alignment_layer.1} parent=85 // pred_check_branch
              %5055 = sbr.rel (0) target = $region90
            $region89: #{alignment_layer.1} parent=85 // pred_region
              %s5056 = scalar_lea.vmem %s5042, 80 [#allocation4]
              %s5057 = scalar_lea.vmem %s5051, 80
              loop: start=0, step=1, limit=1
              $region91: #{alignment_layer.1} parent=89 // loop_pre_header
                _
              $region92: #{alignment_layer.1} parent=89 // loop_header
                %s5059 = sphi 0, %s5063
                %p5060 = scmp.ge.s32.totalorder %s5059, 1
                %s5064 = sphi %s5042, %s5042
                %s5065 = sphi %s5051, %s5051
              $region93: #{alignment_layer.1} parent=89 // loop_header_branch
                %5062 = sbr.rel (%p5060) target = $region97
              $region94: #{alignment_layer.1} parent=89 // loop_body
                %v5066 = vld [vmem:[%s5064] sm:$0xff]
                %5067 = vst [vmem:[%s5065] sm:$0xff] %v5066
                %v5068 = vld [vmem:[%s5064 + $0x8] sm:$0xff]
                %5069 = vst [vmem:[%s5065 + $0x8] sm:$0xff] %v5068
                %v5070 = vld [vmem:[%s5064 + $0x10] sm:$0xff]
                %5071 = vst [vmem:[%s5065 + $0x10] sm:$0xff] %v5070
                %v5072 = vld [vmem:[%s5064 + $0x18] sm:$0xff]
                %5073 = vst [vmem:[%s5065 + $0x18] sm:$0xff] %v5072
                %v5074 = vld [vmem:[%s5064 + $0x20] sm:$0xff]
                %5075 = vst [vmem:[%s5065 + $0x20] sm:$0xff] %v5074
                %v5076 = vld [vmem:[%s5064 + $0x28] sm:$0xff]
                %5077 = vst [vmem:[%s5065 + $0x28] sm:$0xff] %v5076
                %v5078 = vld [vmem:[%s5064 + $0x30] sm:$0xff]
                %5079 = vst [vmem:[%s5065 + $0x30] sm:$0xff] %v5078
                %v5080 = vld [vmem:[%s5064 + $0x38] sm:$0xff]
                %5081 = vst [vmem:[%s5065 + $0x38] sm:$0xff] %v5080
                %v5082 = vld [vmem:[%s5064 + $0x40] sm:$0xff]
                %5083 = vst [vmem:[%s5065 + $0x40] sm:$0xff] %v5082
                %v5084 = vld [vmem:[%s5064 + $0x48] sm:$0xff]
                %5085 = vst [vmem:[%s5065 + $0x48] sm:$0xff] %v5084
                %v5086 = vld [vmem:[%s5064 + $0x54] sm:$0xff]
                %5087 = vst [vmem:[%s5065 + $0x150] sm:$0xff] %v5086
                %v5088 = vld [vmem:[%s5064 + $0x5c] sm:$0xff]
                %5089 = vst [vmem:[%s5065 + $0x158] sm:$0xff] %v5088
                %v5090 = vld [vmem:[%s5064 + $0x64] sm:$0xff]
                %5091 = vst [vmem:[%s5065 + $0x160] sm:$0xff] %v5090
                %v5092 = vld [vmem:[%s5064 + $0x6c] sm:$0xff]
                %5093 = vst [vmem:[%s5065 + $0x168] sm:$0xff] %v5092
                %v5094 = vld [vmem:[%s5064 + $0x74] sm:$0xff]
                %5095 = vst [vmem:[%s5065 + $0x170] sm:$0xff] %v5094
                %v5096 = vld [vmem:[%s5064 + $0x7c] sm:$0xff]
                %5097 = vst [vmem:[%s5065 + $0x178] sm:$0xff] %v5096
                %v5098 = vld [vmem:[%s5064 + $0x84] sm:$0xff]
                %5099 = vst [vmem:[%s5065 + $0x180] sm:$0xff] %v5098
                %v5100 = vld [vmem:[%s5064 + $0x8c] sm:$0xff]
                %5101 = vst [vmem:[%s5065 + $0x188] sm:$0xff] %v5100
                %v5102 = vld [vmem:[%s5064 + $0x94] sm:$0xff]
                %5103 = vst [vmem:[%s5065 + $0x190] sm:$0xff] %v5102
                %v5104 = vld [vmem:[%s5064 + $0x9c] sm:$0xff]
                %5105 = vst [vmem:[%s5065 + $0x198] sm:$0xff] %v5104
              $region95: #{alignment_layer.1} parent=89 // loop_footer
                %s5063 = sadd.s32 1, %s5059
              $region96: #{alignment_layer.1} parent=89 // loop_footer_branch
                %5058 = sbr.rel target = $region92
              $region97: #{alignment_layer.1} parent=89 // loop_exit
                _
              %s5107 = ssub.s32 16, 1
              loop: start=0, step=1, limit=1
              $region98: #{alignment_layer.1} parent=89 // loop_pre_header
                _
              $region99: #{alignment_layer.1} parent=89 // loop_header
                %s5109 = sphi 0, %s5113
                %p5110 = scmp.ge.s32.totalorder %s5109, 1
                %s5114 = sphi %s5056, %s5056
                %s5115 = sphi %s5057, %s5057
              $region100: #{alignment_layer.1} parent=89 // loop_header_branch
                %5112 = sbr.rel (%p5110) target = $region104
              $region101: #{alignment_layer.1} parent=89 // loop_body
                %v5116 = vld [vmem:[%s5114] sm:%s5107]
                %5117 = vst [vmem:[%s5115] sm:%s5107] %v5116
                %v5118 = vld [vmem:[%s5114 + $0x54] sm:%s5107]
                %5119 = vst [vmem:[%s5115 + $0x150] sm:%s5107] %v5118
              $region102: #{alignment_layer.1} parent=89 // loop_footer
                %s5113 = sadd.s32 1, %s5109
              $region103: #{alignment_layer.1} parent=89 // loop_footer_branch
                %5108 = sbr.rel target = $region99
              $region104: #{alignment_layer.1} parent=89 // loop_exit
                _
            $region90: #{alignment_layer.1} parent=85 // pred_fallthru
              _
          $region86: #{alignment_layer.1} parent=81 // pred_fallthru
            _
          %5120 = vnop
        $region82: #{alignment_layer.1} parent=69 // pred_fallthru
          _
      $region70: #{alignment_layer.1} parent=5 // pred_fallthru
        _
      %p5121 = scmp.le.s32.totalorder 2, %s13
      // Predicated region
      $region105: #{alignment_layer.1} parent=5 // pred_check
        %p5122 = pneg %p5121
      $region106: #{alignment_layer.1} parent=5 // pred_check_branch
        %5124 = sbr.rel (%p5122) target = $region108
      $region107: #{alignment_layer.1} parent=5 // pred_region
        %s5125 = ssub.s32 %s13, 2
        // Predicated region
        $region109: #{alignment_layer.1} parent=107 // pred_check
          %p5126 = pneg %p218
        $region110: #{alignment_layer.1} parent=107 // pred_check_branch
          %5128 = sbr.rel (%p5126) target = $region112
        $region111: #{alignment_layer.1} parent=107 // pred_region
          %s5129 = sand.u32 %s203, 1
          %s5130 = sand.u32 %s203, 1
          %s5131 = smul.addr %s5130, 168
          %s5132 = scalar_lea.vmem [#allocation4], %s5131
        $region112: #{alignment_layer.1} parent=107 // pred_fallthru
          _
      $region108: #{alignment_layer.1} parent=5 // pred_fallthru
        _
    $region6: #{alignment_layer.1} parent=1 // loop_footer
      %s17 = sadd.s32 1, %s13
    $region7: #{alignment_layer.1} parent=1 // loop_footer_branch
      %12 = sbr.rel target = $region3
    $region8: #{alignment_layer.1} parent=1 // loop_exit
      _

</llo_original>
